<compile_context>
chip_gen: v7x
topology: tpu7x:2x2x1
jax: 0.10.0
libtpu: 0.0.40
codegen_flags: <defaults>
</compile_context>

<pallas_src>
import functools

import jax
import jax.numpy as jnp
from jax.experimental import pallas as pl
from jax.experimental.pallas import tpu as pltpu


def tnet_kernel(x_ref,                    # (tb, tn, k) f32 tile of points
                w1_ref, b1_ref,           # conv1 (k -> 64),   BN folded, f32
                w2_ref, b2_ref,           # conv2 (64 -> 128), BN folded, bf16 / f32
                w3_ref, b3_ref,           # conv3 (128->1024), BN folded, bf16 / f32
                fw1_ref, fb1_ref,         # fc1 (1024 -> 512), BN folded
                fw2_ref, fb2_ref,         # fc2 (512 -> 256),  BN folded
                fw3_ref, fb3i_ref,        # fc3 (256 -> 128-padded), bias+identity folded
                out_ref,                  # (1, tb, 128) f32 lane-dense output block
                gmax_ref,                 # VMEM scratch (tb, 1024) f32: running max of
                                          # conv3 PRE-activation (bias/ReLU hoisted)
                *, c3_chunk):
    tb, tn, k = x_ref.shape
    n_idx = pl.program_id(1)

    # --- init the running-max accumulator on the first point tile. ---
    @pl.when(n_idx == 0)
    def _():
        gmax_ref[...] = jnp.full(gmax_ref.shape, -jnp.inf, jnp.float32)

    x = x_ref[...]                                               # (tb, tn, k) f32

    # --- conv1: K=3 contraction as broadcast FMAs on the VPU (MXU-free). ---
    w1 = w1_ref[...]                                             # (k, 64) f32
    h1 = x[:, :, 0:1] * w1[0:1]                                  # (tb, tn, 64)
    for j in range(1, k):
        h1 = h1 + x[:, :, j:j + 1] * w1[j:j + 1]
    h1 = jnp.maximum(h1 + b1_ref[...], 0.0)                      # (tb, tn, 64) f32

    # --- conv2: flattened big-M MXU matmul, bf16 in / f32 acc. ---
    h1_2d = h1.reshape(tb * tn, 64).astype(jnp.bfloat16)
    h2 = jnp.dot(h1_2d, w2_ref[...], preferred_element_type=jnp.float32)
    h2 = jnp.maximum(h2 + b2_ref[...], 0.0).astype(jnp.bfloat16)  # (tb*tn, 128)

    # --- conv3: chunked over output channels; NO bias/ReLU here (hoisted past the
    #     max-pool).  Padded point rows are edge-replicated real points, so no
    #     masking is needed before the max. ---
    n3 = w3_ref.shape[1]                                         # 1024
    for c0 in range(0, n3, c3_chunk):
        h3c = jnp.dot(h2, w3_ref[:, c0:c0 + c3_chunk],
                      preferred_element_type=jnp.float32)        # (tb*tn, c3_chunk)
        h3c = h3c.reshape(tb, tn, c3_chunk)
        tile_max = jnp.max(h3c, axis=1)                          # (tb, c3_chunk)
        gmax_ref[:, c0:c0 + c3_chunk] = jnp.maximum(
            gmax_ref[:, c0:c0 + c3_chunk], tile_max)

    # --- epilogue, once per batch tile: hoisted conv3 bias+ReLU, then FC tail. ---
    @pl.when(n_idx == pl.num_programs(1) - 1)
    def _():
        g = jnp.maximum(gmax_ref[...] + b3_ref[...], 0.0)        # relu(max + b3) == max(relu(.+b3))
        g = jnp.dot(g.astype(jnp.bfloat16), fw1_ref[...],
                    preferred_element_type=jnp.float32)
        g = jnp.maximum(g + fb1_ref[...], 0.0)                   # (tb, 512)
        g = jnp.dot(g.astype(jnp.bfloat16), fw2_ref[...],
                    preferred_element_type=jnp.float32)
        g = jnp.maximum(g + fb2_ref[...], 0.0)                   # (tb, 256)
        g = jnp.dot(g.astype(jnp.bfloat16), fw3_ref[...],
                    preferred_element_type=jnp.float32)
        out_ref[...] = (g + fb3i_ref[...])[None]                 # (1, tb, 128)


def _fold_bn(w, b, gamma, beta, mean, var, eps=1e-5):
    """Fold eval-mode BatchNorm1d into the preceding (in,out) weight + bias."""
    s = gamma / jnp.sqrt(var + eps)
    w_f = w * s[None, :]
    b_f = b * s + (beta - mean * s)
    return w_f.astype(jnp.float32), b_f[None, :].astype(jnp.float32)


def make_tnet_params(key, k=3):
    """Deterministic synthetic parameters for TNet(k), BN-folded, MXU weights in bf16."""
    def dense(key, fan_in, fan_out):
        kw, kb = jax.random.split(key)
        w = jax.random.normal(kw, (fan_in, fan_out), jnp.float32) / jnp.sqrt(fan_in)
        b = 0.1 * jax.random.normal(kb, (fan_out,), jnp.float32)
        return w, b

    def bn(key, c):
        kg, kb, km, kv = jax.random.split(key, 4)
        gamma = 1.0 + 0.1 * jax.random.normal(kg, (c,), jnp.float32)
        beta = 0.1 * jax.random.normal(kb, (c,), jnp.float32)
        mean = 0.1 * jax.random.normal(km, (c,), jnp.float32)
        var = 0.5 + 0.5 * jnp.abs(jax.random.normal(kv, (c,), jnp.float32))
        return gamma, beta, mean, var

    keys = jax.random.split(key, 12)
    # conv1/2/3 with bn1/2/3
    w1, b1 = dense(keys[0], k, 64);     w1, b1 = _fold_bn(w1, b1, *bn(keys[1], 64))
    w2, b2 = dense(keys[2], 64, 128);   w2, b2 = _fold_bn(w2, b2, *bn(keys[3], 128))
    w3, b3 = dense(keys[4], 128, 1024); w3, b3 = _fold_bn(w3, b3, *bn(keys[5], 1024))
    # fc1/fc2 with bn4/bn5
    fw1, fb1 = dense(keys[6], 1024, 512); fw1, fb1 = _fold_bn(fw1, fb1, *bn(keys[7], 512))
    fw2, fb2 = dense(keys[8], 512, 256);  fw2, fb2 = _fold_bn(fw2, fb2, *bn(keys[9], 256))
    # fc3 (no BN): pad output dim to 128 lanes, fold bias + flattened identity.
    fw3, fb3 = dense(keys[10], 256, k * k)
    ident = jnp.eye(k, dtype=jnp.float32).reshape(k * k)
    fw3p = jnp.zeros((256, 128), jnp.float32).at[:, :k * k].set(fw3)
    fb3i = jnp.zeros((1, 128), jnp.float32).at[0, :k * k].set(fb3 + ident)

    # Cast MXU weights to bf16 (f32 accumulation in-kernel); conv1 + biases stay f32.
    params = (w1, b1,
              w2.astype(jnp.bfloat16), b2,
              w3.astype(jnp.bfloat16), b3,
              fw1.astype(jnp.bfloat16), fb1,
              fw2.astype(jnp.bfloat16), fb2,
              fw3p.astype(jnp.bfloat16), fb3i)
    return params, k


def tnet_forward(x_bcn, params, k, *, tn_max=512, tb_max=8, c3_chunk=256):
    """x_bcn: (B, k, N) float32, PyTorch Conv1d layout. Returns (B, k, k)."""
    B, kc, N = x_bcn.shape
    assert kc == k
    assert 1024 % c3_chunk == 0
    x = jnp.transpose(x_bcn, (0, 2, 1)).astype(jnp.float32)      # (B, N, k)

    # Point tile (reduction axis): as few steps as possible at <= tn_max, rounded to 8.
    n_steps = pl.cdiv(N, tn_max)
    tn = -(-N // n_steps)
    tn = ((tn + 7) // 8) * 8
    N_pad = pl.cdiv(N, tn) * tn

    # Batch tile (parallel axis): guarantee >=2 batch tiles whenever B >= 2 so the
    # "parallel" grid axis can span both TensorCores on v7x.
    if B >= 2:
        tb = min(tb_max, (B + 1) // 2)
    else:
        tb = 1
    B_pad = pl.cdiv(B, tb) * tb

    # Edge-replication padding: duplicated real points / batch rows cannot change
    # the max-pool, so the kernel needs no padded-row masking at all.
    if (N_pad != N) or (B_pad != B):
        x = jnp.pad(x, ((0, B_pad - B), (0, N_pad - N), (0, 0)), mode="edge")

    n_btiles = B_pad // tb
    grid = (n_btiles, N_pad // tn)

    x_spec = pl.BlockSpec((tb, tn, k), lambda b, n: (b, n, 0))
    # Weights/biases: full-array blocks, same block every step -> resident in VMEM.
    # (Could be pl.Buffered(1) since the block never changes; kept default for safety.)
    param_specs = [pl.BlockSpec(p.shape, lambda b, n: (0, 0)) for p in params]
    out_spec = pl.BlockSpec((1, tb, 128), lambda b, n: (b, 0, 0))

    grid_spec = pltpu.PrefetchScalarGridSpec(
        num_scalar_prefetch=0,
        grid=grid,
        in_specs=[x_spec] + param_specs,
        out_specs=out_spec,
        scratch_shapes=[pltpu.VMEM((tb, 1024), jnp.float32)],
    )

    out = pl.pallas_call(
        functools.partial(tnet_kernel, c3_chunk=c3_chunk),
        out_shape=jax.ShapeDtypeStruct((n_btiles, tb, 128), jnp.float32),
        grid_spec=grid_spec,
        compiler_params=pltpu.CompilerParams(
            dimension_semantics=("parallel", "arbitrary"),
            vmem_limit_bytes=48 * 1024 * 1024),
    )(x, *params)

    return out.reshape(B_pad, 128)[:B, :k * k].reshape(B, k, k)


def tnet_reference(x_bcn, params, k):
    """Pure-JAX f32 reference with the same (BN-folded) parameters."""
    p = [q.astype(jnp.float32) for q in params]
    w1, b1, w2, b2, w3, b3, fw1, fb1, fw2, fb2, fw3p, fb3i = p
    x = jnp.transpose(x_bcn, (0, 2, 1)).astype(jnp.float32)      # (B, N, k)
    h = jnp.maximum(jnp.einsum("bnk,kc->bnc", x, w1) + b1, 0.0)
    h = jnp.maximum(h @ w2 + b2, 0.0)
    h = jnp.maximum(h @ w3 + b3, 0.0)                            # bias/ReLU BEFORE max (unhoisted)
    g = jnp.max(h, axis=1)                                       # (B, 1024)
    g = jnp.maximum(g @ fw1 + fb1, 0.0)
    g = jnp.maximum(g @ fw2 + fb2, 0.0)
    g = g @ fw3p + fb3i                                          # identity already folded in
    return g[:, :k * k].reshape(-1, k, k)


if __name__ == "__main__":
    key = jax.random.PRNGKey(0)
    k_in, k_x = jax.random.split(key)

    K = 3        # TNet(k=3)
    B = 2        # batch
    N = 16       # number of points

    params, k = make_tnet_params(k_in, K)
    x = jax.random.normal(k_x, (B, K, N), jnp.float32)   # PyTorch layout (B, C=k, N)

    y = tnet_forward(x, params, k)
    y = jax.block_until_ready(y)

    assert y.shape == (B, K, K), y.shape
    assert bool(jnp.all(jnp.isfinite(y)))

    # Cross-check against a pure-JAX f32 reference (kernel uses bf16 activations
    # on the MXU, so allow a loose tolerance).
    y_ref = tnet_reference(x, params, k)
    assert bool(jnp.allclose(y, y_ref, rtol=1e-1, atol=1e-1)), \
        float(jnp.max(jnp.abs(y - y_ref)))

    print("KERNEL_OK")
</pallas_src>

<mosaic_0001>
module attributes {stable_mosaic.version = 11 : i64} {
  func.func @tnet_kernel(%arg0: i32, %arg1: i32, %arg2: memref<1x16x3xf32, #tpu.memory_space<vmem>>, %arg3: memref<3x64xf32, #tpu.memory_space<vmem>>, %arg4: memref<1x64xf32, #tpu.memory_space<vmem>>, %arg5: memref<64x128xbf16, #tpu.memory_space<vmem>>, %arg6: memref<1x128xf32, #tpu.memory_space<vmem>>, %arg7: memref<128x1024xbf16, #tpu.memory_space<vmem>>, %arg8: memref<1x1024xf32, #tpu.memory_space<vmem>>, %arg9: memref<1024x512xbf16, #tpu.memory_space<vmem>>, %arg10: memref<1x512xf32, #tpu.memory_space<vmem>>, %arg11: memref<512x256xbf16, #tpu.memory_space<vmem>>, %arg12: memref<1x256xf32, #tpu.memory_space<vmem>>, %arg13: memref<256x128xbf16, #tpu.memory_space<vmem>>, %arg14: memref<1x128xf32, #tpu.memory_space<vmem>>, %arg15: memref<1x1x128xf32, #tpu.memory_space<vmem>>, %arg16: memref<1x1024xf32, #tpu.memory_space<vmem>>) attributes {dimension_semantics = [#tpu.dimension_semantics<parallel>, #tpu.dimension_semantics<arbitrary>], iteration_bounds = array<i64: 2, 1>, scalar_prefetch = 0 : i64, scratch_operands = 1 : i64, tpu.core_type = #tpu.core_type<tc>, window_params = [{transform_indices = @transform_0, window_bounds = array<i64: 1, 16, 3>}, {pipeline_mode = #tpu.pipeline_mode<synchronous>, transform_indices = @transform_1, window_bounds = array<i64: 3, 64>}, {pipeline_mode = #tpu.pipeline_mode<synchronous>, transform_indices = @transform_2, window_bounds = array<i64: 1, 64>}, {pipeline_mode = #tpu.pipeline_mode<synchronous>, transform_indices = @transform_3, window_bounds = array<i64: 64, 128>}, {pipeline_mode = #tpu.pipeline_mode<synchronous>, transform_indices = @transform_4, window_bounds = array<i64: 1, 128>}, {pipeline_mode = #tpu.pipeline_mode<synchronous>, transform_indices = @transform_5, window_bounds = array<i64: 128, 1024>}, {pipeline_mode = #tpu.pipeline_mode<synchronous>, transform_indices = @transform_6, window_bounds = array<i64: 1, 1024>}, {pipeline_mode = #tpu.pipeline_mode<synchronous>, transform_indices = @transform_7, window_bounds = array<i64: 1024, 512>}, {pipeline_mode = #tpu.pipeline_mode<synchronous>, transform_indices = @transform_8, window_bounds = array<i64: 1, 512>}, {pipeline_mode = #tpu.pipeline_mode<synchronous>, transform_indices = @transform_9, window_bounds = array<i64: 512, 256>}, {pipeline_mode = #tpu.pipeline_mode<synchronous>, transform_indices = @transform_10, window_bounds = array<i64: 1, 256>}, {pipeline_mode = #tpu.pipeline_mode<synchronous>, transform_indices = @transform_11, window_bounds = array<i64: 256, 128>}, {pipeline_mode = #tpu.pipeline_mode<synchronous>, transform_indices = @transform_12, window_bounds = array<i64: 1, 128>}, {transform_indices = @transform_13, window_bounds = array<i64: 1, 1, 128>}]} {
    %c0_i32 = arith.constant 0 : i32
    %0 = arith.cmpi eq, %arg1, %c0_i32 : i32
    %1 = arith.extui %0 : i1 to i32
    %c0_i32_0 = arith.constant 0 : i32
    %2 = arith.cmpi ne, %1, %c0_i32_0 : i32
    scf.if %2 {
      %cst_44 = arith.constant 0xFF800000 : f32
      %72 = vector.broadcast %cst_44 : f32 to vector<1x1024xf32>
      %c0_45 = arith.constant 0 : index
      %c0_46 = arith.constant 0 : index
      %73 = vector.load %arg16[%c0_45, %c0_46] : memref<1x1024xf32, #tpu.memory_space<vmem>>, vector<1x1024xf32>
      tpu.vector_store %arg16[%c0_45, %c0_46], %72 {strides = array<i32>} : memref<1x1024xf32, #tpu.memory_space<vmem>>, vector<1x1024xf32>,
    } else {
    }
    %c0 = arith.constant 0 : index
    %c0_1 = arith.constant 0 : index
    %c0_2 = arith.constant 0 : index
    %3 = vector.load %arg2[%c0, %c0_1, %c0_2] : memref<1x16x3xf32, #tpu.memory_space<vmem>>, vector<1x16x3xf32>
    %c0_3 = arith.constant 0 : index
    %c0_4 = arith.constant 0 : index
    %4 = vector.load %arg3[%c0_3, %c0_4] : memref<3x64xf32, #tpu.memory_space<vmem>>, vector<3x64xf32>
    %5 = vector.extract_strided_slice %3 {offsets = [0, 0, 0], sizes = [1, 16, 1], strides = [1, 1, 1]} : vector<1x16x3xf32> to vector<1x16x1xf32>
    %6 = vector.extract_strided_slice %4 {offsets = [0, 0], sizes = [1, 64], strides = [1, 1]} : vector<3x64xf32> to vector<1x64xf32>
    %7 = vector.shape_cast %6 : vector<1x64xf32> to vector<1x1x64xf32>
    %8 = vector.broadcast %5 : vector<1x16x1xf32> to vector<1x16x64xf32>
    %9 = vector.broadcast %7 : vector<1x1x64xf32> to vector<1x16x64xf32>
    %10 = arith.mulf %8, %9 : vector<1x16x64xf32>
    %11 = vector.extract_strided_slice %3 {offsets = [0, 0, 1], sizes = [1, 16, 1], strides = [1, 1, 1]} : vector<1x16x3xf32> to vector<1x16x1xf32>
    %12 = vector.extract_strided_slice %4 {offsets = [1, 0], sizes = [1, 64], strides = [1, 1]} : vector<3x64xf32> to vector<1x64xf32>
    %13 = vector.shape_cast %12 : vector<1x64xf32> to vector<1x1x64xf32>
    %14 = vector.broadcast %11 : vector<1x16x1xf32> to vector<1x16x64xf32>
    %15 = vector.broadcast %13 : vector<1x1x64xf32> to vector<1x16x64xf32>
    %16 = arith.mulf %14, %15 : vector<1x16x64xf32>
    %17 = arith.addf %10, %16 : vector<1x16x64xf32>
    %18 = vector.extract_strided_slice %3 {offsets = [0, 0, 2], sizes = [1, 16, 1], strides = [1, 1, 1]} : vector<1x16x3xf32> to vector<1x16x1xf32>
    %19 = vector.extract_strided_slice %4 {offsets = [2, 0], sizes = [1, 64], strides = [1, 1]} : vector<3x64xf32> to vector<1x64xf32>
    %20 = vector.shape_cast %19 : vector<1x64xf32> to vector<1x1x64xf32>
    %21 = vector.broadcast %18 : vector<1x16x1xf32> to vector<1x16x64xf32>
    %22 = vector.broadcast %20 : vector<1x1x64xf32> to vector<1x16x64xf32>
    %23 = arith.mulf %21, %22 : vector<1x16x64xf32>
    %24 = arith.addf %17, %23 : vector<1x16x64xf32>
    %c0_5 = arith.constant 0 : index
    %c0_6 = arith.constant 0 : index
    %25 = vector.load %arg4[%c0_5, %c0_6] : memref<1x64xf32, #tpu.memory_space<vmem>>, vector<1x64xf32>
    %26 = vector.shape_cast %25 : vector<1x64xf32> to vector<1x1x64xf32>
    %27 = vector.broadcast %26 : vector<1x1x64xf32> to vector<1x16x64xf32>
    %28 = arith.addf %24, %27 : vector<1x16x64xf32>
    %cst = arith.constant 0.000000e+00 : f32
    %29 = vector.broadcast %cst : f32 to vector<1x16x64xf32>
    %30 = arith.maximumf %28, %29 : vector<1x16x64xf32>
    %31 = vector.shape_cast %30 : vector<1x16x64xf32> to vector<16x64xf32>
    %32 = arith.truncf %31 : vector<16x64xf32> to vector<16x64xbf16>
    %c0_7 = arith.constant 0 : index
    %c0_8 = arith.constant 0 : index
    %33 = vector.load %arg5[%c0_7, %c0_8] : memref<64x128xbf16, #tpu.memory_space<vmem>>, vector<64x128xbf16>
    %cst_9 = arith.constant dense<0.000000e+00> : vector<16x128xf32>
    %34 = tpu.matmul %32, %33, %cst_9 {dimension_numbers = #tpu.dot_dimension_numbers<[1], [0], [0], [1], [0, 0, 1, 1], [], []>} : vector<16x64xbf16>, vector<64x128xbf16>, vector<16x128xf32> -> vector<16x128xf32>
    %c0_10 = arith.constant 0 : index
    %c0_11 = arith.constant 0 : index
    %35 = vector.load %arg6[%c0_10, %c0_11] : memref<1x128xf32, #tpu.memory_space<vmem>>, vector<1x128xf32>
    %36 = vector.broadcast %35 : vector<1x128xf32> to vector<16x128xf32>
    %37 = arith.addf %34, %36 : vector<16x128xf32>
    %cst_12 = arith.constant 0.000000e+00 : f32
    %38 = vector.broadcast %cst_12 : f32 to vector<16x128xf32>
    %39 = arith.maximumf %37, %38 : vector<16x128xf32>
    %40 = arith.truncf %39 : vector<16x128xf32> to vector<16x128xbf16>
    %c0_13 = arith.constant 0 : index
    %c0_14 = arith.constant 0 : index
    %41 = vector.load %arg7[%c0_13, %c0_14] : memref<128x1024xbf16, #tpu.memory_space<vmem>>, vector<128x256xbf16>
    %cst_15 = arith.constant dense<0.000000e+00> : vector<16x256xf32>
    %42 = tpu.matmul %40, %41, %cst_15 {dimension_numbers = #tpu.dot_dimension_numbers<[1], [0], [0], [1], [0, 0, 1, 1], [], []>} : vector<16x128xbf16>, vector<128x256xbf16>, vector<16x256xf32> -> vector<16x256xf32>
    %43 = vector.shape_cast %42 : vector<16x256xf32> to vector<1x16x256xf32>
    %cst_16 = arith.constant dense<0xFF800000> : vector<1x256xf32>
    %44 = vector.multi_reduction <maximumf>, %43, %cst_16 [1] : vector<1x16x256xf32> to vector<1x256xf32>
    %c0_17 = arith.constant 0 : index
    %c0_18 = arith.constant 0 : index
    %45 = vector.load %arg16[%c0_17, %c0_18] : memref<1x1024xf32, #tpu.memory_space<vmem>>, vector<1x256xf32>
    %46 = arith.maximumf %45, %44 : vector<1x256xf32>
    %c0_19 = arith.constant 0 : index
    %c0_20 = arith.constant 0 : index
    %47 = vector.load %arg16[%c0_19, %c0_20] : memref<1x1024xf32, #tpu.memory_space<vmem>>, vector<1x256xf32>
    tpu.vector_store %arg16[%c0_19, %c0_20], %46 {strides = array<i32>} : memref<1x1024xf32, #tpu.memory_space<vmem>>, vector<1x256xf32>,
    %c0_21 = arith.constant 0 : index
    %c256 = arith.constant 256 : index
    %48 = vector.load %arg7[%c0_21, %c256] : memref<128x1024xbf16, #tpu.memory_space<vmem>>, vector<128x256xbf16>
    %cst_22 = arith.constant dense<0.000000e+00> : vector<16x256xf32>
    %49 = tpu.matmul %40, %48, %cst_22 {dimension_numbers = #tpu.dot_dimension_numbers<[1], [0], [0], [1], [0, 0, 1, 1], [], []>} : vector<16x128xbf16>, vector<128x256xbf16>, vector<16x256xf32> -> vector<16x256xf32>
    %50 = vector.shape_cast %49 : vector<16x256xf32> to vector<1x16x256xf32>
    %cst_23 = arith.constant dense<0xFF800000> : vector<1x256xf32>
    %51 = vector.multi_reduction <maximumf>, %50, %cst_23 [1] : vector<1x16x256xf32> to vector<1x256xf32>
    %c0_24 = arith.constant 0 : index
    %c256_25 = arith.constant 256 : index
    %52 = vector.load %arg16[%c0_24, %c256_25] : memref<1x1024xf32, #tpu.memory_space<vmem>>, vector<1x256xf32>
    %53 = arith.maximumf %52, %51 : vector<1x256xf32>
    %c0_26 = arith.constant 0 : index
    %c256_27 = arith.constant 256 : index
    %54 = vector.load %arg16[%c0_26, %c256_27] : memref<1x1024xf32, #tpu.memory_space<vmem>>, vector<1x256xf32>
    tpu.vector_store %arg16[%c0_26, %c256_27], %53 {strides = array<i32>} : memref<1x1024xf32, #tpu.memory_space<vmem>>, vector<1x256xf32>,
    %c0_28 = arith.constant 0 : index
    %c512 = arith.constant 512 : index
    %55 = vector.load %arg7[%c0_28, %c512] : memref<128x1024xbf16, #tpu.memory_space<vmem>>, vector<128x256xbf16>
    %cst_29 = arith.constant dense<0.000000e+00> : vector<16x256xf32>
    %56 = tpu.matmul %40, %55, %cst_29 {dimension_numbers = #tpu.dot_dimension_numbers<[1], [0], [0], [1], [0, 0, 1, 1], [], []>} : vector<16x128xbf16>, vector<128x256xbf16>, vector<16x256xf32> -> vector<16x256xf32>
    %57 = vector.shape_cast %56 : vector<16x256xf32> to vector<1x16x256xf32>
    %cst_30 = arith.constant dense<0xFF800000> : vector<1x256xf32>
    %58 = vector.multi_reduction <maximumf>, %57, %cst_30 [1] : vector<1x16x256xf32> to vector<1x256xf32>
    %c0_31 = arith.constant 0 : index
    %c512_32 = arith.constant 512 : index
    %59 = vector.load %arg16[%c0_31, %c512_32] : memref<1x1024xf32, #tpu.memory_space<vmem>>, vector<1x256xf32>
    %60 = arith.maximumf %59, %58 : vector<1x256xf32>
    %c0_33 = arith.constant 0 : index
    %c512_34 = arith.constant 512 : index
    %61 = vector.load %arg16[%c0_33, %c512_34] : memref<1x1024xf32, #tpu.memory_space<vmem>>, vector<1x256xf32>
    tpu.vector_store %arg16[%c0_33, %c512_34], %60 {strides = array<i32>} : memref<1x1024xf32, #tpu.memory_space<vmem>>, vector<1x256xf32>,
    %c0_35 = arith.constant 0 : index
    %c768 = arith.constant 768 : index
    %62 = vector.load %arg7[%c0_35, %c768] : memref<128x1024xbf16, #tpu.memory_space<vmem>>, vector<128x256xbf16>
    %cst_36 = arith.constant dense<0.000000e+00> : vector<16x256xf32>
    %63 = tpu.matmul %40, %62, %cst_36 {dimension_numbers = #tpu.dot_dimension_numbers<[1], [0], [0], [1], [0, 0, 1, 1], [], []>} : vector<16x128xbf16>, vector<128x256xbf16>, vector<16x256xf32> -> vector<16x256xf32>
    %64 = vector.shape_cast %63 : vector<16x256xf32> to vector<1x16x256xf32>
    %cst_37 = arith.constant dense<0xFF800000> : vector<1x256xf32>
    %65 = vector.multi_reduction <maximumf>, %64, %cst_37 [1] : vector<1x16x256xf32> to vector<1x256xf32>
    %c0_38 = arith.constant 0 : index
    %c768_39 = arith.constant 768 : index
    %66 = vector.load %arg16[%c0_38, %c768_39] : memref<1x1024xf32, #tpu.memory_space<vmem>>, vector<1x256xf32>
    %67 = arith.maximumf %66, %65 : vector<1x256xf32>
    %c0_40 = arith.constant 0 : index
    %c768_41 = arith.constant 768 : index
    %68 = vector.load %arg16[%c0_40, %c768_41] : memref<1x1024xf32, #tpu.memory_space<vmem>>, vector<1x256xf32>
    tpu.vector_store %arg16[%c0_40, %c768_41], %67 {strides = array<i32>} : memref<1x1024xf32, #tpu.memory_space<vmem>>, vector<1x256xf32>,
    %c0_i32_42 = arith.constant 0 : i32
    %69 = arith.cmpi eq, %arg1, %c0_i32_42 : i32
    %70 = arith.extui %69 : i1 to i32
    %c0_i32_43 = arith.constant 0 : i32
    %71 = arith.cmpi ne, %70, %c0_i32_43 : i32
    scf.if %71 {
      %c0_44 = arith.constant 0 : index
      %c0_45 = arith.constant 0 : index
      %72 = vector.load %arg16[%c0_44, %c0_45] : memref<1x1024xf32, #tpu.memory_space<vmem>>, vector<1x1024xf32>
      %c0_46 = arith.constant 0 : index
      %c0_47 = arith.constant 0 : index
      %73 = vector.load %arg8[%c0_46, %c0_47] : memref<1x1024xf32, #tpu.memory_space<vmem>>, vector<1x1024xf32>
      %74 = arith.addf %72, %73 : vector<1x1024xf32>
      %cst_48 = arith.constant 0.000000e+00 : f32
      %75 = vector.broadcast %cst_48 : f32 to vector<1x1024xf32>
      %76 = arith.maximumf %74, %75 : vector<1x1024xf32>
      %77 = arith.truncf %76 : vector<1x1024xf32> to vector<1x1024xbf16>
      %c0_49 = arith.constant 0 : index
      %c0_50 = arith.constant 0 : index
      %78 = vector.load %arg9[%c0_49, %c0_50] : memref<1024x512xbf16, #tpu.memory_space<vmem>>, vector<1024x512xbf16>
      %cst_51 = arith.constant dense<0.000000e+00> : vector<1x512xf32>
      %79 = tpu.matmul %77, %78, %cst_51 {dimension_numbers = #tpu.dot_dimension_numbers<[1], [0], [0], [1], [0, 0, 1, 1], [], []>} : vector<1x1024xbf16>, vector<1024x512xbf16>, vector<1x512xf32> -> vector<1x512xf32>
      %c0_52 = arith.constant 0 : index
      %c0_53 = arith.constant 0 : index
      %80 = vector.load %arg10[%c0_52, %c0_53] : memref<1x512xf32, #tpu.memory_space<vmem>>, vector<1x512xf32>
      %81 = arith.addf %79, %80 : vector<1x512xf32>
      %cst_54 = arith.constant 0.000000e+00 : f32
      %82 = vector.broadcast %cst_54 : f32 to vector<1x512xf32>
      %83 = arith.maximumf %81, %82 : vector<1x512xf32>
      %84 = arith.truncf %83 : vector<1x512xf32> to vector<1x512xbf16>
      %c0_55 = arith.constant 0 : index
      %c0_56 = arith.constant 0 : index
      %85 = vector.load %arg11[%c0_55, %c0_56] : memref<512x256xbf16, #tpu.memory_space<vmem>>, vector<512x256xbf16>
      %cst_57 = arith.constant dense<0.000000e+00> : vector<1x256xf32>
      %86 = tpu.matmul %84, %85, %cst_57 {dimension_numbers = #tpu.dot_dimension_numbers<[1], [0], [0], [1], [0, 0, 1, 1], [], []>} : vector<1x512xbf16>, vector<512x256xbf16>, vector<1x256xf32> -> vector<1x256xf32>
      %c0_58 = arith.constant 0 : index
      %c0_59 = arith.constant 0 : index
      %87 = vector.load %arg12[%c0_58, %c0_59] : memref<1x256xf32, #tpu.memory_space<vmem>>, vector<1x256xf32>
      %88 = arith.addf %86, %87 : vector<1x256xf32>
      %cst_60 = arith.constant 0.000000e+00 : f32
      %89 = vector.broadcast %cst_60 : f32 to vector<1x256xf32>
      %90 = arith.maximumf %88, %89 : vector<1x256xf32>
      %91 = arith.truncf %90 : vector<1x256xf32> to vector<1x256xbf16>
      %c0_61 = arith.constant 0 : index
      %c0_62 = arith.constant 0 : index
      %92 = vector.load %arg13[%c0_61, %c0_62] : memref<256x128xbf16, #tpu.memory_space<vmem>>, vector<256x128xbf16>
      %cst_63 = arith.constant dense<0.000000e+00> : vector<1x128xf32>
      %93 = tpu.matmul %91, %92, %cst_63 {dimension_numbers = #tpu.dot_dimension_numbers<[1], [0], [0], [1], [0, 0, 1, 1], [], []>} : vector<1x256xbf16>, vector<256x128xbf16>, vector<1x128xf32> -> vector<1x128xf32>
      %c0_64 = arith.constant 0 : index
      %c0_65 = arith.constant 0 : index
      %94 = vector.load %arg14[%c0_64, %c0_65] : memref<1x128xf32, #tpu.memory_space<vmem>>, vector<1x128xf32>
      %95 = arith.addf %93, %94 : vector<1x128xf32>
      %96 = vector.shape_cast %95 : vector<1x128xf32> to vector<1x1x128xf32>
      %c0_66 = arith.constant 0 : index
      %c0_67 = arith.constant 0 : index
      %c0_68 = arith.constant 0 : index
      %97 = vector.load %arg15[%c0_66, %c0_67, %c0_68] : memref<1x1x128xf32, #tpu.memory_space<vmem>>, vector<1x1x128xf32>
      tpu.vector_store %arg15[%c0_66, %c0_67, %c0_68], %96 {strides = array<i32>} : memref<1x1x128xf32, #tpu.memory_space<vmem>>, vector<1x1x128xf32>,
    } else {
    }
    return
  }
  func.func @transform_0(%arg0: i32, %arg1: i32) -> (i32, i32, i32) {
    %c0_i32 = arith.constant 0 : i32
    %c0_i32_0 = arith.constant 0 : i32
    return %arg0, %arg1, %c0_i32 : i32, i32, i32
  }
  func.func @transform_1(%arg0: i32, %arg1: i32) -> (i32, i32) {
    %c0_i32 = arith.constant 0 : i32
    %c0_i32_0 = arith.constant 0 : i32
    %c0_i32_1 = arith.constant 0 : i32
    return %c0_i32, %c0_i32_0 : i32, i32
  }
  func.func @transform_2(%arg0: i32, %arg1: i32) -> (i32, i32) {
    %c0_i32 = arith.constant 0 : i32
    %c0_i32_0 = arith.constant 0 : i32
    %c0_i32_1 = arith.constant 0 : i32
    return %c0_i32, %c0_i32_0 : i32, i32
  }
  func.func @transform_3(%arg0: i32, %arg1: i32) -> (i32, i32) {
    %c0_i32 = arith.constant 0 : i32
    %c0_i32_0 = arith.constant 0 : i32
    %c0_i32_1 = arith.constant 0 : i32
    return %c0_i32, %c0_i32_0 : i32, i32
  }
  func.func @transform_4(%arg0: i32, %arg1: i32) -> (i32, i32) {
    %c0_i32 = arith.constant 0 : i32
    %c0_i32_0 = arith.constant 0 : i32
    %c0_i32_1 = arith.constant 0 : i32
    return %c0_i32, %c0_i32_0 : i32, i32
  }
  func.func @transform_5(%arg0: i32, %arg1: i32) -> (i32, i32) {
    %c0_i32 = arith.constant 0 : i32
    %c0_i32_0 = arith.constant 0 : i32
    %c0_i32_1 = arith.constant 0 : i32
    return %c0_i32, %c0_i32_0 : i32, i32
  }
  func.func @transform_6(%arg0: i32, %arg1: i32) -> (i32, i32) {
    %c0_i32 = arith.constant 0 : i32
    %c0_i32_0 = arith.constant 0 : i32
    %c0_i32_1 = arith.constant 0 : i32
    return %c0_i32, %c0_i32_0 : i32, i32
  }
  func.func @transform_7(%arg0: i32, %arg1: i32) -> (i32, i32) {
    %c0_i32 = arith.constant 0 : i32
    %c0_i32_0 = arith.constant 0 : i32
    %c0_i32_1 = arith.constant 0 : i32
    return %c0_i32, %c0_i32_0 : i32, i32
  }
  func.func @transform_8(%arg0: i32, %arg1: i32) -> (i32, i32) {
    %c0_i32 = arith.constant 0 : i32
    %c0_i32_0 = arith.constant 0 : i32
    %c0_i32_1 = arith.constant 0 : i32
    return %c0_i32, %c0_i32_0 : i32, i32
  }
  func.func @transform_9(%arg0: i32, %arg1: i32) -> (i32, i32) {
    %c0_i32 = arith.constant 0 : i32
    %c0_i32_0 = arith.constant 0 : i32
    %c0_i32_1 = arith.constant 0 : i32
    return %c0_i32, %c0_i32_0 : i32, i32
  }
  func.func @transform_10(%arg0: i32, %arg1: i32) -> (i32, i32) {
    %c0_i32 = arith.constant 0 : i32
    %c0_i32_0 = arith.constant 0 : i32
    %c0_i32_1 = arith.constant 0 : i32
    return %c0_i32, %c0_i32_0 : i32, i32
  }
  func.func @transform_11(%arg0: i32, %arg1: i32) -> (i32, i32) {
    %c0_i32 = arith.constant 0 : i32
    %c0_i32_0 = arith.constant 0 : i32
    %c0_i32_1 = arith.constant 0 : i32
    return %c0_i32, %c0_i32_0 : i32, i32
  }
  func.func @transform_12(%arg0: i32, %arg1: i32) -> (i32, i32) {
    %c0_i32 = arith.constant 0 : i32
    %c0_i32_0 = arith.constant 0 : i32
    %c0_i32_1 = arith.constant 0 : i32
    return %c0_i32, %c0_i32_0 : i32, i32
  }
  func.func @transform_13(%arg0: i32, %arg1: i32) -> (i32, i32, i32) {
    %c0_i32 = arith.constant 0 : i32
    %c0_i32_0 = arith.constant 0 : i32
    %c0_i32_1 = arith.constant 0 : i32
    return %arg0, %c0_i32, %c0_i32_0 : i32, i32, i32
  }
}

</mosaic_0001>

<llo_original>
// kernel: tpu_custom_call.1
$region0: #{tpu_custom_call.1}
  #allocation0 [shape = 'u32[]', space=smem, size = 0x4, offset = 0x4, fixed_abs, tag = 'smem constant byte address 0x4 - core index']
  #allocation1 [shape = 'u32[144,128]{1,0:T(1,128)}', space=vmem, size = 0x12000, scoped, tag = 'internal scratch']
  #allocation2 [shape = 'f32[1,1024]{1,0:T(1,128)}', space=vmem, size = 0x1000, scoped, tag = 'scratch operand']
  %s0 = inlined_call_operand.vmem [shape: f32[2,16,3], index: 0, kind: input, shape index: {}]
  %s1 = inlined_call_operand.vmem [shape: f32[3,64], index: 1, kind: input, shape index: {}]
  %s2 = inlined_call_operand.vmem [shape: f32[1,64], index: 2, kind: input, shape index: {}]
  %s3 = inlined_call_operand.vmem [shape: bf16[64,128], index: 3, kind: input, shape index: {}]
  %s4 = inlined_call_operand.vmem [shape: f32[1,128], index: 4, kind: input, shape index: {}]
  %s5 = inlined_call_operand.hbm [shape: bf16[128,1024], index: 5, kind: input, shape index: {}]
  %s6 = inlined_call_operand.vmem [shape: f32[1,1024], index: 6, kind: input, shape index: {}]
  %s7 = inlined_call_operand.hbm [shape: bf16[1024,512], index: 7, kind: input, shape index: {}]
  %s8 = inlined_call_operand.vmem [shape: f32[1,512], index: 8, kind: input, shape index: {}]
  %s9 = inlined_call_operand.hbm [shape: bf16[512,256], index: 9, kind: input, shape index: {}]
  %s10 = inlined_call_operand.vmem [shape: f32[1,256], index: 10, kind: input, shape index: {}]
  %s11 = inlined_call_operand.hbm [shape: bf16[256,128], index: 11, kind: input, shape index: {}]
  %s12 = inlined_call_operand.vmem [shape: f32[1,128], index: 12, kind: input, shape index: {}]
  %s13 = inlined_call_operand.hbm [shape: f32[2,1,128], index: 13, kind: output, shape index: {}]
  %s14 = sld [smem:[#allocation0]]
  $region109: #{tpu_custom_call.1} parent=0
    _
  %s16 = ssub.s32 1, %s14
  %s17 = scalar_select 0, %s16, %s14
  $region1: #{tpu_custom_call.1} parent=0
    #allocation3 [shape = 'u8[262144]{0}', space=vmem, size = 0x40000, scoped, tag = 'input window, operand 5, single buffered']
    #allocation4 [shape = 's32[2]{0}', space=sflag, size = 0x8, scoped, tag = 'scoped memory for tpu_custom_call.1']
    #allocation5 [shape = 's32[2]{0}', space=sflag, size = 0x8, scoped, tag = 'scoped memory for tpu_custom_call.1']
    #allocation6 [shape = 'u8[1048576]{0}', space=vmem, size = 0x100000, scoped, tag = 'input window, operand 7, single buffered']
    #allocation7 [shape = 's32[1]{0}', space=sflag, size = 0x4, scoped, tag = 'scoped memory for tpu_custom_call.1']
    #allocation8 [shape = 'u8[262144]{0}', space=vmem, size = 0x40000, scoped, tag = 'input window, operand 9, single buffered']
    #allocation9 [shape = 'u8[65536]{0}', space=vmem, size = 0x10000, scoped, tag = 'input window, operand 11, single buffered']
    #allocation10 [shape = 's32[1]{0}', space=sflag, size = 0x4, scoped, tag = 'scoped memory for tpu_custom_call.1']
    #allocation11 [shape = 'u8[1024]{0}', space=vmem, size = 0x400, scoped, tag = 'output window, operand 0']
    %18 = vsyncpa [#allocation4], 0
    %19 = vsyncpa [#allocation7], 0
    %20 = vsyncpa [#allocation10], 0
    %21 = vsyncpa [#allocation5], 0
    %s22 = scalar_lea.sflag [#allocation5], 1
    %23 = vsyncpa %s22, 0
    loop: start=0, step=1, limit=4
    $region2: #{tpu_custom_call.1} parent=1 // loop_pre_header
      _
    $region3: #{tpu_custom_call.1} parent=1 // loop_header
      %s25 = sphi 0, %s29
      %p26 = scmp.ge.s32.totalorder %s25, 4
      %s32 = sphi 0, %s44
      %s33 = sphi 0, %s40
      %s34 = sphi 0, %s32
      %s35 = sphi 0, %s33
      %s36 = sphi 0, %s34
      %s37 = sphi 0, %s35
      %s49 = sphi 0, %s51
      %s52 = sphi 0, %s49
      %s53 = sphi 0, %s52
      %s69 = sphi 0, %s53
      %s73 = sphi 0, %s73
      %s75 = sphi 0, %s73
      %s76 = sphi 0, %s75
      %s90 = sphi 0, %s76
      %s94 = sphi 0, %s94
      %s96 = sphi 0, %s94
      %s97 = sphi 0, %s96
      %s111 = sphi 0, %s97
      %s115 = sphi 0, %s115
      %s117 = sphi 0, %s115
      %s118 = sphi 0, %s117
      %s132 = sphi 0, %s118
      %s136 = sphi 0, %s136
      %s138 = sphi 0, %s136
      %s139 = sphi 0, %s138
      %s153 = sphi 0, %s139
      %s157 = sphi 0, %s157
      %s159 = sphi 0, %s157
      %s160 = sphi 0, %s159
      %s174 = sphi 0, %s160
      %s178 = sphi 0, %s178
      %s180 = sphi 0, %s178
      %s181 = sphi 0, %s180
      %s195 = sphi 0, %s181
      %s199 = sphi 0, %s199
      %s201 = sphi 0, %s199
      %s202 = sphi 0, %s201
      %s216 = sphi 0, %s202
      %s220 = sphi 0, %s220
      %s222 = sphi 0, %s220
      %s223 = sphi 0, %s222
      %s237 = sphi 0, %s223
      %s241 = sphi 0, %s241
      %s243 = sphi 0, %s241
      %s244 = sphi 0, %s243
      %s258 = sphi 0, %s244
      %s262 = sphi 0, %s262
      %s264 = sphi 0, %s262
      %s265 = sphi 0, %s264
      %s279 = sphi 0, %s265
      %s283 = sphi 0, %s283
      %s285 = sphi 0, %s283
      %s286 = sphi 0, %s285
      %s300 = sphi 0, %s286
      %s304 = sphi 0, %s304
      %s306 = sphi 0, %s304
      %s307 = sphi 0, %s306
      %s321 = sphi 0, %s307
      %s327 = sphi 0, %s329
      %s330 = sphi 0, %s327
      %s331 = sphi 0, %s330
      %s347 = sphi 0, %s331
    $region4: #{tpu_custom_call.1} parent=1 // loop_header_branch
      %28 = sbr.rel (%p26) target = $region8
    $region5: #{tpu_custom_call.1} parent=1 // loop_body
      %s30 = ssub.s32 %s25, 1
      %s31 = ssub.s32 %s25, 2
      %s38 = sadd.s32 1, %s33
      %p39 = scmp.ge.s32.totalorder %s38, 1
      %s40 = scalar_select %p39, 0, %s38
      %s41 = sadd.s32 1, %s32
      %s42 = scalar_select %p39, %s41, %s32
      %p43 = scmp.ge.s32.totalorder %s42, 2
      %s44 = scalar_select %p43, 0, %s42
      %s45 = ssub.s32 %s32, %s44
      %s46 = ssub.s32 %s33, %s40
      %s47 = sor.u32 %s45, %s46
      %p48 = scmp.eq.s32.totalorder %s47, 0
      %s50 = sadd.s32 %s49, 1
      %s51 = scalar_select %p48, %s49, %s50
      %p54 = pneg %p48
      %p55 = scmp.eq.s32.totalorder %s25, 1
      %p56 = por %p54, %p55
      %p57 = scmp.ne.s32.totalorder %s49, %s52
      %p58 = scmp.eq.s32.totalorder %s25, 0
      %p59 = por %p57, %p58
      %p60 = scmp.ne.s32.totalorder %s49, %s52
      %p61 = scmp.eq.s32.totalorder %s30, 1
      %p62 = por %p60, %p61
      %p63 = scmp.ne.s32.totalorder %s52, %s53
      %p64 = scmp.eq.s32.totalorder %s30, 0
      %p65 = por %p63, %p64
      %p66 = scmp.ne.s32.totalorder %s52, %s53
      %p67 = scmp.eq.s32.totalorder %s31, 1
      %p68 = por %p66, %p67
      %p70 = scmp.ne.s32.totalorder %s53, %s69
      %p71 = scmp.eq.s32.totalorder %s31, 0
      %p72 = por %p70, %p71
      %s74 = sadd.s32 %s73, 1
      %p77 = scmp.eq.s32.totalorder %s25, 1
      %p78 = scmp.ne.s32.totalorder %s73, %s75
      %p79 = scmp.eq.s32.totalorder %s25, 0
      %p80 = por %p78, %p79
      %p81 = scmp.ne.s32.totalorder %s73, %s75
      %p82 = scmp.eq.s32.totalorder %s30, 1
      %p83 = por %p81, %p82
      %p84 = scmp.ne.s32.totalorder %s75, %s76
      %p85 = scmp.eq.s32.totalorder %s30, 0
      %p86 = por %p84, %p85
      %p87 = scmp.ne.s32.totalorder %s75, %s76
      %p88 = scmp.eq.s32.totalorder %s31, 1
      %p89 = por %p87, %p88
      %p91 = scmp.ne.s32.totalorder %s76, %s90
      %p92 = scmp.eq.s32.totalorder %s31, 0
      %p93 = por %p91, %p92
      %s95 = sadd.s32 %s94, 1
      %p98 = scmp.eq.s32.totalorder %s25, 1
      %p99 = scmp.ne.s32.totalorder %s94, %s96
      %p100 = scmp.eq.s32.totalorder %s25, 0
      %p101 = por %p99, %p100
      %p102 = scmp.ne.s32.totalorder %s94, %s96
      %p103 = scmp.eq.s32.totalorder %s30, 1
      %p104 = por %p102, %p103
      %p105 = scmp.ne.s32.totalorder %s96, %s97
      %p106 = scmp.eq.s32.totalorder %s30, 0
      %p107 = por %p105, %p106
      %p108 = scmp.ne.s32.totalorder %s96, %s97
      %p109 = scmp.eq.s32.totalorder %s31, 1
      %p110 = por %p108, %p109
      %p112 = scmp.ne.s32.totalorder %s97, %s111
      %p113 = scmp.eq.s32.totalorder %s31, 0
      %p114 = por %p112, %p113
      %s116 = sadd.s32 %s115, 1
      %p119 = scmp.eq.s32.totalorder %s25, 1
      %p120 = scmp.ne.s32.totalorder %s115, %s117
      %p121 = scmp.eq.s32.totalorder %s25, 0
      %p122 = por %p120, %p121
      %p123 = scmp.ne.s32.totalorder %s115, %s117
      %p124 = scmp.eq.s32.totalorder %s30, 1
      %p125 = por %p123, %p124
      %p126 = scmp.ne.s32.totalorder %s117, %s118
      %p127 = scmp.eq.s32.totalorder %s30, 0
      %p128 = por %p126, %p127
      %p129 = scmp.ne.s32.totalorder %s117, %s118
      %p130 = scmp.eq.s32.totalorder %s31, 1
      %p131 = por %p129, %p130
      %p133 = scmp.ne.s32.totalorder %s118, %s132
      %p134 = scmp.eq.s32.totalorder %s31, 0
      %p135 = por %p133, %p134
      %s137 = sadd.s32 %s136, 1
      %p140 = scmp.eq.s32.totalorder %s25, 1
      %p141 = scmp.ne.s32.totalorder %s136, %s138
      %p142 = scmp.eq.s32.totalorder %s25, 0
      %p143 = por %p141, %p142
      %p144 = scmp.ne.s32.totalorder %s136, %s138
      %p145 = scmp.eq.s32.totalorder %s30, 1
      %p146 = por %p144, %p145
      %p147 = scmp.ne.s32.totalorder %s138, %s139
      %p148 = scmp.eq.s32.totalorder %s30, 0
      %p149 = por %p147, %p148
      %p150 = scmp.ne.s32.totalorder %s138, %s139
      %p151 = scmp.eq.s32.totalorder %s31, 1
      %p152 = por %p150, %p151
      %p154 = scmp.ne.s32.totalorder %s139, %s153
      %p155 = scmp.eq.s32.totalorder %s31, 0
      %p156 = por %p154, %p155
      %s158 = sadd.s32 %s157, 1
      %p161 = scmp.eq.s32.totalorder %s25, 1
      %p162 = scmp.ne.s32.totalorder %s157, %s159
      %p163 = scmp.eq.s32.totalorder %s25, 0
      %p164 = por %p162, %p163
      %p165 = scmp.ne.s32.totalorder %s157, %s159
      %p166 = scmp.eq.s32.totalorder %s30, 1
      %p167 = por %p165, %p166
      %p168 = scmp.ne.s32.totalorder %s159, %s160
      %p169 = scmp.eq.s32.totalorder %s30, 0
      %p170 = por %p168, %p169
      %p171 = scmp.ne.s32.totalorder %s159, %s160
      %p172 = scmp.eq.s32.totalorder %s31, 1
      %p173 = por %p171, %p172
      %p175 = scmp.ne.s32.totalorder %s160, %s174
      %p176 = scmp.eq.s32.totalorder %s31, 0
      %p177 = por %p175, %p176
      %s179 = sadd.s32 %s178, 1
      %p182 = scmp.eq.s32.totalorder %s25, 1
      %p183 = scmp.ne.s32.totalorder %s178, %s180
      %p184 = scmp.eq.s32.totalorder %s25, 0
      %p185 = por %p183, %p184
      %p186 = scmp.ne.s32.totalorder %s178, %s180
      %p187 = scmp.eq.s32.totalorder %s30, 1
      %p188 = por %p186, %p187
      %p189 = scmp.ne.s32.totalorder %s180, %s181
      %p190 = scmp.eq.s32.totalorder %s30, 0
      %p191 = por %p189, %p190
      %p192 = scmp.ne.s32.totalorder %s180, %s181
      %p193 = scmp.eq.s32.totalorder %s31, 1
      %p194 = por %p192, %p193
      %p196 = scmp.ne.s32.totalorder %s181, %s195
      %p197 = scmp.eq.s32.totalorder %s31, 0
      %p198 = por %p196, %p197
      %s200 = sadd.s32 %s199, 1
      %p203 = scmp.eq.s32.totalorder %s25, 1
      %p204 = scmp.ne.s32.totalorder %s199, %s201
      %p205 = scmp.eq.s32.totalorder %s25, 0
      %p206 = por %p204, %p205
      %p207 = scmp.ne.s32.totalorder %s199, %s201
      %p208 = scmp.eq.s32.totalorder %s30, 1
      %p209 = por %p207, %p208
      %p210 = scmp.ne.s32.totalorder %s201, %s202
      %p211 = scmp.eq.s32.totalorder %s30, 0
      %p212 = por %p210, %p211
      %p213 = scmp.ne.s32.totalorder %s201, %s202
      %p214 = scmp.eq.s32.totalorder %s31, 1
      %p215 = por %p213, %p214
      %p217 = scmp.ne.s32.totalorder %s202, %s216
      %p218 = scmp.eq.s32.totalorder %s31, 0
      %p219 = por %p217, %p218
      %s221 = sadd.s32 %s220, 1
      %p224 = scmp.eq.s32.totalorder %s25, 1
      %p225 = scmp.ne.s32.totalorder %s220, %s222
      %p226 = scmp.eq.s32.totalorder %s25, 0
      %p227 = por %p225, %p226
      %p228 = scmp.ne.s32.totalorder %s220, %s222
      %p229 = scmp.eq.s32.totalorder %s30, 1
      %p230 = por %p228, %p229
      %p231 = scmp.ne.s32.totalorder %s222, %s223
      %p232 = scmp.eq.s32.totalorder %s30, 0
      %p233 = por %p231, %p232
      %p234 = scmp.ne.s32.totalorder %s222, %s223
      %p235 = scmp.eq.s32.totalorder %s31, 1
      %p236 = por %p234, %p235
      %p238 = scmp.ne.s32.totalorder %s223, %s237
      %p239 = scmp.eq.s32.totalorder %s31, 0
      %p240 = por %p238, %p239
      %s242 = sadd.s32 %s241, 1
      %p245 = scmp.eq.s32.totalorder %s25, 1
      %p246 = scmp.ne.s32.totalorder %s241, %s243
      %p247 = scmp.eq.s32.totalorder %s25, 0
      %p248 = por %p246, %p247
      %p249 = scmp.ne.s32.totalorder %s241, %s243
      %p250 = scmp.eq.s32.totalorder %s30, 1
      %p251 = por %p249, %p250
      %p252 = scmp.ne.s32.totalorder %s243, %s244
      %p253 = scmp.eq.s32.totalorder %s30, 0
      %p254 = por %p252, %p253
      %p255 = scmp.ne.s32.totalorder %s243, %s244
      %p256 = scmp.eq.s32.totalorder %s31, 1
      %p257 = por %p255, %p256
      %p259 = scmp.ne.s32.totalorder %s244, %s258
      %p260 = scmp.eq.s32.totalorder %s31, 0
      %p261 = por %p259, %p260
      %s263 = sadd.s32 %s262, 1
      %p266 = scmp.eq.s32.totalorder %s25, 1
      %p267 = scmp.ne.s32.totalorder %s262, %s264
      %p268 = scmp.eq.s32.totalorder %s25, 0
      %p269 = por %p267, %p268
      %p270 = scmp.ne.s32.totalorder %s262, %s264
      %p271 = scmp.eq.s32.totalorder %s30, 1
      %p272 = por %p270, %p271
      %p273 = scmp.ne.s32.totalorder %s264, %s265
      %p274 = scmp.eq.s32.totalorder %s30, 0
      %p275 = por %p273, %p274
      %p276 = scmp.ne.s32.totalorder %s264, %s265
      %p277 = scmp.eq.s32.totalorder %s31, 1
      %p278 = por %p276, %p277
      %p280 = scmp.ne.s32.totalorder %s265, %s279
      %p281 = scmp.eq.s32.totalorder %s31, 0
      %p282 = por %p280, %p281
      %s284 = sadd.s32 %s283, 1
      %p287 = scmp.eq.s32.totalorder %s25, 1
      %p288 = scmp.ne.s32.totalorder %s283, %s285
      %p289 = scmp.eq.s32.totalorder %s25, 0
      %p290 = por %p288, %p289
      %p291 = scmp.ne.s32.totalorder %s283, %s285
      %p292 = scmp.eq.s32.totalorder %s30, 1
      %p293 = por %p291, %p292
      %p294 = scmp.ne.s32.totalorder %s285, %s286
      %p295 = scmp.eq.s32.totalorder %s30, 0
      %p296 = por %p294, %p295
      %p297 = scmp.ne.s32.totalorder %s285, %s286
      %p298 = scmp.eq.s32.totalorder %s31, 1
      %p299 = por %p297, %p298
      %p301 = scmp.ne.s32.totalorder %s286, %s300
      %p302 = scmp.eq.s32.totalorder %s31, 0
      %p303 = por %p301, %p302
      %s305 = sadd.s32 %s304, 1
      %p308 = scmp.eq.s32.totalorder %s25, 1
      %p309 = scmp.ne.s32.totalorder %s304, %s306
      %p310 = scmp.eq.s32.totalorder %s25, 0
      %p311 = por %p309, %p310
      %p312 = scmp.ne.s32.totalorder %s304, %s306
      %p313 = scmp.eq.s32.totalorder %s30, 1
      %p314 = por %p312, %p313
      %p315 = scmp.ne.s32.totalorder %s306, %s307
      %p316 = scmp.eq.s32.totalorder %s30, 0
      %p317 = por %p315, %p316
      %p318 = scmp.ne.s32.totalorder %s306, %s307
      %p319 = scmp.eq.s32.totalorder %s31, 1
      %p320 = por %p318, %p319
      %p322 = scmp.ne.s32.totalorder %s307, %s321
      %p323 = scmp.eq.s32.totalorder %s31, 0
      %p324 = por %p322, %p323
      %s325 = ssub.s32 %s32, %s44
      %p326 = scmp.eq.s32.totalorder %s325, 0
      %s328 = sadd.s32 %s327, 1
      %s329 = scalar_select %p326, %s327, %s328
      %p332 = pneg %p326
      %p333 = scmp.eq.s32.totalorder %s25, 1
      %p334 = por %p332, %p333
      %p335 = scmp.ne.s32.totalorder %s327, %s330
      %p336 = scmp.eq.s32.totalorder %s25, 0
      %p337 = por %p335, %p336
      %p338 = scmp.ne.s32.totalorder %s327, %s330
      %p339 = scmp.eq.s32.totalorder %s30, 1
      %p340 = por %p338, %p339
      %p341 = scmp.ne.s32.totalorder %s330, %s331
      %p342 = scmp.eq.s32.totalorder %s30, 0
      %p343 = por %p341, %p342
      %p344 = scmp.ne.s32.totalorder %s330, %s331
      %p345 = scmp.eq.s32.totalorder %s31, 1
      %p346 = por %p344, %p345
      %p348 = scmp.ne.s32.totalorder %s331, %s347
      %p349 = scmp.eq.s32.totalorder %s31, 0
      %p350 = por %p348, %p349
      %p351 = scmp.le.s32.totalorder 1, %s25
      %p352 = scmp.lt.s32.totalorder %s25, 3
      %p353 = pnand %p351, %p352
      %p354 = pneg %p353
      // Predicated region
      $region9: #{tpu_custom_call.1} parent=5 // pred_check
        _
      $region10: #{tpu_custom_call.1} parent=5 // pred_check_branch
        %356 = sbr.rel (%p353) target = $region12
      $region11: #{tpu_custom_call.1} parent=5 // pred_region
        %s357 = ssub.s32 %s25, 1
        // Predicated region
        $region13: #{tpu_custom_call.1} parent=11 // pred_check
          %p358 = pneg %p86
        $region14: #{tpu_custom_call.1} parent=11 // pred_check_branch
          %360 = sbr.rel (%p358) target = $region16
        $region15: #{tpu_custom_call.1} parent=11 // pred_region
          _
        $region16: #{tpu_custom_call.1} parent=11 // pred_fallthru
          _
        // Predicated region
        $region17: #{tpu_custom_call.1} parent=11 // pred_check
          %p361 = pneg %p107
        $region18: #{tpu_custom_call.1} parent=11 // pred_check_branch
          %363 = sbr.rel (%p361) target = $region20
        $region19: #{tpu_custom_call.1} parent=11 // pred_region
          _
        $region20: #{tpu_custom_call.1} parent=11 // pred_fallthru
          _
        // Predicated region
        $region21: #{tpu_custom_call.1} parent=11 // pred_check
          %p364 = pneg %p128
        $region22: #{tpu_custom_call.1} parent=11 // pred_check_branch
          %366 = sbr.rel (%p364) target = $region24
        $region23: #{tpu_custom_call.1} parent=11 // pred_region
          _
        $region24: #{tpu_custom_call.1} parent=11 // pred_fallthru
          _
        // Predicated region
        $region25: #{tpu_custom_call.1} parent=11 // pred_check
          %p367 = pneg %p149
        $region26: #{tpu_custom_call.1} parent=11 // pred_check_branch
          %369 = sbr.rel (%p367) target = $region28
        $region27: #{tpu_custom_call.1} parent=11 // pred_region
          _
        $region28: #{tpu_custom_call.1} parent=11 // pred_fallthru
          _
        // Predicated region
        $region29: #{tpu_custom_call.1} parent=11 // pred_check
          %p370 = pneg %p170
        $region30: #{tpu_custom_call.1} parent=11 // pred_check_branch
          %372 = sbr.rel (%p370) target = $region32
        $region31: #{tpu_custom_call.1} parent=11 // pred_region
          %s374 = ssub.s32 8192, 8192
          %375 = vsyncadd [#allocation4], %s374
          %s376 = sshll.u32 [#allocation3], 4
          %s377 = int_to_ptr.vmem [resolvable:$true] %s376
          %382 = dma.hbm_to_vmem [thread:$0]  %s5, 8192, %s377, [#allocation4], 512, 512, 32
        $region32: #{tpu_custom_call.1} parent=11 // pred_fallthru
          _
        // Predicated region
        $region33: #{tpu_custom_call.1} parent=11 // pred_check
          %p383 = pneg %p191
        $region34: #{tpu_custom_call.1} parent=11 // pred_check_branch
          %385 = sbr.rel (%p383) target = $region36
        $region35: #{tpu_custom_call.1} parent=11 // pred_region
          _
        $region36: #{tpu_custom_call.1} parent=11 // pred_fallthru
          _
        // Predicated region
        $region37: #{tpu_custom_call.1} parent=11 // pred_check
          %p386 = pneg %p212
        $region38: #{tpu_custom_call.1} parent=11 // pred_check_branch
          %388 = sbr.rel (%p386) target = $region40
        $region39: #{tpu_custom_call.1} parent=11 // pred_region
          %s390 = ssub.s32 32768, 32768
          %391 = vsyncadd [#allocation7], %s390
          %s392 = sshll.u32 [#allocation6], 4
          %s393 = int_to_ptr.vmem [resolvable:$true] %s392
          %398 = dma.hbm_to_vmem [thread:$0]  %s7, 32768, %s393, [#allocation7], 256, 256, 16
        $region40: #{tpu_custom_call.1} parent=11 // pred_fallthru
          _
        // Predicated region
        $region41: #{tpu_custom_call.1} parent=11 // pred_check
          %p399 = pneg %p233
        $region42: #{tpu_custom_call.1} parent=11 // pred_check_branch
          %401 = sbr.rel (%p399) target = $region44
        $region43: #{tpu_custom_call.1} parent=11 // pred_region
          _
        $region44: #{tpu_custom_call.1} parent=11 // pred_fallthru
          _
        // Predicated region
        $region45: #{tpu_custom_call.1} parent=11 // pred_check
          %p402 = pneg %p254
        $region46: #{tpu_custom_call.1} parent=11 // pred_check_branch
          %404 = sbr.rel (%p402) target = $region48
        $region47: #{tpu_custom_call.1} parent=11 // pred_region
          %s406 = ssub.s32 8192, 8192
          %407 = vsyncadd [#allocation7], %s406
          %s408 = sshll.u32 [#allocation8], 4
          %s409 = int_to_ptr.vmem [resolvable:$true] %s408
          %414 = dma.hbm_to_vmem [thread:$0]  %s9, 8192, %s409, [#allocation7], 128, 128, 8
        $region48: #{tpu_custom_call.1} parent=11 // pred_fallthru
          _
        // Predicated region
        $region49: #{tpu_custom_call.1} parent=11 // pred_check
          %p415 = pneg %p275
        $region50: #{tpu_custom_call.1} parent=11 // pred_check_branch
          %417 = sbr.rel (%p415) target = $region52
        $region51: #{tpu_custom_call.1} parent=11 // pred_region
          _
        $region52: #{tpu_custom_call.1} parent=11 // pred_fallthru
          _
        // Predicated region
        $region53: #{tpu_custom_call.1} parent=11 // pred_check
          %p418 = pneg %p296
        $region54: #{tpu_custom_call.1} parent=11 // pred_check_branch
          %420 = sbr.rel (%p418) target = $region56
        $region55: #{tpu_custom_call.1} parent=11 // pred_region
          %s422 = ssub.s32 2048, 2048
          %423 = vsyncadd [#allocation10], %s422
          %s424 = sshll.u32 [#allocation9], 4
          %s425 = int_to_ptr.vmem [resolvable:$true] %s424
          %430 = dma.hbm_to_vmem [thread:$0]  %s11, 2048, %s425, [#allocation10], 64, 64, 4
        $region56: #{tpu_custom_call.1} parent=11 // pred_fallthru
          _
        // Predicated region
        $region57: #{tpu_custom_call.1} parent=11 // pred_check
          %p431 = pneg %p317
        $region58: #{tpu_custom_call.1} parent=11 // pred_check_branch
          %433 = sbr.rel (%p431) target = $region60
        $region59: #{tpu_custom_call.1} parent=11 // pred_region
          _
        $region60: #{tpu_custom_call.1} parent=11 // pred_fallthru
          _
      $region12: #{tpu_custom_call.1} parent=5 // pred_fallthru
        _
      %p434 = scmp.lt.s32.totalorder %s25, 2
      // Predicated region
      $region61: #{tpu_custom_call.1} parent=5 // pred_check
        %p435 = pneg %p434
      $region62: #{tpu_custom_call.1} parent=5 // pred_check_branch
        %437 = sbr.rel (%p435) target = $region64
      $region63: #{tpu_custom_call.1} parent=5 // pred_region
        // Predicated region
        $region65: #{tpu_custom_call.1} parent=63 // pred_check
          %p438 = pneg %p59
        $region66: #{tpu_custom_call.1} parent=63 // pred_check_branch
          %440 = sbr.rel (%p438) target = $region68
        $region67: #{tpu_custom_call.1} parent=63 // pred_region
          %s441 = smul.u32 2, %s33
          %p442 = scmp.lt.s32.totalorder %s32, 1
          %s443 = scalar_select %p442, %s32, 1
          %p444 = scmp.lt.s32.totalorder %s441, 1
          %s445 = scalar_select %p444, %s441, 1
          %s446 = smul.addr %s443, 2
          %s447 = sadd.s32 %s445, %s446
          %s448 = smul.addr %s447, 8
          %s449 = scalar_lea.vmem %s0, %s448
          %s450 = smul.u32 2, %s33
        $region68: #{tpu_custom_call.1} parent=63 // pred_fallthru
          _
      $region64: #{tpu_custom_call.1} parent=5 // pred_fallthru
        _
      %p451 = scmp.le.s32.totalorder 1, %s25
      %p452 = scmp.lt.s32.totalorder %s25, 3
      %p453 = pnand %p451, %p452
      %p454 = pneg %p453
      // Predicated region
      $region69: #{tpu_custom_call.1} parent=5 // pred_check
        _
      $region70: #{tpu_custom_call.1} parent=5 // pred_check_branch
        %456 = sbr.rel (%p453) target = $region72
      $region71: #{tpu_custom_call.1} parent=5 // pred_region
        %s457 = ssub.s32 %s25, 1
        // Predicated region
        $region73: #{tpu_custom_call.1} parent=71 // pred_check
          %p458 = pneg %p170
        $region74: #{tpu_custom_call.1} parent=71 // pred_check_branch
          %460 = sbr.rel (%p458) target = $region76
        $region75: #{tpu_custom_call.1} parent=71 // pred_region
          %461 = dma.done [#allocation4], 8192
        $region76: #{tpu_custom_call.1} parent=71 // pred_fallthru
          _
        // Predicated region
        $region77: #{tpu_custom_call.1} parent=71 // pred_check
          %p462 = pneg %p212
        $region78: #{tpu_custom_call.1} parent=71 // pred_check_branch
          %464 = sbr.rel (%p462) target = $region80
        $region79: #{tpu_custom_call.1} parent=71 // pred_region
          %465 = dma.done [#allocation7], 32768
        $region80: #{tpu_custom_call.1} parent=71 // pred_fallthru
          _
        // Predicated region
        $region81: #{tpu_custom_call.1} parent=71 // pred_check
          %p466 = pneg %p254
        $region82: #{tpu_custom_call.1} parent=71 // pred_check_branch
          %468 = sbr.rel (%p466) target = $region84
        $region83: #{tpu_custom_call.1} parent=71 // pred_region
          %469 = dma.done [#allocation7], 8192
        $region84: #{tpu_custom_call.1} parent=71 // pred_fallthru
          _
        // Predicated region
        $region85: #{tpu_custom_call.1} parent=71 // pred_check
          %p470 = pneg %p296
        $region86: #{tpu_custom_call.1} parent=71 // pred_check_branch
          %472 = sbr.rel (%p470) target = $region88
        $region87: #{tpu_custom_call.1} parent=71 // pred_region
          %473 = dma.done [#allocation10], 2048
        $region88: #{tpu_custom_call.1} parent=71 // pred_fallthru
          _
        %s474 = smul.u32 2, %s35
        %p475 = scmp.lt.s32.totalorder %s34, 1
        %s476 = scalar_select %p475, %s34, 1
        %p477 = scmp.lt.s32.totalorder %s474, 1
        %s478 = scalar_select %p477, %s474, 1
        %s479 = smul.addr %s476, 2
        %s480 = sadd.s32 %s478, %s479
        %s481 = smul.addr %s480, 8
        %s482 = scalar_lea.vmem %s0, %s481
        %p483 = pneg %p65
        %p484 = pneg %p62
        %p485 = pneg %p86
        %p486 = pneg %p83
        %p487 = pneg %p107
        %p488 = pneg %p104
        %p489 = pneg %p128
        %p490 = pneg %p125
        %p491 = pneg %p149
        %p492 = pneg %p146
        %p493 = pneg %p170
        %p494 = pneg %p167
        %p495 = pneg %p191
        %p496 = pneg %p188
        %p497 = pneg %p212
        %p498 = pneg %p209
        %p499 = pneg %p233
        %p500 = pneg %p230
        %p501 = pneg %p254
        %p502 = pneg %p251
        %p503 = pneg %p275
        %p504 = pneg %p272
        %p505 = pneg %p296
        %p506 = pneg %p293
        %p507 = pneg %p317
        %p508 = pneg %p314
        %p509 = pneg %p343
        %p510 = pneg %p340
        %s511 = sand.u32 %s330, 1
        %s512 = scalar_lea.sflag [#allocation5], %s511
        %s513 = sand.u32 %s330, 1
        %s514 = scalar_lea.vmem [#allocation11], %s513
        %s515 = smul.u32 2, %s35
        %p516 = scmp.lt.s32.totalorder %s34, 1
        %s517 = scalar_select %p516, %s34, 1
        %p518 = scmp.lt.s32.totalorder %s515, 1
        %s519 = scalar_select %p518, %s515, 1
        %s520 = smul.addr %s517, 2
        %s521 = sadd.s32 %s519, %s520
        %s522 = smul.addr %s521, 8
        %s523 = scalar_lea.vmem %s0, %s522
        %s524 = smul.u32 2, %s35
        %p526 = scmp.eq.s32.totalorder %s35, 0
        // Predicated region
        $region89: #{tpu_custom_call.1} parent=71 // pred_check
          %p527 = pneg %p526
        $region90: #{tpu_custom_call.1} parent=71 // pred_check_branch
          %529 = sbr.rel (%p527) target = $region92
        $region91: #{tpu_custom_call.1} parent=71 // pred_region
          %530 = vst [vmem:[#allocation2] sm:$0xff] -inf
        $region92: #{tpu_custom_call.1} parent=71 // pred_fallthru
          _
        %v531 = vld [vmem:[%s523] sm:$0xff]
        %v532 = vld [vmem:[%s523 + $0x8] sm:$0xff]
        %v533 = vld [vmem:[%s1] sm:$0x7]
        %535 = vset.pattern.permute.xlu0 0
        %536 = vperm.xlu0 %535, %v531
        %v537 = vpop.permute.xlu0 %536
        %540 = vset.pattern.permute.xlu0 0
        %541 = vperm.xlu0 %540, %v532
        %v542 = vpop.permute.xlu0 %541
        %v544 = vlaneseq
        %v545 = vshrl.u32 %v544, 7
        %v546 = vsub.s32 0, %v545
        %v547 = vrot.slane %v533, %v546
        %v548 = vmul.f32 %v537, %v547
        %v549 = vmul.f32 %v542, %v547
        %550 = vset.pattern.permute.xlu0 1
        %551 = vperm.xlu0 %550, %v531
        %v552 = vpop.permute.xlu0 %551
        %554 = vset.pattern.permute.xlu0 1
        %555 = vperm.xlu0 %554, %v532
        %v556 = vpop.permute.xlu0 %555
        %v558 = vlaneseq
        %v559 = vshrl.u32 %v558, 7
        %v560 = vsub.s32 1, %v559
        %v561 = vrot.slane %v533, %v560
        %v562 = vmul.f32 %v552, %v561
        %v563 = vmul.f32 %v556, %v561
        %v564 = vadd.f32 %v548, %v562
        %v565 = vadd.f32 %v549, %v563
        %566 = vset.pattern.permute.xlu0 2
        %567 = vperm.xlu0 %566, %v531
        %v568 = vpop.permute.xlu0 %567
        %570 = vset.pattern.permute.xlu0 2
        %571 = vperm.xlu0 %570, %v532
        %v572 = vpop.permute.xlu0 %571
        %v574 = vlaneseq
        %v575 = vshrl.u32 %v574, 7
        %v576 = vsub.s32 2, %v575
        %v577 = vrot.slane %v533, %v576
        %v578 = vmul.f32 %v568, %v577
        %v579 = vmul.f32 %v572, %v577
        %v580 = vadd.f32 %v564, %v578
        %v581 = vadd.f32 %v565, %v579
        %v582 = vld [vmem:[%s2] sm:$0x1]
        %v584 = vlaneseq
        %v585 = vshrl.u32 %v584, 7
        %v586 = vsub.s32 0, %v585
        %v587 = vrot.slane %v582, %v586
        %v589 = vadd.f32 %v580, %v587
        %v590 = vadd.f32 %v581, %v587
        %v591 = vmax.f32 %v589, 0.0
        %v592 = vmax.f32 %v590, 0.0
        %v593 = vpack.c.bf16 %v592, %v591
        %v594 = vld [vmem:[%s3] sm:$0xf]
        %v595 = vld [vmem:[%s3 + $0x4] sm:$0xf]
        %v596 = vld [vmem:[%s3 + $0x8] sm:$0xf]
        %v597 = vld [vmem:[%s3 + $0xc] sm:$0xf]
        %v598 = vld [vmem:[%s3 + $0x10] sm:$0xf]
        %v599 = vld [vmem:[%s3 + $0x14] sm:$0xf]
        %v600 = vld [vmem:[%s3 + $0x18] sm:$0xf]
        %v601 = vld [vmem:[%s3 + $0x1c] sm:$0xf]
        %v602 = vld [vmem:[%s4] sm:$0x1]
        %v604 = vlaneseq
        %v605 = vshrl.u32 %v604, 7
        %v606 = vsub.s32 0, %v605
        %v607 = vrot.slane %v602, %v606
        %v617 = vunpack.c.l.b16 %v594
        %v618 = vunpack.c.l.b16 %v595
        %v619 = vunpack.c.l.b16 %v596
        %v620 = vunpack.c.l.b16 %v597
        %v621 = vunpack.c.l.b16 %v598
        %v622 = vunpack.c.l.b16 %v599
        %v623 = vunpack.c.l.b16 %v600
        %v624 = vunpack.c.l.b16 %v601
        %v625 = vpack.c.b16 %v618, %v617
        %v626 = vpack.c.b16 %v620, %v619
        %v627 = vpack.c.b16 %v622, %v621
        %v628 = vpack.c.b16 %v624, %v623
        %vm633 = vcmask 523264
        %v635 = vsel %vm633, %v593, 0
        %637 = vmatprep.subr.bf16.mxu0 0
        %638 = vmatpush1.bf16.msra.mxu0 %v625
        %639 = vmatprep.subr.bf16.mxu0 0
        %640 = vmatpush1.bf16.msra.mxu0 %v626
        %641 = vmatprep.subr.bf16.mxu0 0
        %642 = vmatpush1.bf16.msra.mxu0 %v627
        %643 = vmatprep.subr.bf16.mxu0 0
        %644 = vmatpush1.bf16.msra.mxu0 %v628
        %645 = vmatprep.subr.bf16.mxu0 0
        %646 = vmatpush1.bf16.msra.mxu0 0
        %647 = vmatprep.subr.bf16.mxu0 0
        %648 = vmatpush1.bf16.msra.mxu0 0
        %649 = vmatprep.subr.bf16.mxu0 0
        %650 = vmatpush1.bf16.msra.mxu0 0
        %651 = vmatprep.subr.bf16.mxu0 0
        %652 = vmatpush1.bf16.msra.mxu0 0
        %653 = vmatprep.subr.bf16.mxu0 0
        %654 = vmatpush1.bf16.msra.mxu0 0
        %655 = vmatprep.subr.bf16.mxu0 0
        %656 = vmatpush1.bf16.msra.mxu0 0
        %657 = vmatprep.subr.bf16.mxu0 0
        %658 = vmatpush1.bf16.msra.mxu0 0
        %659 = vmatprep.subr.bf16.mxu0 0
        %660 = vmatpush1.bf16.msra.mxu0 0
        %661 = vmatprep.subr.bf16.mxu0 0
        %662 = vmatpush1.bf16.msra.mxu0 0
        %663 = vmatprep.subr.bf16.mxu0 0
        %664 = vmatpush1.bf16.msra.mxu0 0
        %665 = vmatprep.subr.bf16.mxu0 0
        %666 = vmatpush1.bf16.msra.mxu0 0
        %667 = vmatprep.subr.bf16.mxu0 0
        %668 = vmatpush1.bf16.msra.mxu0 0
        %669 = vmatprep.mubr.bf16.mxu0 0
        %670 = vmatmul.mubr.bf16.gmra.mrb[0].mxu0 %v635
        %v671 = vpop.f32.mrb[0].mxu0
        %v672 = vadd.f32 %v607, %v671
        %v673 = vpop.f32.mrb[0].mxu0
        %v674 = vpop.f32.mrb[0].mxu0
        %v675 = vadd.f32 %v607, %v674
        %v676 = vpop.f32.mrb[0].mxu0
        %677 = vdwg.mxu0
        %v678 = vmax.f32 %v672, 0.0
        %v679 = vmax.f32 %v675, 0.0
        %v680 = vpack.c.bf16 %v679, %v678
        %v681 = vld [vmem:[#allocation3] sm:$0xff]
        %v682 = vld [vmem:[#allocation3 + $0x20] sm:$0xff]
        %v683 = vld [vmem:[#allocation3 + $0x40] sm:$0xff]
        %v684 = vld [vmem:[#allocation3 + $0x60] sm:$0xff]
        %v685 = vld [vmem:[#allocation3 + $0x80] sm:$0xff]
        %v686 = vld [vmem:[#allocation3 + $0xa0] sm:$0xff]
        %v687 = vld [vmem:[#allocation3 + $0xc0] sm:$0xff]
        %v688 = vld [vmem:[#allocation3 + $0xe0] sm:$0xff]
        %v689 = vld [vmem:[#allocation3 + $0x100] sm:$0xff]
        %v690 = vld [vmem:[#allocation3 + $0x120] sm:$0xff]
        %v691 = vld [vmem:[#allocation3 + $0x140] sm:$0xff]
        %v692 = vld [vmem:[#allocation3 + $0x160] sm:$0xff]
        %v693 = vld [vmem:[#allocation3 + $0x180] sm:$0xff]
        %v694 = vld [vmem:[#allocation3 + $0x1a0] sm:$0xff]
        %v695 = vld [vmem:[#allocation3 + $0x1c0] sm:$0xff]
        %v696 = vld [vmem:[#allocation3 + $0x1e0] sm:$0xff]
        %v713 = vunpack.c.l.b16 %v681
        %v714 = vunpack.c.h.b16 %v681
        %v715 = vunpack.c.l.b16 %v682
        %v716 = vunpack.c.h.b16 %v682
        %v717 = vunpack.c.l.b16 %v683
        %v718 = vunpack.c.h.b16 %v683
        %v719 = vunpack.c.l.b16 %v684
        %v720 = vunpack.c.h.b16 %v684
        %v721 = vunpack.c.l.b16 %v685
        %v722 = vunpack.c.h.b16 %v685
        %v723 = vunpack.c.l.b16 %v686
        %v724 = vunpack.c.h.b16 %v686
        %v725 = vunpack.c.l.b16 %v687
        %v726 = vunpack.c.h.b16 %v687
        %v727 = vunpack.c.l.b16 %v688
        %v728 = vunpack.c.h.b16 %v688
        %v729 = vunpack.c.l.b16 %v689
        %v730 = vunpack.c.h.b16 %v689
        %v731 = vunpack.c.l.b16 %v690
        %v732 = vunpack.c.h.b16 %v690
        %v733 = vunpack.c.l.b16 %v691
        %v734 = vunpack.c.h.b16 %v691
        %v735 = vunpack.c.l.b16 %v692
        %v736 = vunpack.c.h.b16 %v692
        %v737 = vunpack.c.l.b16 %v693
        %v738 = vunpack.c.h.b16 %v693
        %v739 = vunpack.c.l.b16 %v694
        %v740 = vunpack.c.h.b16 %v694
        %v741 = vunpack.c.l.b16 %v695
        %v742 = vunpack.c.h.b16 %v695
        %v743 = vunpack.c.l.b16 %v696
        %v744 = vunpack.c.h.b16 %v696
        %v745 = vpack.c.b16 %v715, %v713
        %v746 = vpack.c.b16 %v716, %v714
        %v747 = vpack.c.b16 %v719, %v717
        %v748 = vpack.c.b16 %v720, %v718
        %v749 = vpack.c.b16 %v723, %v721
        %v750 = vpack.c.b16 %v724, %v722
        %v751 = vpack.c.b16 %v727, %v725
        %v752 = vpack.c.b16 %v728, %v726
        %v753 = vpack.c.b16 %v731, %v729
        %v754 = vpack.c.b16 %v732, %v730
        %v755 = vpack.c.b16 %v735, %v733
        %v756 = vpack.c.b16 %v736, %v734
        %v757 = vpack.c.b16 %v739, %v737
        %v758 = vpack.c.b16 %v740, %v738
        %v759 = vpack.c.b16 %v743, %v741
        %v760 = vpack.c.b16 %v744, %v742
        %777 = vmatprep.subr.bf16.mxu0 %v746
        %778 = vmatpush1.bf16.msra.mxu0 %v745
        %779 = vmatprep.subr.bf16.mxu0 %v748
        %780 = vmatpush1.bf16.msra.mxu0 %v747
        %781 = vmatprep.subr.bf16.mxu0 %v750
        %782 = vmatpush1.bf16.msra.mxu0 %v749
        %783 = vmatprep.subr.bf16.mxu0 %v752
        %784 = vmatpush1.bf16.msra.mxu0 %v751
        %785 = vmatprep.subr.bf16.mxu0 %v754
        %786 = vmatpush1.bf16.msra.mxu0 %v753
        %787 = vmatprep.subr.bf16.mxu0 %v756
        %788 = vmatpush1.bf16.msra.mxu0 %v755
        %789 = vmatprep.subr.bf16.mxu0 %v758
        %790 = vmatpush1.bf16.msra.mxu0 %v757
        %791 = vmatprep.subr.bf16.mxu0 %v760
        %792 = vmatpush1.bf16.msra.mxu0 %v759
        %793 = vmatprep.subr.bf16.mxu0 0
        %794 = vmatpush1.bf16.msra.mxu0 0
        %795 = vmatprep.subr.bf16.mxu0 0
        %796 = vmatpush1.bf16.msra.mxu0 0
        %797 = vmatprep.subr.bf16.mxu0 0
        %798 = vmatpush1.bf16.msra.mxu0 0
        %799 = vmatprep.subr.bf16.mxu0 0
        %800 = vmatpush1.bf16.msra.mxu0 0
        %801 = vmatprep.subr.bf16.mxu0 0
        %802 = vmatpush1.bf16.msra.mxu0 0
        %803 = vmatprep.subr.bf16.mxu0 0
        %804 = vmatpush1.bf16.msra.mxu0 0
        %805 = vmatprep.subr.bf16.mxu0 0
        %806 = vmatpush1.bf16.msra.mxu0 0
        %807 = vmatprep.subr.bf16.mxu0 0
        %808 = vmatpush1.bf16.msra.mxu0 0
        %809 = vmatprep.mubr.bf16.mxu0 0
        %810 = vmatmul.mubr.bf16.gmra.mrb[0].mxu0 %v680
        %v811 = vpop.f32.mrb[0].mxu0
        %v812 = vadd.f32 0.0, %v811
        %v813 = vpop.f32.mrb[0].mxu0
        %v814 = vadd.f32 0.0, %v813
        %v815 = vpop.f32.mrb[0].mxu0
        %v816 = vadd.f32 0.0, %v815
        %v817 = vpop.f32.mrb[0].mxu0
        %v818 = vadd.f32 0.0, %v817
        %819 = vdwg.mxu0
        %v820 = vmax.f32 %v812, %v816
        %v821 = vrot.slane %v820, 4
        %v822 = vmax.f32 %v820, %v821
        %v823 = vrot.slane %v822, 2
        %v824 = vmax.f32 %v822, %v823
        %v825 = vrot.slane %v824, 1
        %v826 = vmax.f32 %v824, %v825
        %v827 = vmax.f32 %v814, %v818
        %v828 = vrot.slane %v827, 4
        %v829 = vmax.f32 %v827, %v828
        %v830 = vrot.slane %v829, 2
        %v831 = vmax.f32 %v829, %v830
        %v832 = vrot.slane %v831, 1
        %v833 = vmax.f32 %v831, %v832
        %v834 = vld [vmem:[#allocation2] sm:$0x3]
        %v837 = vcombine.low %v826, %v833
        %v839 = vunpack.c.l.s4 1966171168
        %v840 = vunpack.c.0.s8 %v839
        %v841 = vlaneseq
        %v842 = vshrl.u32 %v841, 7
        %v843 = vsub.s32 %v840, %v842
        %v844 = vrot.slane %v837, %v843
        %v846 = vunpack.c.l.s4 1966171168
        %v847 = vunpack.c.0.s8 %v846
        %v848 = vlaneseq
        %v849 = vshrl.u32 %v848, 7
        %v850 = vsub.s32 %v847, %v849
        %v851 = vrot.slane %v844, %v850
        %v853 = vmax.f32 %v834, %v851
        %v854 = vlaneseq
        %vm855 = vcmp.ge.s32.totalorder %v854, 0
        %vm856 = vcmp.lt.s32.totalorder %v854, 256
        %vm857 = vmand %vm855, %vm856
        %858 = vst.msk [vmem:[#allocation2] sm:$0x3] %vm857, %v853
        %v859 = vld [vmem:[#allocation3 + $0x8] sm:$0xff]
        %v860 = vld [vmem:[#allocation3 + $0x28] sm:$0xff]
        %v861 = vld [vmem:[#allocation3 + $0x48] sm:$0xff]
        %v862 = vld [vmem:[#allocation3 + $0x68] sm:$0xff]
        %v863 = vld [vmem:[#allocation3 + $0x88] sm:$0xff]
        %v864 = vld [vmem:[#allocation3 + $0xa8] sm:$0xff]
        %v865 = vld [vmem:[#allocation3 + $0xc8] sm:$0xff]
        %v866 = vld [vmem:[#allocation3 + $0xe8] sm:$0xff]
        %v867 = vld [vmem:[#allocation3 + $0x108] sm:$0xff]
        %v868 = vld [vmem:[#allocation3 + $0x128] sm:$0xff]
        %v869 = vld [vmem:[#allocation3 + $0x148] sm:$0xff]
        %v870 = vld [vmem:[#allocation3 + $0x168] sm:$0xff]
        %v871 = vld [vmem:[#allocation3 + $0x188] sm:$0xff]
        %v872 = vld [vmem:[#allocation3 + $0x1a8] sm:$0xff]
        %v873 = vld [vmem:[#allocation3 + $0x1c8] sm:$0xff]
        %v874 = vld [vmem:[#allocation3 + $0x1e8] sm:$0xff]
        %v891 = vunpack.c.l.b16 %v859
        %v892 = vunpack.c.h.b16 %v859
        %v893 = vunpack.c.l.b16 %v860
        %v894 = vunpack.c.h.b16 %v860
        %v895 = vunpack.c.l.b16 %v861
        %v896 = vunpack.c.h.b16 %v861
        %v897 = vunpack.c.l.b16 %v862
        %v898 = vunpack.c.h.b16 %v862
        %v899 = vunpack.c.l.b16 %v863
        %v900 = vunpack.c.h.b16 %v863
        %v901 = vunpack.c.l.b16 %v864
        %v902 = vunpack.c.h.b16 %v864
        %v903 = vunpack.c.l.b16 %v865
        %v904 = vunpack.c.h.b16 %v865
        %v905 = vunpack.c.l.b16 %v866
        %v906 = vunpack.c.h.b16 %v866
        %v907 = vunpack.c.l.b16 %v867
        %v908 = vunpack.c.h.b16 %v867
        %v909 = vunpack.c.l.b16 %v868
        %v910 = vunpack.c.h.b16 %v868
        %v911 = vunpack.c.l.b16 %v869
        %v912 = vunpack.c.h.b16 %v869
        %v913 = vunpack.c.l.b16 %v870
        %v914 = vunpack.c.h.b16 %v870
        %v915 = vunpack.c.l.b16 %v871
        %v916 = vunpack.c.h.b16 %v871
        %v917 = vunpack.c.l.b16 %v872
        %v918 = vunpack.c.h.b16 %v872
        %v919 = vunpack.c.l.b16 %v873
        %v920 = vunpack.c.h.b16 %v873
        %v921 = vunpack.c.l.b16 %v874
        %v922 = vunpack.c.h.b16 %v874
        %v923 = vpack.c.b16 %v893, %v891
        %v924 = vpack.c.b16 %v894, %v892
        %v925 = vpack.c.b16 %v897, %v895
        %v926 = vpack.c.b16 %v898, %v896
        %v927 = vpack.c.b16 %v901, %v899
        %v928 = vpack.c.b16 %v902, %v900
        %v929 = vpack.c.b16 %v905, %v903
        %v930 = vpack.c.b16 %v906, %v904
        %v931 = vpack.c.b16 %v909, %v907
        %v932 = vpack.c.b16 %v910, %v908
        %v933 = vpack.c.b16 %v913, %v911
        %v934 = vpack.c.b16 %v914, %v912
        %v935 = vpack.c.b16 %v917, %v915
        %v936 = vpack.c.b16 %v918, %v916
        %v937 = vpack.c.b16 %v921, %v919
        %v938 = vpack.c.b16 %v922, %v920
        %955 = vmatprep.subr.bf16.mxu0 %v924
        %956 = vmatpush1.bf16.msra.mxu0 %v923
        %957 = vmatprep.subr.bf16.mxu0 %v926
        %958 = vmatpush1.bf16.msra.mxu0 %v925
        %959 = vmatprep.subr.bf16.mxu0 %v928
        %960 = vmatpush1.bf16.msra.mxu0 %v927
        %961 = vmatprep.subr.bf16.mxu0 %v930
        %962 = vmatpush1.bf16.msra.mxu0 %v929
        %963 = vmatprep.subr.bf16.mxu0 %v932
        %964 = vmatpush1.bf16.msra.mxu0 %v931
        %965 = vmatprep.subr.bf16.mxu0 %v934
        %966 = vmatpush1.bf16.msra.mxu0 %v933
        %967 = vmatprep.subr.bf16.mxu0 %v936
        %968 = vmatpush1.bf16.msra.mxu0 %v935
        %969 = vmatprep.subr.bf16.mxu0 %v938
        %970 = vmatpush1.bf16.msra.mxu0 %v937
        %971 = vmatprep.subr.bf16.mxu0 0
        %972 = vmatpush1.bf16.msra.mxu0 0
        %973 = vmatprep.subr.bf16.mxu0 0
        %974 = vmatpush1.bf16.msra.mxu0 0
        %975 = vmatprep.subr.bf16.mxu0 0
        %976 = vmatpush1.bf16.msra.mxu0 0
        %977 = vmatprep.subr.bf16.mxu0 0
        %978 = vmatpush1.bf16.msra.mxu0 0
        %979 = vmatprep.subr.bf16.mxu0 0
        %980 = vmatpush1.bf16.msra.mxu0 0
        %981 = vmatprep.subr.bf16.mxu0 0
        %982 = vmatpush1.bf16.msra.mxu0 0
        %983 = vmatprep.subr.bf16.mxu0 0
        %984 = vmatpush1.bf16.msra.mxu0 0
        %985 = vmatprep.subr.bf16.mxu0 0
        %986 = vmatpush1.bf16.msra.mxu0 0
        %987 = vmatprep.mubr.bf16.mxu0 0
        %988 = vmatmul.mubr.bf16.gmra.mrb[0].mxu0 %v680
        %v989 = vpop.f32.mrb[0].mxu0
        %v990 = vadd.f32 0.0, %v989
        %v991 = vpop.f32.mrb[0].mxu0
        %v992 = vadd.f32 0.0, %v991
        %v993 = vpop.f32.mrb[0].mxu0
        %v994 = vadd.f32 0.0, %v993
        %v995 = vpop.f32.mrb[0].mxu0
        %v996 = vadd.f32 0.0, %v995
        %997 = vdwg.mxu0
        %v998 = vmax.f32 %v990, %v994
        %v999 = vrot.slane %v998, 4
        %v1000 = vmax.f32 %v998, %v999
        %v1001 = vrot.slane %v1000, 2
        %v1002 = vmax.f32 %v1000, %v1001
        %v1003 = vrot.slane %v1002, 1
        %v1004 = vmax.f32 %v1002, %v1003
        %v1005 = vmax.f32 %v992, %v996
        %v1006 = vrot.slane %v1005, 4
        %v1007 = vmax.f32 %v1005, %v1006
        %v1008 = vrot.slane %v1007, 2
        %v1009 = vmax.f32 %v1007, %v1008
        %v1010 = vrot.slane %v1009, 1
        %v1011 = vmax.f32 %v1009, %v1010
        %v1012 = vld [vmem:[#allocation2 + $0x2] sm:$0x3]
        %v1015 = vcombine.low %v1004, %v1011
        %v1017 = vunpack.c.l.s4 1966171168
        %v1018 = vunpack.c.0.s8 %v1017
        %v1019 = vlaneseq
        %v1020 = vshrl.u32 %v1019, 7
        %v1021 = vsub.s32 %v1018, %v1020
        %v1022 = vrot.slane %v1015, %v1021
        %v1024 = vunpack.c.l.s4 1966171168
        %v1025 = vunpack.c.0.s8 %v1024
        %v1026 = vlaneseq
        %v1027 = vshrl.u32 %v1026, 7
        %v1028 = vsub.s32 %v1025, %v1027
        %v1029 = vrot.slane %v1022, %v1028
        %v1031 = vmax.f32 %v1012, %v1029
        %1032 = vst.msk [vmem:[#allocation2 + $0x2] sm:$0x3] %vm857, %v1031
        %v1033 = vld [vmem:[#allocation3 + $0x10] sm:$0xff]
        %v1034 = vld [vmem:[#allocation3 + $0x30] sm:$0xff]
        %v1035 = vld [vmem:[#allocation3 + $0x50] sm:$0xff]
        %v1036 = vld [vmem:[#allocation3 + $0x70] sm:$0xff]
        %v1037 = vld [vmem:[#allocation3 + $0x90] sm:$0xff]
        %v1038 = vld [vmem:[#allocation3 + $0xb0] sm:$0xff]
        %v1039 = vld [vmem:[#allocation3 + $0xd0] sm:$0xff]
        %v1040 = vld [vmem:[#allocation3 + $0xf0] sm:$0xff]
        %v1041 = vld [vmem:[#allocation3 + $0x110] sm:$0xff]
        %v1042 = vld [vmem:[#allocation3 + $0x130] sm:$0xff]
        %v1043 = vld [vmem:[#allocation3 + $0x150] sm:$0xff]
        %v1044 = vld [vmem:[#allocation3 + $0x170] sm:$0xff]
        %v1045 = vld [vmem:[#allocation3 + $0x190] sm:$0xff]
        %v1046 = vld [vmem:[#allocation3 + $0x1b0] sm:$0xff]
        %v1047 = vld [vmem:[#allocation3 + $0x1d0] sm:$0xff]
        %v1048 = vld [vmem:[#allocation3 + $0x1f0] sm:$0xff]
        %v1065 = vunpack.c.l.b16 %v1033
        %v1066 = vunpack.c.h.b16 %v1033
        %v1067 = vunpack.c.l.b16 %v1034
        %v1068 = vunpack.c.h.b16 %v1034
        %v1069 = vunpack.c.l.b16 %v1035
        %v1070 = vunpack.c.h.b16 %v1035
        %v1071 = vunpack.c.l.b16 %v1036
        %v1072 = vunpack.c.h.b16 %v1036
        %v1073 = vunpack.c.l.b16 %v1037
        %v1074 = vunpack.c.h.b16 %v1037
        %v1075 = vunpack.c.l.b16 %v1038
        %v1076 = vunpack.c.h.b16 %v1038
        %v1077 = vunpack.c.l.b16 %v1039
        %v1078 = vunpack.c.h.b16 %v1039
        %v1079 = vunpack.c.l.b16 %v1040
        %v1080 = vunpack.c.h.b16 %v1040
        %v1081 = vunpack.c.l.b16 %v1041
        %v1082 = vunpack.c.h.b16 %v1041
        %v1083 = vunpack.c.l.b16 %v1042
        %v1084 = vunpack.c.h.b16 %v1042
        %v1085 = vunpack.c.l.b16 %v1043
        %v1086 = vunpack.c.h.b16 %v1043
        %v1087 = vunpack.c.l.b16 %v1044
        %v1088 = vunpack.c.h.b16 %v1044
        %v1089 = vunpack.c.l.b16 %v1045
        %v1090 = vunpack.c.h.b16 %v1045
        %v1091 = vunpack.c.l.b16 %v1046
        %v1092 = vunpack.c.h.b16 %v1046
        %v1093 = vunpack.c.l.b16 %v1047
        %v1094 = vunpack.c.h.b16 %v1047
        %v1095 = vunpack.c.l.b16 %v1048
        %v1096 = vunpack.c.h.b16 %v1048
        %v1097 = vpack.c.b16 %v1067, %v1065
        %v1098 = vpack.c.b16 %v1068, %v1066
        %v1099 = vpack.c.b16 %v1071, %v1069
        %v1100 = vpack.c.b16 %v1072, %v1070
        %v1101 = vpack.c.b16 %v1075, %v1073
        %v1102 = vpack.c.b16 %v1076, %v1074
        %v1103 = vpack.c.b16 %v1079, %v1077
        %v1104 = vpack.c.b16 %v1080, %v1078
        %v1105 = vpack.c.b16 %v1083, %v1081
        %v1106 = vpack.c.b16 %v1084, %v1082
        %v1107 = vpack.c.b16 %v1087, %v1085
        %v1108 = vpack.c.b16 %v1088, %v1086
        %v1109 = vpack.c.b16 %v1091, %v1089
        %v1110 = vpack.c.b16 %v1092, %v1090
        %v1111 = vpack.c.b16 %v1095, %v1093
        %v1112 = vpack.c.b16 %v1096, %v1094
        %1129 = vmatprep.subr.bf16.mxu0 %v1098
        %1130 = vmatpush1.bf16.msra.mxu0 %v1097
        %1131 = vmatprep.subr.bf16.mxu0 %v1100
        %1132 = vmatpush1.bf16.msra.mxu0 %v1099
        %1133 = vmatprep.subr.bf16.mxu0 %v1102
        %1134 = vmatpush1.bf16.msra.mxu0 %v1101
        %1135 = vmatprep.subr.bf16.mxu0 %v1104
        %1136 = vmatpush1.bf16.msra.mxu0 %v1103
        %1137 = vmatprep.subr.bf16.mxu0 %v1106
        %1138 = vmatpush1.bf16.msra.mxu0 %v1105
        %1139 = vmatprep.subr.bf16.mxu0 %v1108
        %1140 = vmatpush1.bf16.msra.mxu0 %v1107
        %1141 = vmatprep.subr.bf16.mxu0 %v1110
        %1142 = vmatpush1.bf16.msra.mxu0 %v1109
        %1143 = vmatprep.subr.bf16.mxu0 %v1112
        %1144 = vmatpush1.bf16.msra.mxu0 %v1111
        %1145 = vmatprep.subr.bf16.mxu0 0
        %1146 = vmatpush1.bf16.msra.mxu0 0
        %1147 = vmatprep.subr.bf16.mxu0 0
        %1148 = vmatpush1.bf16.msra.mxu0 0
        %1149 = vmatprep.subr.bf16.mxu0 0
        %1150 = vmatpush1.bf16.msra.mxu0 0
        %1151 = vmatprep.subr.bf16.mxu0 0
        %1152 = vmatpush1.bf16.msra.mxu0 0
        %1153 = vmatprep.subr.bf16.mxu0 0
        %1154 = vmatpush1.bf16.msra.mxu0 0
        %1155 = vmatprep.subr.bf16.mxu0 0
        %1156 = vmatpush1.bf16.msra.mxu0 0
        %1157 = vmatprep.subr.bf16.mxu0 0
        %1158 = vmatpush1.bf16.msra.mxu0 0
        %1159 = vmatprep.subr.bf16.mxu0 0
        %1160 = vmatpush1.bf16.msra.mxu0 0
        %1161 = vmatprep.mubr.bf16.mxu0 0
        %1162 = vmatmul.mubr.bf16.gmra.mrb[0].mxu0 %v680
        %v1163 = vpop.f32.mrb[0].mxu0
        %v1164 = vadd.f32 0.0, %v1163
        %v1165 = vpop.f32.mrb[0].mxu0
        %v1166 = vadd.f32 0.0, %v1165
        %v1167 = vpop.f32.mrb[0].mxu0
        %v1168 = vadd.f32 0.0, %v1167
        %v1169 = vpop.f32.mrb[0].mxu0
        %v1170 = vadd.f32 0.0, %v1169
        %1171 = vdwg.mxu0
        %v1172 = vmax.f32 %v1164, %v1168
        %v1173 = vrot.slane %v1172, 4
        %v1174 = vmax.f32 %v1172, %v1173
        %v1175 = vrot.slane %v1174, 2
        %v1176 = vmax.f32 %v1174, %v1175
        %v1177 = vrot.slane %v1176, 1
        %v1178 = vmax.f32 %v1176, %v1177
        %v1179 = vmax.f32 %v1166, %v1170
        %v1180 = vrot.slane %v1179, 4
        %v1181 = vmax.f32 %v1179, %v1180
        %v1182 = vrot.slane %v1181, 2
        %v1183 = vmax.f32 %v1181, %v1182
        %v1184 = vrot.slane %v1183, 1
        %v1185 = vmax.f32 %v1183, %v1184
        %v1186 = vld [vmem:[#allocation2 + $0x4] sm:$0x3]
        %v1189 = vcombine.low %v1178, %v1185
        %v1191 = vunpack.c.l.s4 1966171168
        %v1192 = vunpack.c.0.s8 %v1191
        %v1193 = vlaneseq
        %v1194 = vshrl.u32 %v1193, 7
        %v1195 = vsub.s32 %v1192, %v1194
        %v1196 = vrot.slane %v1189, %v1195
        %v1198 = vunpack.c.l.s4 1966171168
        %v1199 = vunpack.c.0.s8 %v1198
        %v1200 = vlaneseq
        %v1201 = vshrl.u32 %v1200, 7
        %v1202 = vsub.s32 %v1199, %v1201
        %v1203 = vrot.slane %v1196, %v1202
        %v1205 = vmax.f32 %v1186, %v1203
        %1206 = vst.msk [vmem:[#allocation2 + $0x4] sm:$0x3] %vm857, %v1205
        %v1207 = vld [vmem:[#allocation3 + $0x18] sm:$0xff]
        %v1208 = vld [vmem:[#allocation3 + $0x38] sm:$0xff]
        %v1209 = vld [vmem:[#allocation3 + $0x58] sm:$0xff]
        %v1210 = vld [vmem:[#allocation3 + $0x78] sm:$0xff]
        %v1211 = vld [vmem:[#allocation3 + $0x98] sm:$0xff]
        %v1212 = vld [vmem:[#allocation3 + $0xb8] sm:$0xff]
        %v1213 = vld [vmem:[#allocation3 + $0xd8] sm:$0xff]
        %v1214 = vld [vmem:[#allocation3 + $0xf8] sm:$0xff]
        %v1215 = vld [vmem:[#allocation3 + $0x118] sm:$0xff]
        %v1216 = vld [vmem:[#allocation3 + $0x138] sm:$0xff]
        %v1217 = vld [vmem:[#allocation3 + $0x158] sm:$0xff]
        %v1218 = vld [vmem:[#allocation3 + $0x178] sm:$0xff]
        %v1219 = vld [vmem:[#allocation3 + $0x198] sm:$0xff]
        %v1220 = vld [vmem:[#allocation3 + $0x1b8] sm:$0xff]
        %v1221 = vld [vmem:[#allocation3 + $0x1d8] sm:$0xff]
        %v1222 = vld [vmem:[#allocation3 + $0x1f8] sm:$0xff]
        %v1239 = vunpack.c.l.b16 %v1207
        %v1240 = vunpack.c.h.b16 %v1207
        %v1241 = vunpack.c.l.b16 %v1208
        %v1242 = vunpack.c.h.b16 %v1208
        %v1243 = vunpack.c.l.b16 %v1209
        %v1244 = vunpack.c.h.b16 %v1209
        %v1245 = vunpack.c.l.b16 %v1210
        %v1246 = vunpack.c.h.b16 %v1210
        %v1247 = vunpack.c.l.b16 %v1211
        %v1248 = vunpack.c.h.b16 %v1211
        %v1249 = vunpack.c.l.b16 %v1212
        %v1250 = vunpack.c.h.b16 %v1212
        %v1251 = vunpack.c.l.b16 %v1213
        %v1252 = vunpack.c.h.b16 %v1213
        %v1253 = vunpack.c.l.b16 %v1214
        %v1254 = vunpack.c.h.b16 %v1214
        %v1255 = vunpack.c.l.b16 %v1215
        %v1256 = vunpack.c.h.b16 %v1215
        %v1257 = vunpack.c.l.b16 %v1216
        %v1258 = vunpack.c.h.b16 %v1216
        %v1259 = vunpack.c.l.b16 %v1217
        %v1260 = vunpack.c.h.b16 %v1217
        %v1261 = vunpack.c.l.b16 %v1218
        %v1262 = vunpack.c.h.b16 %v1218
        %v1263 = vunpack.c.l.b16 %v1219
        %v1264 = vunpack.c.h.b16 %v1219
        %v1265 = vunpack.c.l.b16 %v1220
        %v1266 = vunpack.c.h.b16 %v1220
        %v1267 = vunpack.c.l.b16 %v1221
        %v1268 = vunpack.c.h.b16 %v1221
        %v1269 = vunpack.c.l.b16 %v1222
        %v1270 = vunpack.c.h.b16 %v1222
        %v1271 = vpack.c.b16 %v1241, %v1239
        %v1272 = vpack.c.b16 %v1242, %v1240
        %v1273 = vpack.c.b16 %v1245, %v1243
        %v1274 = vpack.c.b16 %v1246, %v1244
        %v1275 = vpack.c.b16 %v1249, %v1247
        %v1276 = vpack.c.b16 %v1250, %v1248
        %v1277 = vpack.c.b16 %v1253, %v1251
        %v1278 = vpack.c.b16 %v1254, %v1252
        %v1279 = vpack.c.b16 %v1257, %v1255
        %v1280 = vpack.c.b16 %v1258, %v1256
        %v1281 = vpack.c.b16 %v1261, %v1259
        %v1282 = vpack.c.b16 %v1262, %v1260
        %v1283 = vpack.c.b16 %v1265, %v1263
        %v1284 = vpack.c.b16 %v1266, %v1264
        %v1285 = vpack.c.b16 %v1269, %v1267
        %v1286 = vpack.c.b16 %v1270, %v1268
        %1303 = vmatprep.subr.bf16.mxu0 %v1272
        %1304 = vmatpush1.bf16.msra.mxu0 %v1271
        %1305 = vmatprep.subr.bf16.mxu0 %v1274
        %1306 = vmatpush1.bf16.msra.mxu0 %v1273
        %1307 = vmatprep.subr.bf16.mxu0 %v1276
        %1308 = vmatpush1.bf16.msra.mxu0 %v1275
        %1309 = vmatprep.subr.bf16.mxu0 %v1278
        %1310 = vmatpush1.bf16.msra.mxu0 %v1277
        %1311 = vmatprep.subr.bf16.mxu0 %v1280
        %1312 = vmatpush1.bf16.msra.mxu0 %v1279
        %1313 = vmatprep.subr.bf16.mxu0 %v1282
        %1314 = vmatpush1.bf16.msra.mxu0 %v1281
        %1315 = vmatprep.subr.bf16.mxu0 %v1284
        %1316 = vmatpush1.bf16.msra.mxu0 %v1283
        %1317 = vmatprep.subr.bf16.mxu0 %v1286
        %1318 = vmatpush1.bf16.msra.mxu0 %v1285
        %1319 = vmatprep.subr.bf16.mxu0 0
        %1320 = vmatpush1.bf16.msra.mxu0 0
        %1321 = vmatprep.subr.bf16.mxu0 0
        %1322 = vmatpush1.bf16.msra.mxu0 0
        %1323 = vmatprep.subr.bf16.mxu0 0
        %1324 = vmatpush1.bf16.msra.mxu0 0
        %1325 = vmatprep.subr.bf16.mxu0 0
        %1326 = vmatpush1.bf16.msra.mxu0 0
        %1327 = vmatprep.subr.bf16.mxu0 0
        %1328 = vmatpush1.bf16.msra.mxu0 0
        %1329 = vmatprep.subr.bf16.mxu0 0
        %1330 = vmatpush1.bf16.msra.mxu0 0
        %1331 = vmatprep.subr.bf16.mxu0 0
        %1332 = vmatpush1.bf16.msra.mxu0 0
        %1333 = vmatprep.subr.bf16.mxu0 0
        %1334 = vmatpush1.bf16.msra.mxu0 0
        %1335 = vmatprep.mubr.bf16.mxu0 0
        %1336 = vmatmul.mubr.bf16.gmra.mrb[0].mxu0 %v680
        %v1337 = vpop.f32.mrb[0].mxu0
        %v1338 = vadd.f32 0.0, %v1337
        %v1339 = vpop.f32.mrb[0].mxu0
        %v1340 = vadd.f32 0.0, %v1339
        %v1341 = vpop.f32.mrb[0].mxu0
        %v1342 = vadd.f32 0.0, %v1341
        %v1343 = vpop.f32.mrb[0].mxu0
        %v1344 = vadd.f32 0.0, %v1343
        %1345 = vdwg.mxu0
        %v1346 = vmax.f32 %v1338, %v1342
        %v1347 = vrot.slane %v1346, 4
        %v1348 = vmax.f32 %v1346, %v1347
        %v1349 = vrot.slane %v1348, 2
        %v1350 = vmax.f32 %v1348, %v1349
        %v1351 = vrot.slane %v1350, 1
        %v1352 = vmax.f32 %v1350, %v1351
        %v1353 = vmax.f32 %v1340, %v1344
        %v1354 = vrot.slane %v1353, 4
        %v1355 = vmax.f32 %v1353, %v1354
        %v1356 = vrot.slane %v1355, 2
        %v1357 = vmax.f32 %v1355, %v1356
        %v1358 = vrot.slane %v1357, 1
        %v1359 = vmax.f32 %v1357, %v1358
        %v1360 = vld [vmem:[#allocation2 + $0x6] sm:$0x3]
        %v1363 = vcombine.low %v1352, %v1359
        %v1365 = vunpack.c.l.s4 1966171168
        %v1366 = vunpack.c.0.s8 %v1365
        %v1367 = vlaneseq
        %v1368 = vshrl.u32 %v1367, 7
        %v1369 = vsub.s32 %v1366, %v1368
        %v1370 = vrot.slane %v1363, %v1369
        %v1372 = vunpack.c.l.s4 1966171168
        %v1373 = vunpack.c.0.s8 %v1372
        %v1374 = vlaneseq
        %v1375 = vshrl.u32 %v1374, 7
        %v1376 = vsub.s32 %v1373, %v1375
        %v1377 = vrot.slane %v1370, %v1376
        %v1379 = vmax.f32 %v1360, %v1377
        %1380 = vst.msk [vmem:[#allocation2 + $0x6] sm:$0x3] %vm857, %v1379
        // Predicated region
        $region93: #{tpu_custom_call.1} parent=71 // pred_check
          %p1381 = pneg %p526
        $region94: #{tpu_custom_call.1} parent=71 // pred_check_branch
          %1383 = sbr.rel (%p1381) target = $region96
        $region95: #{tpu_custom_call.1} parent=71 // pred_region
          %v1384 = vld [vmem:[#allocation2] sm:$0xff]
          %v1385 = vld [vmem:[%s6] sm:$0xff]
          %v1386 = vadd.f32 %v1384, %v1385
          %v1387 = vmax.f32 %v1386, 0.0
          %v1389 = vlaneseq
          %v1390 = vshrl.u32 %v1389, 7
          %v1391 = vsub.s32 0, %v1390
          %v1392 = vrot.slane %v1387, %v1391
          %v1393 = vlaneseq
          %v1394 = vshrl.u32 %v1393, 7
          %v1395 = vsub.s32 1, %v1394
          %v1396 = vrot.slane %v1387, %v1395
          %v1397 = vlaneseq
          %v1398 = vshrl.u32 %v1397, 7
          %v1399 = vsub.s32 2, %v1398
          %v1400 = vrot.slane %v1387, %v1399
          %v1401 = vlaneseq
          %v1402 = vshrl.u32 %v1401, 7
          %v1403 = vsub.s32 3, %v1402
          %v1404 = vrot.slane %v1387, %v1403
          %v1405 = vlaneseq
          %v1406 = vshrl.u32 %v1405, 7
          %v1407 = vsub.s32 4, %v1406
          %v1408 = vrot.slane %v1387, %v1407
          %v1409 = vlaneseq
          %v1410 = vshrl.u32 %v1409, 7
          %v1411 = vsub.s32 5, %v1410
          %v1412 = vrot.slane %v1387, %v1411
          %v1413 = vlaneseq
          %v1414 = vshrl.u32 %v1413, 7
          %v1415 = vsub.s32 6, %v1414
          %v1416 = vrot.slane %v1387, %v1415
          %v1417 = vlaneseq
          %v1418 = vshrl.u32 %v1417, 7
          %v1419 = vsub.s32 7, %v1418
          %v1420 = vrot.slane %v1387, %v1419
          %v1429 = vpack.c.bf16 %v1392, %v1392
          %v1430 = vpack.c.bf16 %v1396, %v1396
          %v1431 = vpack.c.bf16 %v1400, %v1400
          %v1432 = vpack.c.bf16 %v1404, %v1404
          %v1433 = vpack.c.bf16 %v1408, %v1408
          %v1434 = vpack.c.bf16 %v1412, %v1412
          %v1435 = vpack.c.bf16 %v1416, %v1416
          %v1436 = vpack.c.bf16 %v1420, %v1420
          %v1437 = vld [vmem:[#allocation6] sm:$0xff]
          %v1438 = vld [vmem:[#allocation6 + $0x8] sm:$0xff]
          %v1439 = vld [vmem:[#allocation6 + $0x10] sm:$0xff]
          %v1440 = vld [vmem:[#allocation6 + $0x18] sm:$0xff]
          %v1441 = vld [vmem:[#allocation6 + $0x20] sm:$0xff]
          %v1442 = vld [vmem:[#allocation6 + $0x28] sm:$0xff]
          %v1443 = vld [vmem:[#allocation6 + $0x30] sm:$0xff]
          %v1444 = vld [vmem:[#allocation6 + $0x38] sm:$0xff]
          %v1445 = vld [vmem:[#allocation6 + $0x40] sm:$0xff]
          %v1446 = vld [vmem:[#allocation6 + $0x48] sm:$0xff]
          %v1447 = vld [vmem:[#allocation6 + $0x50] sm:$0xff]
          %v1448 = vld [vmem:[#allocation6 + $0x58] sm:$0xff]
          %v1449 = vld [vmem:[#allocation6 + $0x60] sm:$0xff]
          %v1450 = vld [vmem:[#allocation6 + $0x68] sm:$0xff]
          %v1451 = vld [vmem:[#allocation6 + $0x70] sm:$0xff]
          %v1452 = vld [vmem:[#allocation6 + $0x78] sm:$0xff]
          %v1453 = vld [vmem:[#allocation6 + $0x80] sm:$0xff]
          %v1454 = vld [vmem:[#allocation6 + $0x88] sm:$0xff]
          %v1455 = vld [vmem:[#allocation6 + $0x90] sm:$0xff]
          %v1456 = vld [vmem:[#allocation6 + $0x98] sm:$0xff]
          %v1457 = vld [vmem:[#allocation6 + $0xa0] sm:$0xff]
          %v1458 = vld [vmem:[#allocation6 + $0xa8] sm:$0xff]
          %v1459 = vld [vmem:[#allocation6 + $0xb0] sm:$0xff]
          %v1460 = vld [vmem:[#allocation6 + $0xb8] sm:$0xff]
          %v1461 = vld [vmem:[#allocation6 + $0xc0] sm:$0xff]
          %v1462 = vld [vmem:[#allocation6 + $0xc8] sm:$0xff]
          %v1463 = vld [vmem:[#allocation6 + $0xd0] sm:$0xff]
          %v1464 = vld [vmem:[#allocation6 + $0xd8] sm:$0xff]
          %v1465 = vld [vmem:[#allocation6 + $0xe0] sm:$0xff]
          %v1466 = vld [vmem:[#allocation6 + $0xe8] sm:$0xff]
          %v1467 = vld [vmem:[#allocation6 + $0xf0] sm:$0xff]
          %v1468 = vld [vmem:[#allocation6 + $0xf8] sm:$0xff]
          %v1469 = vld [vmem:[#allocation6 + $0x100] sm:$0xff]
          %v1470 = vld [vmem:[#allocation6 + $0x108] sm:$0xff]
          %v1471 = vld [vmem:[#allocation6 + $0x110] sm:$0xff]
          %v1472 = vld [vmem:[#allocation6 + $0x118] sm:$0xff]
          %v1473 = vld [vmem:[#allocation6 + $0x120] sm:$0xff]
          %v1474 = vld [vmem:[#allocation6 + $0x128] sm:$0xff]
          %v1475 = vld [vmem:[#allocation6 + $0x130] sm:$0xff]
          %v1476 = vld [vmem:[#allocation6 + $0x138] sm:$0xff]
          %v1477 = vld [vmem:[#allocation6 + $0x140] sm:$0xff]
          %v1478 = vld [vmem:[#allocation6 + $0x148] sm:$0xff]
          %v1479 = vld [vmem:[#allocation6 + $0x150] sm:$0xff]
          %v1480 = vld [vmem:[#allocation6 + $0x158] sm:$0xff]
          %v1481 = vld [vmem:[#allocation6 + $0x160] sm:$0xff]
          %v1482 = vld [vmem:[#allocation6 + $0x168] sm:$0xff]
          %v1483 = vld [vmem:[#allocation6 + $0x170] sm:$0xff]
          %v1484 = vld [vmem:[#allocation6 + $0x178] sm:$0xff]
          %v1485 = vld [vmem:[#allocation6 + $0x180] sm:$0xff]
          %v1486 = vld [vmem:[#allocation6 + $0x188] sm:$0xff]
          %v1487 = vld [vmem:[#allocation6 + $0x190] sm:$0xff]
          %v1488 = vld [vmem:[#allocation6 + $0x198] sm:$0xff]
          %v1489 = vld [vmem:[#allocation6 + $0x1a0] sm:$0xff]
          %v1490 = vld [vmem:[#allocation6 + $0x1a8] sm:$0xff]
          %v1491 = vld [vmem:[#allocation6 + $0x1b0] sm:$0xff]
          %v1492 = vld [vmem:[#allocation6 + $0x1b8] sm:$0xff]
          %v1493 = vld [vmem:[#allocation6 + $0x1c0] sm:$0xff]
          %v1494 = vld [vmem:[#allocation6 + $0x1c8] sm:$0xff]
          %v1495 = vld [vmem:[#allocation6 + $0x1d0] sm:$0xff]
          %v1496 = vld [vmem:[#allocation6 + $0x1d8] sm:$0xff]
          %v1497 = vld [vmem:[#allocation6 + $0x1e0] sm:$0xff]
          %v1498 = vld [vmem:[#allocation6 + $0x1e8] sm:$0xff]
          %v1499 = vld [vmem:[#allocation6 + $0x1f0] sm:$0xff]
          %v1500 = vld [vmem:[#allocation6 + $0x1f8] sm:$0xff]
          %v1501 = vld [vmem:[#allocation6 + $0x200] sm:$0xff]
          %v1502 = vld [vmem:[#allocation6 + $0x208] sm:$0xff]
          %v1503 = vld [vmem:[#allocation6 + $0x210] sm:$0xff]
          %v1504 = vld [vmem:[#allocation6 + $0x218] sm:$0xff]
          %v1505 = vld [vmem:[#allocation6 + $0x220] sm:$0xff]
          %v1506 = vld [vmem:[#allocation6 + $0x228] sm:$0xff]
          %v1507 = vld [vmem:[#allocation6 + $0x230] sm:$0xff]
          %v1508 = vld [vmem:[#allocation6 + $0x238] sm:$0xff]
          %v1509 = vld [vmem:[#allocation6 + $0x240] sm:$0xff]
          %v1510 = vld [vmem:[#allocation6 + $0x248] sm:$0xff]
          %v1511 = vld [vmem:[#allocation6 + $0x250] sm:$0xff]
          %v1512 = vld [vmem:[#allocation6 + $0x258] sm:$0xff]
          %v1513 = vld [vmem:[#allocation6 + $0x260] sm:$0xff]
          %v1514 = vld [vmem:[#allocation6 + $0x268] sm:$0xff]
          %v1515 = vld [vmem:[#allocation6 + $0x270] sm:$0xff]
          %v1516 = vld [vmem:[#allocation6 + $0x278] sm:$0xff]
          %v1517 = vld [vmem:[#allocation6 + $0x280] sm:$0xff]
          %v1518 = vld [vmem:[#allocation6 + $0x288] sm:$0xff]
          %v1519 = vld [vmem:[#allocation6 + $0x290] sm:$0xff]
          %v1520 = vld [vmem:[#allocation6 + $0x298] sm:$0xff]
          %v1521 = vld [vmem:[#allocation6 + $0x2a0] sm:$0xff]
          %v1522 = vld [vmem:[#allocation6 + $0x2a8] sm:$0xff]
          %v1523 = vld [vmem:[#allocation6 + $0x2b0] sm:$0xff]
          %v1524 = vld [vmem:[#allocation6 + $0x2b8] sm:$0xff]
          %v1525 = vld [vmem:[#allocation6 + $0x2c0] sm:$0xff]
          %v1526 = vld [vmem:[#allocation6 + $0x2c8] sm:$0xff]
          %v1527 = vld [vmem:[#allocation6 + $0x2d0] sm:$0xff]
          %v1528 = vld [vmem:[#allocation6 + $0x2d8] sm:$0xff]
          %v1529 = vld [vmem:[#allocation6 + $0x2e0] sm:$0xff]
          %v1530 = vld [vmem:[#allocation6 + $0x2e8] sm:$0xff]
          %v1531 = vld [vmem:[#allocation6 + $0x2f0] sm:$0xff]
          %v1532 = vld [vmem:[#allocation6 + $0x2f8] sm:$0xff]
          %v1533 = vld [vmem:[#allocation6 + $0x300] sm:$0xff]
          %v1534 = vld [vmem:[#allocation6 + $0x308] sm:$0xff]
          %v1535 = vld [vmem:[#allocation6 + $0x310] sm:$0xff]
          %v1536 = vld [vmem:[#allocation6 + $0x318] sm:$0xff]
          %v1537 = vld [vmem:[#allocation6 + $0x320] sm:$0xff]
          %v1538 = vld [vmem:[#allocation6 + $0x328] sm:$0xff]
          %v1539 = vld [vmem:[#allocation6 + $0x330] sm:$0xff]
          %v1540 = vld [vmem:[#allocation6 + $0x338] sm:$0xff]
          %v1541 = vld [vmem:[#allocation6 + $0x340] sm:$0xff]
          %v1542 = vld [vmem:[#allocation6 + $0x348] sm:$0xff]
          %v1543 = vld [vmem:[#allocation6 + $0x350] sm:$0xff]
          %v1544 = vld [vmem:[#allocation6 + $0x358] sm:$0xff]
          %v1545 = vld [vmem:[#allocation6 + $0x360] sm:$0xff]
          %v1546 = vld [vmem:[#allocation6 + $0x368] sm:$0xff]
          %v1547 = vld [vmem:[#allocation6 + $0x370] sm:$0xff]
          %v1548 = vld [vmem:[#allocation6 + $0x378] sm:$0xff]
          %v1549 = vld [vmem:[#allocation6 + $0x380] sm:$0xff]
          %v1550 = vld [vmem:[#allocation6 + $0x388] sm:$0xff]
          %v1551 = vld [vmem:[#allocation6 + $0x390] sm:$0xff]
          %v1552 = vld [vmem:[#allocation6 + $0x398] sm:$0xff]
          %v1553 = vld [vmem:[#allocation6 + $0x3a0] sm:$0xff]
          %v1554 = vld [vmem:[#allocation6 + $0x3a8] sm:$0xff]
          %v1555 = vld [vmem:[#allocation6 + $0x3b0] sm:$0xff]
          %v1556 = vld [vmem:[#allocation6 + $0x3b8] sm:$0xff]
          %v1557 = vld [vmem:[#allocation6 + $0x3c0] sm:$0xff]
          %v1558 = vld [vmem:[#allocation6 + $0x3c8] sm:$0xff]
          %v1559 = vld [vmem:[#allocation6 + $0x3d0] sm:$0xff]
          %v1560 = vld [vmem:[#allocation6 + $0x3d8] sm:$0xff]
          %v1561 = vld [vmem:[#allocation6 + $0x3e0] sm:$0xff]
          %v1562 = vld [vmem:[#allocation6 + $0x3e8] sm:$0xff]
          %v1563 = vld [vmem:[#allocation6 + $0x3f0] sm:$0xff]
          %v1564 = vld [vmem:[#allocation6 + $0x3f8] sm:$0xff]
          %v1565 = vld [vmem:[#allocation6 + $0x400] sm:$0xff]
          %v1566 = vld [vmem:[#allocation6 + $0x408] sm:$0xff]
          %v1567 = vld [vmem:[#allocation6 + $0x410] sm:$0xff]
          %v1568 = vld [vmem:[#allocation6 + $0x418] sm:$0xff]
          %v1569 = vld [vmem:[#allocation6 + $0x420] sm:$0xff]
          %v1570 = vld [vmem:[#allocation6 + $0x428] sm:$0xff]
          %v1571 = vld [vmem:[#allocation6 + $0x430] sm:$0xff]
          %v1572 = vld [vmem:[#allocation6 + $0x438] sm:$0xff]
          %v1573 = vld [vmem:[#allocation6 + $0x440] sm:$0xff]
          %v1574 = vld [vmem:[#allocation6 + $0x448] sm:$0xff]
          %v1575 = vld [vmem:[#allocation6 + $0x450] sm:$0xff]
          %v1576 = vld [vmem:[#allocation6 + $0x458] sm:$0xff]
          %v1577 = vld [vmem:[#allocation6 + $0x460] sm:$0xff]
          %v1578 = vld [vmem:[#allocation6 + $0x468] sm:$0xff]
          %v1579 = vld [vmem:[#allocation6 + $0x470] sm:$0xff]
          %v1580 = vld [vmem:[#allocation6 + $0x478] sm:$0xff]
          %v1581 = vld [vmem:[#allocation6 + $0x480] sm:$0xff]
          %v1582 = vld [vmem:[#allocation6 + $0x488] sm:$0xff]
          %v1583 = vld [vmem:[#allocation6 + $0x490] sm:$0xff]
          %v1584 = vld [vmem:[#allocation6 + $0x498] sm:$0xff]
          %v1585 = vld [vmem:[#allocation6 + $0x4a0] sm:$0xff]
          %v1586 = vld [vmem:[#allocation6 + $0x4a8] sm:$0xff]
          %v1587 = vld [vmem:[#allocation6 + $0x4b0] sm:$0xff]
          %v1588 = vld [vmem:[#allocation6 + $0x4b8] sm:$0xff]
          %v1589 = vld [vmem:[#allocation6 + $0x4c0] sm:$0xff]
          %v1590 = vld [vmem:[#allocation6 + $0x4c8] sm:$0xff]
          %v1591 = vld [vmem:[#allocation6 + $0x4d0] sm:$0xff]
          %v1592 = vld [vmem:[#allocation6 + $0x4d8] sm:$0xff]
          %v1593 = vld [vmem:[#allocation6 + $0x4e0] sm:$0xff]
          %v1594 = vld [vmem:[#allocation6 + $0x4e8] sm:$0xff]
          %v1595 = vld [vmem:[#allocation6 + $0x4f0] sm:$0xff]
          %v1596 = vld [vmem:[#allocation6 + $0x4f8] sm:$0xff]
          %v1597 = vld [vmem:[#allocation6 + $0x500] sm:$0xff]
          %v1598 = vld [vmem:[#allocation6 + $0x508] sm:$0xff]
          %v1599 = vld [vmem:[#allocation6 + $0x510] sm:$0xff]
          %v1600 = vld [vmem:[#allocation6 + $0x518] sm:$0xff]
          %v1601 = vld [vmem:[#allocation6 + $0x520] sm:$0xff]
          %v1602 = vld [vmem:[#allocation6 + $0x528] sm:$0xff]
          %v1603 = vld [vmem:[#allocation6 + $0x530] sm:$0xff]
          %v1604 = vld [vmem:[#allocation6 + $0x538] sm:$0xff]
          %v1605 = vld [vmem:[#allocation6 + $0x540] sm:$0xff]
          %v1606 = vld [vmem:[#allocation6 + $0x548] sm:$0xff]
          %v1607 = vld [vmem:[#allocation6 + $0x550] sm:$0xff]
          %v1608 = vld [vmem:[#allocation6 + $0x558] sm:$0xff]
          %v1609 = vld [vmem:[#allocation6 + $0x560] sm:$0xff]
          %v1610 = vld [vmem:[#allocation6 + $0x568] sm:$0xff]
          %v1611 = vld [vmem:[#allocation6 + $0x570] sm:$0xff]
          %v1612 = vld [vmem:[#allocation6 + $0x578] sm:$0xff]
          %v1613 = vld [vmem:[#allocation6 + $0x580] sm:$0xff]
          %v1614 = vld [vmem:[#allocation6 + $0x588] sm:$0xff]
          %v1615 = vld [vmem:[#allocation6 + $0x590] sm:$0xff]
          %v1616 = vld [vmem:[#allocation6 + $0x598] sm:$0xff]
          %v1617 = vld [vmem:[#allocation6 + $0x5a0] sm:$0xff]
          %v1618 = vld [vmem:[#allocation6 + $0x5a8] sm:$0xff]
          %v1619 = vld [vmem:[#allocation6 + $0x5b0] sm:$0xff]
          %v1620 = vld [vmem:[#allocation6 + $0x5b8] sm:$0xff]
          %v1621 = vld [vmem:[#allocation6 + $0x5c0] sm:$0xff]
          %v1622 = vld [vmem:[#allocation6 + $0x5c8] sm:$0xff]
          %v1623 = vld [vmem:[#allocation6 + $0x5d0] sm:$0xff]
          %v1624 = vld [vmem:[#allocation6 + $0x5d8] sm:$0xff]
          %v1625 = vld [vmem:[#allocation6 + $0x5e0] sm:$0xff]
          %v1626 = vld [vmem:[#allocation6 + $0x5e8] sm:$0xff]
          %v1627 = vld [vmem:[#allocation6 + $0x5f0] sm:$0xff]
          %v1628 = vld [vmem:[#allocation6 + $0x5f8] sm:$0xff]
          %v1629 = vld [vmem:[#allocation6 + $0x600] sm:$0xff]
          %v1630 = vld [vmem:[#allocation6 + $0x608] sm:$0xff]
          %v1631 = vld [vmem:[#allocation6 + $0x610] sm:$0xff]
          %v1632 = vld [vmem:[#allocation6 + $0x618] sm:$0xff]
          %v1633 = vld [vmem:[#allocation6 + $0x620] sm:$0xff]
          %v1634 = vld [vmem:[#allocation6 + $0x628] sm:$0xff]
          %v1635 = vld [vmem:[#allocation6 + $0x630] sm:$0xff]
          %v1636 = vld [vmem:[#allocation6 + $0x638] sm:$0xff]
          %v1637 = vld [vmem:[#allocation6 + $0x640] sm:$0xff]
          %v1638 = vld [vmem:[#allocation6 + $0x648] sm:$0xff]
          %v1639 = vld [vmem:[#allocation6 + $0x650] sm:$0xff]
          %v1640 = vld [vmem:[#allocation6 + $0x658] sm:$0xff]
          %v1641 = vld [vmem:[#allocation6 + $0x660] sm:$0xff]
          %v1642 = vld [vmem:[#allocation6 + $0x668] sm:$0xff]
          %v1643 = vld [vmem:[#allocation6 + $0x670] sm:$0xff]
          %v1644 = vld [vmem:[#allocation6 + $0x678] sm:$0xff]
          %v1645 = vld [vmem:[#allocation6 + $0x680] sm:$0xff]
          %v1646 = vld [vmem:[#allocation6 + $0x688] sm:$0xff]
          %v1647 = vld [vmem:[#allocation6 + $0x690] sm:$0xff]
          %v1648 = vld [vmem:[#allocation6 + $0x698] sm:$0xff]
          %v1649 = vld [vmem:[#allocation6 + $0x6a0] sm:$0xff]
          %v1650 = vld [vmem:[#allocation6 + $0x6a8] sm:$0xff]
          %v1651 = vld [vmem:[#allocation6 + $0x6b0] sm:$0xff]
          %v1652 = vld [vmem:[#allocation6 + $0x6b8] sm:$0xff]
          %v1653 = vld [vmem:[#allocation6 + $0x6c0] sm:$0xff]
          %v1654 = vld [vmem:[#allocation6 + $0x6c8] sm:$0xff]
          %v1655 = vld [vmem:[#allocation6 + $0x6d0] sm:$0xff]
          %v1656 = vld [vmem:[#allocation6 + $0x6d8] sm:$0xff]
          %v1657 = vld [vmem:[#allocation6 + $0x6e0] sm:$0xff]
          %v1658 = vld [vmem:[#allocation6 + $0x6e8] sm:$0xff]
          %v1659 = vld [vmem:[#allocation6 + $0x6f0] sm:$0xff]
          %v1660 = vld [vmem:[#allocation6 + $0x6f8] sm:$0xff]
          %v1661 = vld [vmem:[#allocation6 + $0x700] sm:$0xff]
          %v1662 = vld [vmem:[#allocation6 + $0x708] sm:$0xff]
          %v1663 = vld [vmem:[#allocation6 + $0x710] sm:$0xff]
          %v1664 = vld [vmem:[#allocation6 + $0x718] sm:$0xff]
          %v1665 = vld [vmem:[#allocation6 + $0x720] sm:$0xff]
          %v1666 = vld [vmem:[#allocation6 + $0x728] sm:$0xff]
          %v1667 = vld [vmem:[#allocation6 + $0x730] sm:$0xff]
          %v1668 = vld [vmem:[#allocation6 + $0x738] sm:$0xff]
          %v1669 = vld [vmem:[#allocation6 + $0x740] sm:$0xff]
          %v1670 = vld [vmem:[#allocation6 + $0x748] sm:$0xff]
          %v1671 = vld [vmem:[#allocation6 + $0x750] sm:$0xff]
          %v1672 = vld [vmem:[#allocation6 + $0x758] sm:$0xff]
          %v1673 = vld [vmem:[#allocation6 + $0x760] sm:$0xff]
          %v1674 = vld [vmem:[#allocation6 + $0x768] sm:$0xff]
          %v1675 = vld [vmem:[#allocation6 + $0x770] sm:$0xff]
          %v1676 = vld [vmem:[#allocation6 + $0x778] sm:$0xff]
          %v1677 = vld [vmem:[#allocation6 + $0x780] sm:$0xff]
          %v1678 = vld [vmem:[#allocation6 + $0x788] sm:$0xff]
          %v1679 = vld [vmem:[#allocation6 + $0x790] sm:$0xff]
          %v1680 = vld [vmem:[#allocation6 + $0x798] sm:$0xff]
          %v1681 = vld [vmem:[#allocation6 + $0x7a0] sm:$0xff]
          %v1682 = vld [vmem:[#allocation6 + $0x7a8] sm:$0xff]
          %v1683 = vld [vmem:[#allocation6 + $0x7b0] sm:$0xff]
          %v1684 = vld [vmem:[#allocation6 + $0x7b8] sm:$0xff]
          %v1685 = vld [vmem:[#allocation6 + $0x7c0] sm:$0xff]
          %v1686 = vld [vmem:[#allocation6 + $0x7c8] sm:$0xff]
          %v1687 = vld [vmem:[#allocation6 + $0x7d0] sm:$0xff]
          %v1688 = vld [vmem:[#allocation6 + $0x7d8] sm:$0xff]
          %v1689 = vld [vmem:[#allocation6 + $0x7e0] sm:$0xff]
          %v1690 = vld [vmem:[#allocation6 + $0x7e8] sm:$0xff]
          %v1691 = vld [vmem:[#allocation6 + $0x7f0] sm:$0xff]
          %v1692 = vld [vmem:[#allocation6 + $0x7f8] sm:$0xff]
          %v1693 = vld [vmem:[%s8] sm:$0xf]
          %v1950 = vunpack.c.l.b16 %v1437
          %v1951 = vunpack.c.h.b16 %v1437
          %v1952 = vunpack.c.l.b16 %v1438
          %v1953 = vunpack.c.h.b16 %v1438
          %v1954 = vunpack.c.l.b16 %v1439
          %v1955 = vunpack.c.h.b16 %v1439
          %v1956 = vunpack.c.l.b16 %v1440
          %v1957 = vunpack.c.h.b16 %v1440
          %v1958 = vunpack.c.l.b16 %v1441
          %v1959 = vunpack.c.h.b16 %v1441
          %v1960 = vunpack.c.l.b16 %v1442
          %v1961 = vunpack.c.h.b16 %v1442
          %v1962 = vunpack.c.l.b16 %v1443
          %v1963 = vunpack.c.h.b16 %v1443
          %v1964 = vunpack.c.l.b16 %v1444
          %v1965 = vunpack.c.h.b16 %v1444
          %v1966 = vunpack.c.l.b16 %v1445
          %v1967 = vunpack.c.h.b16 %v1445
          %v1968 = vunpack.c.l.b16 %v1446
          %v1969 = vunpack.c.h.b16 %v1446
          %v1970 = vunpack.c.l.b16 %v1447
          %v1971 = vunpack.c.h.b16 %v1447
          %v1972 = vunpack.c.l.b16 %v1448
          %v1973 = vunpack.c.h.b16 %v1448
          %v1974 = vunpack.c.l.b16 %v1449
          %v1975 = vunpack.c.h.b16 %v1449
          %v1976 = vunpack.c.l.b16 %v1450
          %v1977 = vunpack.c.h.b16 %v1450
          %v1978 = vunpack.c.l.b16 %v1451
          %v1979 = vunpack.c.h.b16 %v1451
          %v1980 = vunpack.c.l.b16 %v1452
          %v1981 = vunpack.c.h.b16 %v1452
          %v1982 = vunpack.c.l.b16 %v1453
          %v1983 = vunpack.c.h.b16 %v1453
          %v1984 = vunpack.c.l.b16 %v1454
          %v1985 = vunpack.c.h.b16 %v1454
          %v1986 = vunpack.c.l.b16 %v1455
          %v1987 = vunpack.c.h.b16 %v1455
          %v1988 = vunpack.c.l.b16 %v1456
          %v1989 = vunpack.c.h.b16 %v1456
          %v1990 = vunpack.c.l.b16 %v1457
          %v1991 = vunpack.c.h.b16 %v1457
          %v1992 = vunpack.c.l.b16 %v1458
          %v1993 = vunpack.c.h.b16 %v1458
          %v1994 = vunpack.c.l.b16 %v1459
          %v1995 = vunpack.c.h.b16 %v1459
          %v1996 = vunpack.c.l.b16 %v1460
          %v1997 = vunpack.c.h.b16 %v1460
          %v1998 = vunpack.c.l.b16 %v1461
          %v1999 = vunpack.c.h.b16 %v1461
          %v2000 = vunpack.c.l.b16 %v1462
          %v2001 = vunpack.c.h.b16 %v1462
          %v2002 = vunpack.c.l.b16 %v1463
          %v2003 = vunpack.c.h.b16 %v1463
          %v2004 = vunpack.c.l.b16 %v1464
          %v2005 = vunpack.c.h.b16 %v1464
          %v2006 = vunpack.c.l.b16 %v1465
          %v2007 = vunpack.c.h.b16 %v1465
          %v2008 = vunpack.c.l.b16 %v1466
          %v2009 = vunpack.c.h.b16 %v1466
          %v2010 = vunpack.c.l.b16 %v1467
          %v2011 = vunpack.c.h.b16 %v1467
          %v2012 = vunpack.c.l.b16 %v1468
          %v2013 = vunpack.c.h.b16 %v1468
          %v2014 = vunpack.c.l.b16 %v1469
          %v2015 = vunpack.c.h.b16 %v1469
          %v2016 = vunpack.c.l.b16 %v1470
          %v2017 = vunpack.c.h.b16 %v1470
          %v2018 = vunpack.c.l.b16 %v1471
          %v2019 = vunpack.c.h.b16 %v1471
          %v2020 = vunpack.c.l.b16 %v1472
          %v2021 = vunpack.c.h.b16 %v1472
          %v2022 = vunpack.c.l.b16 %v1473
          %v2023 = vunpack.c.h.b16 %v1473
          %v2024 = vunpack.c.l.b16 %v1474
          %v2025 = vunpack.c.h.b16 %v1474
          %v2026 = vunpack.c.l.b16 %v1475
          %v2027 = vunpack.c.h.b16 %v1475
          %v2028 = vunpack.c.l.b16 %v1476
          %v2029 = vunpack.c.h.b16 %v1476
          %v2030 = vunpack.c.l.b16 %v1477
          %v2031 = vunpack.c.h.b16 %v1477
          %v2032 = vunpack.c.l.b16 %v1478
          %v2033 = vunpack.c.h.b16 %v1478
          %v2034 = vunpack.c.l.b16 %v1479
          %v2035 = vunpack.c.h.b16 %v1479
          %v2036 = vunpack.c.l.b16 %v1480
          %v2037 = vunpack.c.h.b16 %v1480
          %v2038 = vunpack.c.l.b16 %v1481
          %v2039 = vunpack.c.h.b16 %v1481
          %v2040 = vunpack.c.l.b16 %v1482
          %v2041 = vunpack.c.h.b16 %v1482
          %v2042 = vunpack.c.l.b16 %v1483
          %v2043 = vunpack.c.h.b16 %v1483
          %v2044 = vunpack.c.l.b16 %v1484
          %v2045 = vunpack.c.h.b16 %v1484
          %v2046 = vunpack.c.l.b16 %v1485
          %v2047 = vunpack.c.h.b16 %v1485
          %v2048 = vunpack.c.l.b16 %v1486
          %v2049 = vunpack.c.h.b16 %v1486
          %v2050 = vunpack.c.l.b16 %v1487
          %v2051 = vunpack.c.h.b16 %v1487
          %v2052 = vunpack.c.l.b16 %v1488
          %v2053 = vunpack.c.h.b16 %v1488
          %v2054 = vunpack.c.l.b16 %v1489
          %v2055 = vunpack.c.h.b16 %v1489
          %v2056 = vunpack.c.l.b16 %v1490
          %v2057 = vunpack.c.h.b16 %v1490
          %v2058 = vunpack.c.l.b16 %v1491
          %v2059 = vunpack.c.h.b16 %v1491
          %v2060 = vunpack.c.l.b16 %v1492
          %v2061 = vunpack.c.h.b16 %v1492
          %v2062 = vunpack.c.l.b16 %v1493
          %v2063 = vunpack.c.h.b16 %v1493
          %v2064 = vunpack.c.l.b16 %v1494
          %v2065 = vunpack.c.h.b16 %v1494
          %v2066 = vunpack.c.l.b16 %v1495
          %v2067 = vunpack.c.h.b16 %v1495
          %v2068 = vunpack.c.l.b16 %v1496
          %v2069 = vunpack.c.h.b16 %v1496
          %v2070 = vunpack.c.l.b16 %v1497
          %v2071 = vunpack.c.h.b16 %v1497
          %v2072 = vunpack.c.l.b16 %v1498
          %v2073 = vunpack.c.h.b16 %v1498
          %v2074 = vunpack.c.l.b16 %v1499
          %v2075 = vunpack.c.h.b16 %v1499
          %v2076 = vunpack.c.l.b16 %v1500
          %v2077 = vunpack.c.h.b16 %v1500
          %v2078 = vunpack.c.l.b16 %v1501
          %v2079 = vunpack.c.h.b16 %v1501
          %v2080 = vunpack.c.l.b16 %v1502
          %v2081 = vunpack.c.h.b16 %v1502
          %v2082 = vunpack.c.l.b16 %v1503
          %v2083 = vunpack.c.h.b16 %v1503
          %v2084 = vunpack.c.l.b16 %v1504
          %v2085 = vunpack.c.h.b16 %v1504
          %v2086 = vunpack.c.l.b16 %v1505
          %v2087 = vunpack.c.h.b16 %v1505
          %v2088 = vunpack.c.l.b16 %v1506
          %v2089 = vunpack.c.h.b16 %v1506
          %v2090 = vunpack.c.l.b16 %v1507
          %v2091 = vunpack.c.h.b16 %v1507
          %v2092 = vunpack.c.l.b16 %v1508
          %v2093 = vunpack.c.h.b16 %v1508
          %v2094 = vunpack.c.l.b16 %v1509
          %v2095 = vunpack.c.h.b16 %v1509
          %v2096 = vunpack.c.l.b16 %v1510
          %v2097 = vunpack.c.h.b16 %v1510
          %v2098 = vunpack.c.l.b16 %v1511
          %v2099 = vunpack.c.h.b16 %v1511
          %v2100 = vunpack.c.l.b16 %v1512
          %v2101 = vunpack.c.h.b16 %v1512
          %v2102 = vunpack.c.l.b16 %v1513
          %v2103 = vunpack.c.h.b16 %v1513
          %v2104 = vunpack.c.l.b16 %v1514
          %v2105 = vunpack.c.h.b16 %v1514
          %v2106 = vunpack.c.l.b16 %v1515
          %v2107 = vunpack.c.h.b16 %v1515
          %v2108 = vunpack.c.l.b16 %v1516
          %v2109 = vunpack.c.h.b16 %v1516
          %v2110 = vunpack.c.l.b16 %v1517
          %v2111 = vunpack.c.h.b16 %v1517
          %v2112 = vunpack.c.l.b16 %v1518
          %v2113 = vunpack.c.h.b16 %v1518
          %v2114 = vunpack.c.l.b16 %v1519
          %v2115 = vunpack.c.h.b16 %v1519
          %v2116 = vunpack.c.l.b16 %v1520
          %v2117 = vunpack.c.h.b16 %v1520
          %v2118 = vunpack.c.l.b16 %v1521
          %v2119 = vunpack.c.h.b16 %v1521
          %v2120 = vunpack.c.l.b16 %v1522
          %v2121 = vunpack.c.h.b16 %v1522
          %v2122 = vunpack.c.l.b16 %v1523
          %v2123 = vunpack.c.h.b16 %v1523
          %v2124 = vunpack.c.l.b16 %v1524
          %v2125 = vunpack.c.h.b16 %v1524
          %v2126 = vunpack.c.l.b16 %v1525
          %v2127 = vunpack.c.h.b16 %v1525
          %v2128 = vunpack.c.l.b16 %v1526
          %v2129 = vunpack.c.h.b16 %v1526
          %v2130 = vunpack.c.l.b16 %v1527
          %v2131 = vunpack.c.h.b16 %v1527
          %v2132 = vunpack.c.l.b16 %v1528
          %v2133 = vunpack.c.h.b16 %v1528
          %v2134 = vunpack.c.l.b16 %v1529
          %v2135 = vunpack.c.h.b16 %v1529
          %v2136 = vunpack.c.l.b16 %v1530
          %v2137 = vunpack.c.h.b16 %v1530
          %v2138 = vunpack.c.l.b16 %v1531
          %v2139 = vunpack.c.h.b16 %v1531
          %v2140 = vunpack.c.l.b16 %v1532
          %v2141 = vunpack.c.h.b16 %v1532
          %v2142 = vunpack.c.l.b16 %v1533
          %v2143 = vunpack.c.h.b16 %v1533
          %v2144 = vunpack.c.l.b16 %v1534
          %v2145 = vunpack.c.h.b16 %v1534
          %v2146 = vunpack.c.l.b16 %v1535
          %v2147 = vunpack.c.h.b16 %v1535
          %v2148 = vunpack.c.l.b16 %v1536
          %v2149 = vunpack.c.h.b16 %v1536
          %v2150 = vunpack.c.l.b16 %v1537
          %v2151 = vunpack.c.h.b16 %v1537
          %v2152 = vunpack.c.l.b16 %v1538
          %v2153 = vunpack.c.h.b16 %v1538
          %v2154 = vunpack.c.l.b16 %v1539
          %v2155 = vunpack.c.h.b16 %v1539
          %v2156 = vunpack.c.l.b16 %v1540
          %v2157 = vunpack.c.h.b16 %v1540
          %v2158 = vunpack.c.l.b16 %v1541
          %v2159 = vunpack.c.h.b16 %v1541
          %v2160 = vunpack.c.l.b16 %v1542
          %v2161 = vunpack.c.h.b16 %v1542
          %v2162 = vunpack.c.l.b16 %v1543
          %v2163 = vunpack.c.h.b16 %v1543
          %v2164 = vunpack.c.l.b16 %v1544
          %v2165 = vunpack.c.h.b16 %v1544
          %v2166 = vunpack.c.l.b16 %v1545
          %v2167 = vunpack.c.h.b16 %v1545
          %v2168 = vunpack.c.l.b16 %v1546
          %v2169 = vunpack.c.h.b16 %v1546
          %v2170 = vunpack.c.l.b16 %v1547
          %v2171 = vunpack.c.h.b16 %v1547
          %v2172 = vunpack.c.l.b16 %v1548
          %v2173 = vunpack.c.h.b16 %v1548
          %v2174 = vunpack.c.l.b16 %v1549
          %v2175 = vunpack.c.h.b16 %v1549
          %v2176 = vunpack.c.l.b16 %v1550
          %v2177 = vunpack.c.h.b16 %v1550
          %v2178 = vunpack.c.l.b16 %v1551
          %v2179 = vunpack.c.h.b16 %v1551
          %v2180 = vunpack.c.l.b16 %v1552
          %v2181 = vunpack.c.h.b16 %v1552
          %v2182 = vunpack.c.l.b16 %v1553
          %v2183 = vunpack.c.h.b16 %v1553
          %v2184 = vunpack.c.l.b16 %v1554
          %v2185 = vunpack.c.h.b16 %v1554
          %v2186 = vunpack.c.l.b16 %v1555
          %v2187 = vunpack.c.h.b16 %v1555
          %v2188 = vunpack.c.l.b16 %v1556
          %v2189 = vunpack.c.h.b16 %v1556
          %v2190 = vunpack.c.l.b16 %v1557
          %v2191 = vunpack.c.h.b16 %v1557
          %v2192 = vunpack.c.l.b16 %v1558
          %v2193 = vunpack.c.h.b16 %v1558
          %v2194 = vunpack.c.l.b16 %v1559
          %v2195 = vunpack.c.h.b16 %v1559
          %v2196 = vunpack.c.l.b16 %v1560
          %v2197 = vunpack.c.h.b16 %v1560
          %v2198 = vunpack.c.l.b16 %v1561
          %v2199 = vunpack.c.h.b16 %v1561
          %v2200 = vunpack.c.l.b16 %v1562
          %v2201 = vunpack.c.h.b16 %v1562
          %v2202 = vunpack.c.l.b16 %v1563
          %v2203 = vunpack.c.h.b16 %v1563
          %v2204 = vunpack.c.l.b16 %v1564
          %v2205 = vunpack.c.h.b16 %v1564
          %v2206 = vunpack.c.l.b16 %v1565
          %v2207 = vunpack.c.h.b16 %v1565
          %v2208 = vunpack.c.l.b16 %v1566
          %v2209 = vunpack.c.h.b16 %v1566
          %v2210 = vunpack.c.l.b16 %v1567
          %v2211 = vunpack.c.h.b16 %v1567
          %v2212 = vunpack.c.l.b16 %v1568
          %v2213 = vunpack.c.h.b16 %v1568
          %v2214 = vunpack.c.l.b16 %v1569
          %v2215 = vunpack.c.h.b16 %v1569
          %v2216 = vunpack.c.l.b16 %v1570
          %v2217 = vunpack.c.h.b16 %v1570
          %v2218 = vunpack.c.l.b16 %v1571
          %v2219 = vunpack.c.h.b16 %v1571
          %v2220 = vunpack.c.l.b16 %v1572
          %v2221 = vunpack.c.h.b16 %v1572
          %v2222 = vunpack.c.l.b16 %v1573
          %v2223 = vunpack.c.h.b16 %v1573
          %v2224 = vunpack.c.l.b16 %v1574
          %v2225 = vunpack.c.h.b16 %v1574
          %v2226 = vunpack.c.l.b16 %v1575
          %v2227 = vunpack.c.h.b16 %v1575
          %v2228 = vunpack.c.l.b16 %v1576
          %v2229 = vunpack.c.h.b16 %v1576
          %v2230 = vunpack.c.l.b16 %v1577
          %v2231 = vunpack.c.h.b16 %v1577
          %v2232 = vunpack.c.l.b16 %v1578
          %v2233 = vunpack.c.h.b16 %v1578
          %v2234 = vunpack.c.l.b16 %v1579
          %v2235 = vunpack.c.h.b16 %v1579
          %v2236 = vunpack.c.l.b16 %v1580
          %v2237 = vunpack.c.h.b16 %v1580
          %v2238 = vunpack.c.l.b16 %v1581
          %v2239 = vunpack.c.h.b16 %v1581
          %v2240 = vunpack.c.l.b16 %v1582
          %v2241 = vunpack.c.h.b16 %v1582
          %v2242 = vunpack.c.l.b16 %v1583
          %v2243 = vunpack.c.h.b16 %v1583
          %v2244 = vunpack.c.l.b16 %v1584
          %v2245 = vunpack.c.h.b16 %v1584
          %v2246 = vunpack.c.l.b16 %v1585
          %v2247 = vunpack.c.h.b16 %v1585
          %v2248 = vunpack.c.l.b16 %v1586
          %v2249 = vunpack.c.h.b16 %v1586
          %v2250 = vunpack.c.l.b16 %v1587
          %v2251 = vunpack.c.h.b16 %v1587
          %v2252 = vunpack.c.l.b16 %v1588
          %v2253 = vunpack.c.h.b16 %v1588
          %v2254 = vunpack.c.l.b16 %v1589
          %v2255 = vunpack.c.h.b16 %v1589
          %v2256 = vunpack.c.l.b16 %v1590
          %v2257 = vunpack.c.h.b16 %v1590
          %v2258 = vunpack.c.l.b16 %v1591
          %v2259 = vunpack.c.h.b16 %v1591
          %v2260 = vunpack.c.l.b16 %v1592
          %v2261 = vunpack.c.h.b16 %v1592
          %v2262 = vunpack.c.l.b16 %v1593
          %v2263 = vunpack.c.h.b16 %v1593
          %v2264 = vunpack.c.l.b16 %v1594
          %v2265 = vunpack.c.h.b16 %v1594
          %v2266 = vunpack.c.l.b16 %v1595
          %v2267 = vunpack.c.h.b16 %v1595
          %v2268 = vunpack.c.l.b16 %v1596
          %v2269 = vunpack.c.h.b16 %v1596
          %v2270 = vunpack.c.l.b16 %v1597
          %v2271 = vunpack.c.h.b16 %v1597
          %v2272 = vunpack.c.l.b16 %v1598
          %v2273 = vunpack.c.h.b16 %v1598
          %v2274 = vunpack.c.l.b16 %v1599
          %v2275 = vunpack.c.h.b16 %v1599
          %v2276 = vunpack.c.l.b16 %v1600
          %v2277 = vunpack.c.h.b16 %v1600
          %v2278 = vunpack.c.l.b16 %v1601
          %v2279 = vunpack.c.h.b16 %v1601
          %v2280 = vunpack.c.l.b16 %v1602
          %v2281 = vunpack.c.h.b16 %v1602
          %v2282 = vunpack.c.l.b16 %v1603
          %v2283 = vunpack.c.h.b16 %v1603
          %v2284 = vunpack.c.l.b16 %v1604
          %v2285 = vunpack.c.h.b16 %v1604
          %v2286 = vunpack.c.l.b16 %v1605
          %v2287 = vunpack.c.h.b16 %v1605
          %v2288 = vunpack.c.l.b16 %v1606
          %v2289 = vunpack.c.h.b16 %v1606
          %v2290 = vunpack.c.l.b16 %v1607
          %v2291 = vunpack.c.h.b16 %v1607
          %v2292 = vunpack.c.l.b16 %v1608
          %v2293 = vunpack.c.h.b16 %v1608
          %v2294 = vunpack.c.l.b16 %v1609
          %v2295 = vunpack.c.h.b16 %v1609
          %v2296 = vunpack.c.l.b16 %v1610
          %v2297 = vunpack.c.h.b16 %v1610
          %v2298 = vunpack.c.l.b16 %v1611
          %v2299 = vunpack.c.h.b16 %v1611
          %v2300 = vunpack.c.l.b16 %v1612
          %v2301 = vunpack.c.h.b16 %v1612
          %v2302 = vunpack.c.l.b16 %v1613
          %v2303 = vunpack.c.h.b16 %v1613
          %v2304 = vunpack.c.l.b16 %v1614
          %v2305 = vunpack.c.h.b16 %v1614
          %v2306 = vunpack.c.l.b16 %v1615
          %v2307 = vunpack.c.h.b16 %v1615
          %v2308 = vunpack.c.l.b16 %v1616
          %v2309 = vunpack.c.h.b16 %v1616
          %v2310 = vunpack.c.l.b16 %v1617
          %v2311 = vunpack.c.h.b16 %v1617
          %v2312 = vunpack.c.l.b16 %v1618
          %v2313 = vunpack.c.h.b16 %v1618
          %v2314 = vunpack.c.l.b16 %v1619
          %v2315 = vunpack.c.h.b16 %v1619
          %v2316 = vunpack.c.l.b16 %v1620
          %v2317 = vunpack.c.h.b16 %v1620
          %v2318 = vunpack.c.l.b16 %v1621
          %v2319 = vunpack.c.h.b16 %v1621
          %v2320 = vunpack.c.l.b16 %v1622
          %v2321 = vunpack.c.h.b16 %v1622
          %v2322 = vunpack.c.l.b16 %v1623
          %v2323 = vunpack.c.h.b16 %v1623
          %v2324 = vunpack.c.l.b16 %v1624
          %v2325 = vunpack.c.h.b16 %v1624
          %v2326 = vunpack.c.l.b16 %v1625
          %v2327 = vunpack.c.h.b16 %v1625
          %v2328 = vunpack.c.l.b16 %v1626
          %v2329 = vunpack.c.h.b16 %v1626
          %v2330 = vunpack.c.l.b16 %v1627
          %v2331 = vunpack.c.h.b16 %v1627
          %v2332 = vunpack.c.l.b16 %v1628
          %v2333 = vunpack.c.h.b16 %v1628
          %v2334 = vunpack.c.l.b16 %v1629
          %v2335 = vunpack.c.h.b16 %v1629
          %v2336 = vunpack.c.l.b16 %v1630
          %v2337 = vunpack.c.h.b16 %v1630
          %v2338 = vunpack.c.l.b16 %v1631
          %v2339 = vunpack.c.h.b16 %v1631
          %v2340 = vunpack.c.l.b16 %v1632
          %v2341 = vunpack.c.h.b16 %v1632
          %v2342 = vunpack.c.l.b16 %v1633
          %v2343 = vunpack.c.h.b16 %v1633
          %v2344 = vunpack.c.l.b16 %v1634
          %v2345 = vunpack.c.h.b16 %v1634
          %v2346 = vunpack.c.l.b16 %v1635
          %v2347 = vunpack.c.h.b16 %v1635
          %v2348 = vunpack.c.l.b16 %v1636
          %v2349 = vunpack.c.h.b16 %v1636
          %v2350 = vunpack.c.l.b16 %v1637
          %v2351 = vunpack.c.h.b16 %v1637
          %v2352 = vunpack.c.l.b16 %v1638
          %v2353 = vunpack.c.h.b16 %v1638
          %v2354 = vunpack.c.l.b16 %v1639
          %v2355 = vunpack.c.h.b16 %v1639
          %v2356 = vunpack.c.l.b16 %v1640
          %v2357 = vunpack.c.h.b16 %v1640
          %v2358 = vunpack.c.l.b16 %v1641
          %v2359 = vunpack.c.h.b16 %v1641
          %v2360 = vunpack.c.l.b16 %v1642
          %v2361 = vunpack.c.h.b16 %v1642
          %v2362 = vunpack.c.l.b16 %v1643
          %v2363 = vunpack.c.h.b16 %v1643
          %v2364 = vunpack.c.l.b16 %v1644
          %v2365 = vunpack.c.h.b16 %v1644
          %v2366 = vunpack.c.l.b16 %v1645
          %v2367 = vunpack.c.h.b16 %v1645
          %v2368 = vunpack.c.l.b16 %v1646
          %v2369 = vunpack.c.h.b16 %v1646
          %v2370 = vunpack.c.l.b16 %v1647
          %v2371 = vunpack.c.h.b16 %v1647
          %v2372 = vunpack.c.l.b16 %v1648
          %v2373 = vunpack.c.h.b16 %v1648
          %v2374 = vunpack.c.l.b16 %v1649
          %v2375 = vunpack.c.h.b16 %v1649
          %v2376 = vunpack.c.l.b16 %v1650
          %v2377 = vunpack.c.h.b16 %v1650
          %v2378 = vunpack.c.l.b16 %v1651
          %v2379 = vunpack.c.h.b16 %v1651
          %v2380 = vunpack.c.l.b16 %v1652
          %v2381 = vunpack.c.h.b16 %v1652
          %v2382 = vunpack.c.l.b16 %v1653
          %v2383 = vunpack.c.h.b16 %v1653
          %v2384 = vunpack.c.l.b16 %v1654
          %v2385 = vunpack.c.h.b16 %v1654
          %v2386 = vunpack.c.l.b16 %v1655
          %v2387 = vunpack.c.h.b16 %v1655
          %v2388 = vunpack.c.l.b16 %v1656
          %v2389 = vunpack.c.h.b16 %v1656
          %v2390 = vunpack.c.l.b16 %v1657
          %v2391 = vunpack.c.h.b16 %v1657
          %v2392 = vunpack.c.l.b16 %v1658
          %v2393 = vunpack.c.h.b16 %v1658
          %v2394 = vunpack.c.l.b16 %v1659
          %v2395 = vunpack.c.h.b16 %v1659
          %v2396 = vunpack.c.l.b16 %v1660
          %v2397 = vunpack.c.h.b16 %v1660
          %v2398 = vunpack.c.l.b16 %v1661
          %v2399 = vunpack.c.h.b16 %v1661
          %v2400 = vunpack.c.l.b16 %v1662
          %v2401 = vunpack.c.h.b16 %v1662
          %v2402 = vunpack.c.l.b16 %v1663
          %v2403 = vunpack.c.h.b16 %v1663
          %v2404 = vunpack.c.l.b16 %v1664
          %v2405 = vunpack.c.h.b16 %v1664
          %v2406 = vunpack.c.l.b16 %v1665
          %v2407 = vunpack.c.h.b16 %v1665
          %v2408 = vunpack.c.l.b16 %v1666
          %v2409 = vunpack.c.h.b16 %v1666
          %v2410 = vunpack.c.l.b16 %v1667
          %v2411 = vunpack.c.h.b16 %v1667
          %v2412 = vunpack.c.l.b16 %v1668
          %v2413 = vunpack.c.h.b16 %v1668
          %v2414 = vunpack.c.l.b16 %v1669
          %v2415 = vunpack.c.h.b16 %v1669
          %v2416 = vunpack.c.l.b16 %v1670
          %v2417 = vunpack.c.h.b16 %v1670
          %v2418 = vunpack.c.l.b16 %v1671
          %v2419 = vunpack.c.h.b16 %v1671
          %v2420 = vunpack.c.l.b16 %v1672
          %v2421 = vunpack.c.h.b16 %v1672
          %v2422 = vunpack.c.l.b16 %v1673
          %v2423 = vunpack.c.h.b16 %v1673
          %v2424 = vunpack.c.l.b16 %v1674
          %v2425 = vunpack.c.h.b16 %v1674
          %v2426 = vunpack.c.l.b16 %v1675
          %v2427 = vunpack.c.h.b16 %v1675
          %v2428 = vunpack.c.l.b16 %v1676
          %v2429 = vunpack.c.h.b16 %v1676
          %v2430 = vunpack.c.l.b16 %v1677
          %v2431 = vunpack.c.h.b16 %v1677
          %v2432 = vunpack.c.l.b16 %v1678
          %v2433 = vunpack.c.h.b16 %v1678
          %v2434 = vunpack.c.l.b16 %v1679
          %v2435 = vunpack.c.h.b16 %v1679
          %v2436 = vunpack.c.l.b16 %v1680
          %v2437 = vunpack.c.h.b16 %v1680
          %v2438 = vunpack.c.l.b16 %v1681
          %v2439 = vunpack.c.h.b16 %v1681
          %v2440 = vunpack.c.l.b16 %v1682
          %v2441 = vunpack.c.h.b16 %v1682
          %v2442 = vunpack.c.l.b16 %v1683
          %v2443 = vunpack.c.h.b16 %v1683
          %v2444 = vunpack.c.l.b16 %v1684
          %v2445 = vunpack.c.h.b16 %v1684
          %v2446 = vunpack.c.l.b16 %v1685
          %v2447 = vunpack.c.h.b16 %v1685
          %v2448 = vunpack.c.l.b16 %v1686
          %v2449 = vunpack.c.h.b16 %v1686
          %v2450 = vunpack.c.l.b16 %v1687
          %v2451 = vunpack.c.h.b16 %v1687
          %v2452 = vunpack.c.l.b16 %v1688
          %v2453 = vunpack.c.h.b16 %v1688
          %v2454 = vunpack.c.l.b16 %v1689
          %v2455 = vunpack.c.h.b16 %v1689
          %v2456 = vunpack.c.l.b16 %v1690
          %v2457 = vunpack.c.h.b16 %v1690
          %v2458 = vunpack.c.l.b16 %v1691
          %v2459 = vunpack.c.h.b16 %v1691
          %v2460 = vunpack.c.l.b16 %v1692
          %v2461 = vunpack.c.h.b16 %v1692
          %v2462 = vpack.c.b16 %v1954, %v1950
          %v2463 = vpack.c.b16 %v1955, %v1951
          %v2464 = vpack.c.b16 %v1956, %v1952
          %v2465 = vpack.c.b16 %v1957, %v1953
          %v2466 = vpack.c.b16 %v1962, %v1958
          %v2467 = vpack.c.b16 %v1963, %v1959
          %v2468 = vpack.c.b16 %v1964, %v1960
          %v2469 = vpack.c.b16 %v1965, %v1961
          %v2470 = vpack.c.b16 %v1970, %v1966
          %v2471 = vpack.c.b16 %v1971, %v1967
          %v2472 = vpack.c.b16 %v1972, %v1968
          %v2473 = vpack.c.b16 %v1973, %v1969
          %v2474 = vpack.c.b16 %v1978, %v1974
          %v2475 = vpack.c.b16 %v1979, %v1975
          %v2476 = vpack.c.b16 %v1980, %v1976
          %v2477 = vpack.c.b16 %v1981, %v1977
          %v2478 = vpack.c.b16 %v1986, %v1982
          %v2479 = vpack.c.b16 %v1987, %v1983
          %v2480 = vpack.c.b16 %v1988, %v1984
          %v2481 = vpack.c.b16 %v1989, %v1985
          %v2482 = vpack.c.b16 %v1994, %v1990
          %v2483 = vpack.c.b16 %v1995, %v1991
          %v2484 = vpack.c.b16 %v1996, %v1992
          %v2485 = vpack.c.b16 %v1997, %v1993
          %v2486 = vpack.c.b16 %v2002, %v1998
          %v2487 = vpack.c.b16 %v2003, %v1999
          %v2488 = vpack.c.b16 %v2004, %v2000
          %v2489 = vpack.c.b16 %v2005, %v2001
          %v2490 = vpack.c.b16 %v2010, %v2006
          %v2491 = vpack.c.b16 %v2011, %v2007
          %v2492 = vpack.c.b16 %v2012, %v2008
          %v2493 = vpack.c.b16 %v2013, %v2009
          %v2494 = vpack.c.b16 %v2018, %v2014
          %v2495 = vpack.c.b16 %v2019, %v2015
          %v2496 = vpack.c.b16 %v2020, %v2016
          %v2497 = vpack.c.b16 %v2021, %v2017
          %v2498 = vpack.c.b16 %v2026, %v2022
          %v2499 = vpack.c.b16 %v2027, %v2023
          %v2500 = vpack.c.b16 %v2028, %v2024
          %v2501 = vpack.c.b16 %v2029, %v2025
          %v2502 = vpack.c.b16 %v2034, %v2030
          %v2503 = vpack.c.b16 %v2035, %v2031
          %v2504 = vpack.c.b16 %v2036, %v2032
          %v2505 = vpack.c.b16 %v2037, %v2033
          %v2506 = vpack.c.b16 %v2042, %v2038
          %v2507 = vpack.c.b16 %v2043, %v2039
          %v2508 = vpack.c.b16 %v2044, %v2040
          %v2509 = vpack.c.b16 %v2045, %v2041
          %v2510 = vpack.c.b16 %v2050, %v2046
          %v2511 = vpack.c.b16 %v2051, %v2047
          %v2512 = vpack.c.b16 %v2052, %v2048
          %v2513 = vpack.c.b16 %v2053, %v2049
          %v2514 = vpack.c.b16 %v2058, %v2054
          %v2515 = vpack.c.b16 %v2059, %v2055
          %v2516 = vpack.c.b16 %v2060, %v2056
          %v2517 = vpack.c.b16 %v2061, %v2057
          %v2518 = vpack.c.b16 %v2066, %v2062
          %v2519 = vpack.c.b16 %v2067, %v2063
          %v2520 = vpack.c.b16 %v2068, %v2064
          %v2521 = vpack.c.b16 %v2069, %v2065
          %v2522 = vpack.c.b16 %v2074, %v2070
          %v2523 = vpack.c.b16 %v2075, %v2071
          %v2524 = vpack.c.b16 %v2076, %v2072
          %v2525 = vpack.c.b16 %v2077, %v2073
          %v2526 = vpack.c.b16 %v2082, %v2078
          %v2527 = vpack.c.b16 %v2083, %v2079
          %v2528 = vpack.c.b16 %v2084, %v2080
          %v2529 = vpack.c.b16 %v2085, %v2081
          %v2530 = vpack.c.b16 %v2090, %v2086
          %v2531 = vpack.c.b16 %v2091, %v2087
          %v2532 = vpack.c.b16 %v2092, %v2088
          %v2533 = vpack.c.b16 %v2093, %v2089
          %v2534 = vpack.c.b16 %v2098, %v2094
          %v2535 = vpack.c.b16 %v2099, %v2095
          %v2536 = vpack.c.b16 %v2100, %v2096
          %v2537 = vpack.c.b16 %v2101, %v2097
          %v2538 = vpack.c.b16 %v2106, %v2102
          %v2539 = vpack.c.b16 %v2107, %v2103
          %v2540 = vpack.c.b16 %v2108, %v2104
          %v2541 = vpack.c.b16 %v2109, %v2105
          %v2542 = vpack.c.b16 %v2114, %v2110
          %v2543 = vpack.c.b16 %v2115, %v2111
          %v2544 = vpack.c.b16 %v2116, %v2112
          %v2545 = vpack.c.b16 %v2117, %v2113
          %v2546 = vpack.c.b16 %v2122, %v2118
          %v2547 = vpack.c.b16 %v2123, %v2119
          %v2548 = vpack.c.b16 %v2124, %v2120
          %v2549 = vpack.c.b16 %v2125, %v2121
          %v2550 = vpack.c.b16 %v2130, %v2126
          %v2551 = vpack.c.b16 %v2131, %v2127
          %v2552 = vpack.c.b16 %v2132, %v2128
          %v2553 = vpack.c.b16 %v2133, %v2129
          %v2554 = vpack.c.b16 %v2138, %v2134
          %v2555 = vpack.c.b16 %v2139, %v2135
          %v2556 = vpack.c.b16 %v2140, %v2136
          %v2557 = vpack.c.b16 %v2141, %v2137
          %v2558 = vpack.c.b16 %v2146, %v2142
          %v2559 = vpack.c.b16 %v2147, %v2143
          %v2560 = vpack.c.b16 %v2148, %v2144
          %v2561 = vpack.c.b16 %v2149, %v2145
          %v2562 = vpack.c.b16 %v2154, %v2150
          %v2563 = vpack.c.b16 %v2155, %v2151
          %v2564 = vpack.c.b16 %v2156, %v2152
          %v2565 = vpack.c.b16 %v2157, %v2153
          %v2566 = vpack.c.b16 %v2162, %v2158
          %v2567 = vpack.c.b16 %v2163, %v2159
          %v2568 = vpack.c.b16 %v2164, %v2160
          %v2569 = vpack.c.b16 %v2165, %v2161
          %v2570 = vpack.c.b16 %v2170, %v2166
          %v2571 = vpack.c.b16 %v2171, %v2167
          %v2572 = vpack.c.b16 %v2172, %v2168
          %v2573 = vpack.c.b16 %v2173, %v2169
          %v2574 = vpack.c.b16 %v2178, %v2174
          %v2575 = vpack.c.b16 %v2179, %v2175
          %v2576 = vpack.c.b16 %v2180, %v2176
          %v2577 = vpack.c.b16 %v2181, %v2177
          %v2578 = vpack.c.b16 %v2186, %v2182
          %v2579 = vpack.c.b16 %v2187, %v2183
          %v2580 = vpack.c.b16 %v2188, %v2184
          %v2581 = vpack.c.b16 %v2189, %v2185
          %v2582 = vpack.c.b16 %v2194, %v2190
          %v2583 = vpack.c.b16 %v2195, %v2191
          %v2584 = vpack.c.b16 %v2196, %v2192
          %v2585 = vpack.c.b16 %v2197, %v2193
          %v2586 = vpack.c.b16 %v2202, %v2198
          %v2587 = vpack.c.b16 %v2203, %v2199
          %v2588 = vpack.c.b16 %v2204, %v2200
          %v2589 = vpack.c.b16 %v2205, %v2201
          %v2590 = vpack.c.b16 %v2210, %v2206
          %v2591 = vpack.c.b16 %v2211, %v2207
          %v2592 = vpack.c.b16 %v2212, %v2208
          %v2593 = vpack.c.b16 %v2213, %v2209
          %v2594 = vpack.c.b16 %v2218, %v2214
          %v2595 = vpack.c.b16 %v2219, %v2215
          %v2596 = vpack.c.b16 %v2220, %v2216
          %v2597 = vpack.c.b16 %v2221, %v2217
          %v2598 = vpack.c.b16 %v2226, %v2222
          %v2599 = vpack.c.b16 %v2227, %v2223
          %v2600 = vpack.c.b16 %v2228, %v2224
          %v2601 = vpack.c.b16 %v2229, %v2225
          %v2602 = vpack.c.b16 %v2234, %v2230
          %v2603 = vpack.c.b16 %v2235, %v2231
          %v2604 = vpack.c.b16 %v2236, %v2232
          %v2605 = vpack.c.b16 %v2237, %v2233
          %v2606 = vpack.c.b16 %v2242, %v2238
          %v2607 = vpack.c.b16 %v2243, %v2239
          %v2608 = vpack.c.b16 %v2244, %v2240
          %v2609 = vpack.c.b16 %v2245, %v2241
          %v2610 = vpack.c.b16 %v2250, %v2246
          %v2611 = vpack.c.b16 %v2251, %v2247
          %v2612 = vpack.c.b16 %v2252, %v2248
          %v2613 = vpack.c.b16 %v2253, %v2249
          %v2614 = vpack.c.b16 %v2258, %v2254
          %v2615 = vpack.c.b16 %v2259, %v2255
          %v2616 = vpack.c.b16 %v2260, %v2256
          %v2617 = vpack.c.b16 %v2261, %v2257
          %v2618 = vpack.c.b16 %v2266, %v2262
          %v2619 = vpack.c.b16 %v2267, %v2263
          %v2620 = vpack.c.b16 %v2268, %v2264
          %v2621 = vpack.c.b16 %v2269, %v2265
          %v2622 = vpack.c.b16 %v2274, %v2270
          %v2623 = vpack.c.b16 %v2275, %v2271
          %v2624 = vpack.c.b16 %v2276, %v2272
          %v2625 = vpack.c.b16 %v2277, %v2273
          %v2626 = vpack.c.b16 %v2282, %v2278
          %v2627 = vpack.c.b16 %v2283, %v2279
          %v2628 = vpack.c.b16 %v2284, %v2280
          %v2629 = vpack.c.b16 %v2285, %v2281
          %v2630 = vpack.c.b16 %v2290, %v2286
          %v2631 = vpack.c.b16 %v2291, %v2287
          %v2632 = vpack.c.b16 %v2292, %v2288
          %v2633 = vpack.c.b16 %v2293, %v2289
          %v2634 = vpack.c.b16 %v2298, %v2294
          %v2635 = vpack.c.b16 %v2299, %v2295
          %v2636 = vpack.c.b16 %v2300, %v2296
          %v2637 = vpack.c.b16 %v2301, %v2297
          %v2638 = vpack.c.b16 %v2306, %v2302
          %v2639 = vpack.c.b16 %v2307, %v2303
          %v2640 = vpack.c.b16 %v2308, %v2304
          %v2641 = vpack.c.b16 %v2309, %v2305
          %v2642 = vpack.c.b16 %v2314, %v2310
          %v2643 = vpack.c.b16 %v2315, %v2311
          %v2644 = vpack.c.b16 %v2316, %v2312
          %v2645 = vpack.c.b16 %v2317, %v2313
          %v2646 = vpack.c.b16 %v2322, %v2318
          %v2647 = vpack.c.b16 %v2323, %v2319
          %v2648 = vpack.c.b16 %v2324, %v2320
          %v2649 = vpack.c.b16 %v2325, %v2321
          %v2650 = vpack.c.b16 %v2330, %v2326
          %v2651 = vpack.c.b16 %v2331, %v2327
          %v2652 = vpack.c.b16 %v2332, %v2328
          %v2653 = vpack.c.b16 %v2333, %v2329
          %v2654 = vpack.c.b16 %v2338, %v2334
          %v2655 = vpack.c.b16 %v2339, %v2335
          %v2656 = vpack.c.b16 %v2340, %v2336
          %v2657 = vpack.c.b16 %v2341, %v2337
          %v2658 = vpack.c.b16 %v2346, %v2342
          %v2659 = vpack.c.b16 %v2347, %v2343
          %v2660 = vpack.c.b16 %v2348, %v2344
          %v2661 = vpack.c.b16 %v2349, %v2345
          %v2662 = vpack.c.b16 %v2354, %v2350
          %v2663 = vpack.c.b16 %v2355, %v2351
          %v2664 = vpack.c.b16 %v2356, %v2352
          %v2665 = vpack.c.b16 %v2357, %v2353
          %v2666 = vpack.c.b16 %v2362, %v2358
          %v2667 = vpack.c.b16 %v2363, %v2359
          %v2668 = vpack.c.b16 %v2364, %v2360
          %v2669 = vpack.c.b16 %v2365, %v2361
          %v2670 = vpack.c.b16 %v2370, %v2366
          %v2671 = vpack.c.b16 %v2371, %v2367
          %v2672 = vpack.c.b16 %v2372, %v2368
          %v2673 = vpack.c.b16 %v2373, %v2369
          %v2674 = vpack.c.b16 %v2378, %v2374
          %v2675 = vpack.c.b16 %v2379, %v2375
          %v2676 = vpack.c.b16 %v2380, %v2376
          %v2677 = vpack.c.b16 %v2381, %v2377
          %v2678 = vpack.c.b16 %v2386, %v2382
          %v2679 = vpack.c.b16 %v2387, %v2383
          %v2680 = vpack.c.b16 %v2388, %v2384
          %v2681 = vpack.c.b16 %v2389, %v2385
          %v2682 = vpack.c.b16 %v2394, %v2390
          %v2683 = vpack.c.b16 %v2395, %v2391
          %v2684 = vpack.c.b16 %v2396, %v2392
          %v2685 = vpack.c.b16 %v2397, %v2393
          %v2686 = vpack.c.b16 %v2402, %v2398
          %v2687 = vpack.c.b16 %v2403, %v2399
          %v2688 = vpack.c.b16 %v2404, %v2400
          %v2689 = vpack.c.b16 %v2405, %v2401
          %v2690 = vpack.c.b16 %v2410, %v2406
          %v2691 = vpack.c.b16 %v2411, %v2407
          %v2692 = vpack.c.b16 %v2412, %v2408
          %v2693 = vpack.c.b16 %v2413, %v2409
          %v2694 = vpack.c.b16 %v2418, %v2414
          %v2695 = vpack.c.b16 %v2419, %v2415
          %v2696 = vpack.c.b16 %v2420, %v2416
          %v2697 = vpack.c.b16 %v2421, %v2417
          %v2698 = vpack.c.b16 %v2426, %v2422
          %v2699 = vpack.c.b16 %v2427, %v2423
          %v2700 = vpack.c.b16 %v2428, %v2424
          %v2701 = vpack.c.b16 %v2429, %v2425
          %v2702 = vpack.c.b16 %v2434, %v2430
          %v2703 = vpack.c.b16 %v2435, %v2431
          %v2704 = vpack.c.b16 %v2436, %v2432
          %v2705 = vpack.c.b16 %v2437, %v2433
          %v2706 = vpack.c.b16 %v2442, %v2438
          %v2707 = vpack.c.b16 %v2443, %v2439
          %v2708 = vpack.c.b16 %v2444, %v2440
          %v2709 = vpack.c.b16 %v2445, %v2441
          %v2710 = vpack.c.b16 %v2450, %v2446
          %v2711 = vpack.c.b16 %v2451, %v2447
          %v2712 = vpack.c.b16 %v2452, %v2448
          %v2713 = vpack.c.b16 %v2453, %v2449
          %v2714 = vpack.c.b16 %v2458, %v2454
          %v2715 = vpack.c.b16 %v2459, %v2455
          %v2716 = vpack.c.b16 %v2460, %v2456
          %v2717 = vpack.c.b16 %v2461, %v2457
          %v2975 = vlaneseq
          %v2976 = vshrl.u32 %v2975, 7
          %v2977 = vsub.s32 0, %v2976
          %v2978 = vrot.slane %v1693, %v2977
          %v2979 = vlaneseq
          %v2980 = vshrl.u32 %v2979, 7
          %v2981 = vsub.s32 1, %v2980
          %v2982 = vrot.slane %v1693, %v2981
          %v2983 = vlaneseq
          %v2984 = vshrl.u32 %v2983, 7
          %v2985 = vsub.s32 2, %v2984
          %v2986 = vrot.slane %v1693, %v2985
          %v2987 = vlaneseq
          %v2988 = vshrl.u32 %v2987, 7
          %v2989 = vsub.s32 3, %v2988
          %v2990 = vrot.slane %v1693, %v2989
          %2995 = vmatprep.subr.bf16.mxu0 %v2463
          %2996 = vmatpush1.bf16.msra.mxu0 %v2462
          %2997 = vmatprep.subr.bf16.mxu0 %v2467
          %2998 = vmatpush1.bf16.msra.mxu0 %v2466
          %2999 = vmatprep.subr.bf16.mxu0 %v2471
          %3000 = vmatpush1.bf16.msra.mxu0 %v2470
          %3001 = vmatprep.subr.bf16.mxu0 %v2475
          %3002 = vmatpush1.bf16.msra.mxu0 %v2474
          %3003 = vmatprep.subr.bf16.mxu0 %v2479
          %3004 = vmatpush1.bf16.msra.mxu0 %v2478
          %3005 = vmatprep.subr.bf16.mxu0 %v2483
          %3006 = vmatpush1.bf16.msra.mxu0 %v2482
          %3007 = vmatprep.subr.bf16.mxu0 %v2487
          %3008 = vmatpush1.bf16.msra.mxu0 %v2486
          %3009 = vmatprep.subr.bf16.mxu0 %v2491
          %3010 = vmatpush1.bf16.msra.mxu0 %v2490
          %3011 = vmatprep.subr.bf16.mxu0 %v2495
          %3012 = vmatpush1.bf16.msra.mxu0 %v2494
          %3013 = vmatprep.subr.bf16.mxu0 %v2499
          %3014 = vmatpush1.bf16.msra.mxu0 %v2498
          %3015 = vmatprep.subr.bf16.mxu0 %v2503
          %3016 = vmatpush1.bf16.msra.mxu0 %v2502
          %3017 = vmatprep.subr.bf16.mxu0 %v2507
          %3018 = vmatpush1.bf16.msra.mxu0 %v2506
          %3019 = vmatprep.subr.bf16.mxu0 %v2511
          %3020 = vmatpush1.bf16.msra.mxu0 %v2510
          %3021 = vmatprep.subr.bf16.mxu0 %v2515
          %3022 = vmatpush1.bf16.msra.mxu0 %v2514
          %3023 = vmatprep.subr.bf16.mxu0 %v2519
          %3024 = vmatpush1.bf16.msra.mxu0 %v2518
          %3025 = vmatprep.subr.bf16.mxu0 %v2523
          %3026 = vmatpush1.bf16.msra.mxu0 %v2522
          %3027 = vmatprep.mubr.bf16.mxu0 %v1430
          %3028 = vmatmul.mubr.bf16.gmra.mrb[0].mxu0 %v1429
          %v3029 = vpop.f32.mrb[0].mxu0
          %v3030 = vadd.f32 %v2978, %v3029
          %v3031 = vpop.f32.mrb[0].mxu0
          %v3032 = vadd.f32 %v2982, %v3031
          %v3033 = vpop.f32.mrb[0].mxu0
          %v3034 = vpop.f32.mrb[0].mxu0
          %3035 = vdwg.mxu0
          %3036 = vmatprep.subr.bf16.mxu0 %v2527
          %3037 = vmatpush1.bf16.msra.mxu0 %v2526
          %3038 = vmatprep.subr.bf16.mxu0 %v2531
          %3039 = vmatpush1.bf16.msra.mxu0 %v2530
          %3040 = vmatprep.subr.bf16.mxu0 %v2535
          %3041 = vmatpush1.bf16.msra.mxu0 %v2534
          %3042 = vmatprep.subr.bf16.mxu0 %v2539
          %3043 = vmatpush1.bf16.msra.mxu0 %v2538
          %3044 = vmatprep.subr.bf16.mxu0 %v2543
          %3045 = vmatpush1.bf16.msra.mxu0 %v2542
          %3046 = vmatprep.subr.bf16.mxu0 %v2547
          %3047 = vmatpush1.bf16.msra.mxu0 %v2546
          %3048 = vmatprep.subr.bf16.mxu0 %v2551
          %3049 = vmatpush1.bf16.msra.mxu0 %v2550
          %3050 = vmatprep.subr.bf16.mxu0 %v2555
          %3051 = vmatpush1.bf16.msra.mxu0 %v2554
          %3052 = vmatprep.subr.bf16.mxu0 %v2559
          %3053 = vmatpush1.bf16.msra.mxu0 %v2558
          %3054 = vmatprep.subr.bf16.mxu0 %v2563
          %3055 = vmatpush1.bf16.msra.mxu0 %v2562
          %3056 = vmatprep.subr.bf16.mxu0 %v2567
          %3057 = vmatpush1.bf16.msra.mxu0 %v2566
          %3058 = vmatprep.subr.bf16.mxu0 %v2571
          %3059 = vmatpush1.bf16.msra.mxu0 %v2570
          %3060 = vmatprep.subr.bf16.mxu0 %v2575
          %3061 = vmatpush1.bf16.msra.mxu0 %v2574
          %3062 = vmatprep.subr.bf16.mxu0 %v2579
          %3063 = vmatpush1.bf16.msra.mxu0 %v2578
          %3064 = vmatprep.subr.bf16.mxu0 %v2583
          %3065 = vmatpush1.bf16.msra.mxu0 %v2582
          %3066 = vmatprep.subr.bf16.mxu0 %v2587
          %3067 = vmatpush1.bf16.msra.mxu0 %v2586
          %3068 = vmatprep.mubr.bf16.mxu0 %v1432
          %3069 = vmatmul.mubr.bf16.gmra.mrb[0].mxu0 %v1431
          %v3070 = vpop.f32.mrb[0].mxu0
          %v3071 = vadd.f32 %v3030, %v3070
          %v3072 = vpop.f32.mrb[0].mxu0
          %v3073 = vadd.f32 %v3032, %v3072
          %v3074 = vpop.f32.mrb[0].mxu0
          %v3075 = vpop.f32.mrb[0].mxu0
          %3076 = vdwg.mxu0
          %3077 = vmatprep.subr.bf16.mxu0 %v2591
          %3078 = vmatpush1.bf16.msra.mxu0 %v2590
          %3079 = vmatprep.subr.bf16.mxu0 %v2595
          %3080 = vmatpush1.bf16.msra.mxu0 %v2594
          %3081 = vmatprep.subr.bf16.mxu0 %v2599
          %3082 = vmatpush1.bf16.msra.mxu0 %v2598
          %3083 = vmatprep.subr.bf16.mxu0 %v2603
          %3084 = vmatpush1.bf16.msra.mxu0 %v2602
          %3085 = vmatprep.subr.bf16.mxu0 %v2607
          %3086 = vmatpush1.bf16.msra.mxu0 %v2606
          %3087 = vmatprep.subr.bf16.mxu0 %v2611
          %3088 = vmatpush1.bf16.msra.mxu0 %v2610
          %3089 = vmatprep.subr.bf16.mxu0 %v2615
          %3090 = vmatpush1.bf16.msra.mxu0 %v2614
          %3091 = vmatprep.subr.bf16.mxu0 %v2619
          %3092 = vmatpush1.bf16.msra.mxu0 %v2618
          %3093 = vmatprep.subr.bf16.mxu0 %v2623
          %3094 = vmatpush1.bf16.msra.mxu0 %v2622
          %3095 = vmatprep.subr.bf16.mxu0 %v2627
          %3096 = vmatpush1.bf16.msra.mxu0 %v2626
          %3097 = vmatprep.subr.bf16.mxu0 %v2631
          %3098 = vmatpush1.bf16.msra.mxu0 %v2630
          %3099 = vmatprep.subr.bf16.mxu0 %v2635
          %3100 = vmatpush1.bf16.msra.mxu0 %v2634
          %3101 = vmatprep.subr.bf16.mxu0 %v2639
          %3102 = vmatpush1.bf16.msra.mxu0 %v2638
          %3103 = vmatprep.subr.bf16.mxu0 %v2643
          %3104 = vmatpush1.bf16.msra.mxu0 %v2642
          %3105 = vmatprep.subr.bf16.mxu0 %v2647
          %3106 = vmatpush1.bf16.msra.mxu0 %v2646
          %3107 = vmatprep.subr.bf16.mxu0 %v2651
          %3108 = vmatpush1.bf16.msra.mxu0 %v2650
          %3109 = vmatprep.mubr.bf16.mxu0 %v1434
          %3110 = vmatmul.mubr.bf16.gmra.mrb[0].mxu0 %v1433
          %v3111 = vpop.f32.mrb[0].mxu0
          %v3112 = vadd.f32 %v3071, %v3111
          %v3113 = vpop.f32.mrb[0].mxu0
          %v3114 = vadd.f32 %v3073, %v3113
          %v3115 = vpop.f32.mrb[0].mxu0
          %v3116 = vpop.f32.mrb[0].mxu0
          %3117 = vdwg.mxu0
          %3118 = vmatprep.subr.bf16.mxu0 %v2655
          %3119 = vmatpush1.bf16.msra.mxu0 %v2654
          %3120 = vmatprep.subr.bf16.mxu0 %v2659
          %3121 = vmatpush1.bf16.msra.mxu0 %v2658
          %3122 = vmatprep.subr.bf16.mxu0 %v2663
          %3123 = vmatpush1.bf16.msra.mxu0 %v2662
          %3124 = vmatprep.subr.bf16.mxu0 %v2667
          %3125 = vmatpush1.bf16.msra.mxu0 %v2666
          %3126 = vmatprep.subr.bf16.mxu0 %v2671
          %3127 = vmatpush1.bf16.msra.mxu0 %v2670
          %3128 = vmatprep.subr.bf16.mxu0 %v2675
          %3129 = vmatpush1.bf16.msra.mxu0 %v2674
          %3130 = vmatprep.subr.bf16.mxu0 %v2679
          %3131 = vmatpush1.bf16.msra.mxu0 %v2678
          %3132 = vmatprep.subr.bf16.mxu0 %v2683
          %3133 = vmatpush1.bf16.msra.mxu0 %v2682
          %3134 = vmatprep.subr.bf16.mxu0 %v2687
          %3135 = vmatpush1.bf16.msra.mxu0 %v2686
          %3136 = vmatprep.subr.bf16.mxu0 %v2691
          %3137 = vmatpush1.bf16.msra.mxu0 %v2690
          %3138 = vmatprep.subr.bf16.mxu0 %v2695
          %3139 = vmatpush1.bf16.msra.mxu0 %v2694
          %3140 = vmatprep.subr.bf16.mxu0 %v2699
          %3141 = vmatpush1.bf16.msra.mxu0 %v2698
          %3142 = vmatprep.subr.bf16.mxu0 %v2703
          %3143 = vmatpush1.bf16.msra.mxu0 %v2702
          %3144 = vmatprep.subr.bf16.mxu0 %v2707
          %3145 = vmatpush1.bf16.msra.mxu0 %v2706
          %3146 = vmatprep.subr.bf16.mxu0 %v2711
          %3147 = vmatpush1.bf16.msra.mxu0 %v2710
          %3148 = vmatprep.subr.bf16.mxu0 %v2715
          %3149 = vmatpush1.bf16.msra.mxu0 %v2714
          %3150 = vmatprep.mubr.bf16.mxu0 %v1436
          %3151 = vmatmul.mubr.bf16.gmra.mrb[0].mxu0 %v1435
          %v3152 = vpop.f32.mrb[0].mxu0
          %v3153 = vadd.f32 %v3112, %v3152
          %v3154 = vpop.f32.mrb[0].mxu0
          %v3155 = vadd.f32 %v3114, %v3154
          %v3156 = vpop.f32.mrb[0].mxu0
          %v3157 = vpop.f32.mrb[0].mxu0
          %3158 = vdwg.mxu0
          %3159 = vmatprep.subr.bf16.mxu0 %v2465
          %3160 = vmatpush1.bf16.msra.mxu0 %v2464
          %3161 = vmatprep.subr.bf16.mxu0 %v2469
          %3162 = vmatpush1.bf16.msra.mxu0 %v2468
          %3163 = vmatprep.subr.bf16.mxu0 %v2473
          %3164 = vmatpush1.bf16.msra.mxu0 %v2472
          %3165 = vmatprep.subr.bf16.mxu0 %v2477
          %3166 = vmatpush1.bf16.msra.mxu0 %v2476
          %3167 = vmatprep.subr.bf16.mxu0 %v2481
          %3168 = vmatpush1.bf16.msra.mxu0 %v2480
          %3169 = vmatprep.subr.bf16.mxu0 %v2485
          %3170 = vmatpush1.bf16.msra.mxu0 %v2484
          %3171 = vmatprep.subr.bf16.mxu0 %v2489
          %3172 = vmatpush1.bf16.msra.mxu0 %v2488
          %3173 = vmatprep.subr.bf16.mxu0 %v2493
          %3174 = vmatpush1.bf16.msra.mxu0 %v2492
          %3175 = vmatprep.subr.bf16.mxu0 %v2497
          %3176 = vmatpush1.bf16.msra.mxu0 %v2496
          %3177 = vmatprep.subr.bf16.mxu0 %v2501
          %3178 = vmatpush1.bf16.msra.mxu0 %v2500
          %3179 = vmatprep.subr.bf16.mxu0 %v2505
          %3180 = vmatpush1.bf16.msra.mxu0 %v2504
          %3181 = vmatprep.subr.bf16.mxu0 %v2509
          %3182 = vmatpush1.bf16.msra.mxu0 %v2508
          %3183 = vmatprep.subr.bf16.mxu0 %v2513
          %3184 = vmatpush1.bf16.msra.mxu0 %v2512
          %3185 = vmatprep.subr.bf16.mxu0 %v2517
          %3186 = vmatpush1.bf16.msra.mxu0 %v2516
          %3187 = vmatprep.subr.bf16.mxu0 %v2521
          %3188 = vmatpush1.bf16.msra.mxu0 %v2520
          %3189 = vmatprep.subr.bf16.mxu0 %v2525
          %3190 = vmatpush1.bf16.msra.mxu0 %v2524
          %3191 = vmatprep.mubr.bf16.mxu0 %v1430
          %3192 = vmatmul.mubr.bf16.gmra.mrb[0].mxu0 %v1429
          %v3193 = vpop.f32.mrb[0].mxu0
          %v3194 = vadd.f32 %v2986, %v3193
          %v3195 = vpop.f32.mrb[0].mxu0
          %v3196 = vadd.f32 %v2990, %v3195
          %v3197 = vpop.f32.mrb[0].mxu0
          %v3198 = vpop.f32.mrb[0].mxu0
          %3199 = vdwg.mxu0
          %3200 = vmatprep.subr.bf16.mxu0 %v2529
          %3201 = vmatpush1.bf16.msra.mxu0 %v2528
          %3202 = vmatprep.subr.bf16.mxu0 %v2533
          %3203 = vmatpush1.bf16.msra.mxu0 %v2532
          %3204 = vmatprep.subr.bf16.mxu0 %v2537
          %3205 = vmatpush1.bf16.msra.mxu0 %v2536
          %3206 = vmatprep.subr.bf16.mxu0 %v2541
          %3207 = vmatpush1.bf16.msra.mxu0 %v2540
          %3208 = vmatprep.subr.bf16.mxu0 %v2545
          %3209 = vmatpush1.bf16.msra.mxu0 %v2544
          %3210 = vmatprep.subr.bf16.mxu0 %v2549
          %3211 = vmatpush1.bf16.msra.mxu0 %v2548
          %3212 = vmatprep.subr.bf16.mxu0 %v2553
          %3213 = vmatpush1.bf16.msra.mxu0 %v2552
          %3214 = vmatprep.subr.bf16.mxu0 %v2557
          %3215 = vmatpush1.bf16.msra.mxu0 %v2556
          %3216 = vmatprep.subr.bf16.mxu0 %v2561
          %3217 = vmatpush1.bf16.msra.mxu0 %v2560
          %3218 = vmatprep.subr.bf16.mxu0 %v2565
          %3219 = vmatpush1.bf16.msra.mxu0 %v2564
          %3220 = vmatprep.subr.bf16.mxu0 %v2569
          %3221 = vmatpush1.bf16.msra.mxu0 %v2568
          %3222 = vmatprep.subr.bf16.mxu0 %v2573
          %3223 = vmatpush1.bf16.msra.mxu0 %v2572
          %3224 = vmatprep.subr.bf16.mxu0 %v2577
          %3225 = vmatpush1.bf16.msra.mxu0 %v2576
          %3226 = vmatprep.subr.bf16.mxu0 %v2581
          %3227 = vmatpush1.bf16.msra.mxu0 %v2580
          %3228 = vmatprep.subr.bf16.mxu0 %v2585
          %3229 = vmatpush1.bf16.msra.mxu0 %v2584
          %3230 = vmatprep.subr.bf16.mxu0 %v2589
          %3231 = vmatpush1.bf16.msra.mxu0 %v2588
          %3232 = vmatprep.mubr.bf16.mxu0 %v1432
          %3233 = vmatmul.mubr.bf16.gmra.mrb[0].mxu0 %v1431
          %v3234 = vpop.f32.mrb[0].mxu0
          %v3235 = vadd.f32 %v3194, %v3234
          %v3236 = vpop.f32.mrb[0].mxu0
          %v3237 = vadd.f32 %v3196, %v3236
          %v3238 = vpop.f32.mrb[0].mxu0
          %v3239 = vpop.f32.mrb[0].mxu0
          %3240 = vdwg.mxu0
          %3241 = vmatprep.subr.bf16.mxu0 %v2593
          %3242 = vmatpush1.bf16.msra.mxu0 %v2592
          %3243 = vmatprep.subr.bf16.mxu0 %v2597
          %3244 = vmatpush1.bf16.msra.mxu0 %v2596
          %3245 = vmatprep.subr.bf16.mxu0 %v2601
          %3246 = vmatpush1.bf16.msra.mxu0 %v2600
          %3247 = vmatprep.subr.bf16.mxu0 %v2605
          %3248 = vmatpush1.bf16.msra.mxu0 %v2604
          %3249 = vmatprep.subr.bf16.mxu0 %v2609
          %3250 = vmatpush1.bf16.msra.mxu0 %v2608
          %3251 = vmatprep.subr.bf16.mxu0 %v2613
          %3252 = vmatpush1.bf16.msra.mxu0 %v2612
          %3253 = vmatprep.subr.bf16.mxu0 %v2617
          %3254 = vmatpush1.bf16.msra.mxu0 %v2616
          %3255 = vmatprep.subr.bf16.mxu0 %v2621
          %3256 = vmatpush1.bf16.msra.mxu0 %v2620
          %3257 = vmatprep.subr.bf16.mxu0 %v2625
          %3258 = vmatpush1.bf16.msra.mxu0 %v2624
          %3259 = vmatprep.subr.bf16.mxu0 %v2629
          %3260 = vmatpush1.bf16.msra.mxu0 %v2628
          %3261 = vmatprep.subr.bf16.mxu0 %v2633
          %3262 = vmatpush1.bf16.msra.mxu0 %v2632
          %3263 = vmatprep.subr.bf16.mxu0 %v2637
          %3264 = vmatpush1.bf16.msra.mxu0 %v2636
          %3265 = vmatprep.subr.bf16.mxu0 %v2641
          %3266 = vmatpush1.bf16.msra.mxu0 %v2640
          %3267 = vmatprep.subr.bf16.mxu0 %v2645
          %3268 = vmatpush1.bf16.msra.mxu0 %v2644
          %3269 = vmatprep.subr.bf16.mxu0 %v2649
          %3270 = vmatpush1.bf16.msra.mxu0 %v2648
          %3271 = vmatprep.subr.bf16.mxu0 %v2653
          %3272 = vmatpush1.bf16.msra.mxu0 %v2652
          %3273 = vmatprep.mubr.bf16.mxu0 %v1434
          %3274 = vmatmul.mubr.bf16.gmra.mrb[0].mxu0 %v1433
          %v3275 = vpop.f32.mrb[0].mxu0
          %v3276 = vadd.f32 %v3235, %v3275
          %v3277 = vpop.f32.mrb[0].mxu0
          %v3278 = vadd.f32 %v3237, %v3277
          %v3279 = vpop.f32.mrb[0].mxu0
          %v3280 = vpop.f32.mrb[0].mxu0
          %3281 = vdwg.mxu0
          %3282 = vmatprep.subr.bf16.mxu0 %v2657
          %3283 = vmatpush1.bf16.msra.mxu0 %v2656
          %3284 = vmatprep.subr.bf16.mxu0 %v2661
          %3285 = vmatpush1.bf16.msra.mxu0 %v2660
          %3286 = vmatprep.subr.bf16.mxu0 %v2665
          %3287 = vmatpush1.bf16.msra.mxu0 %v2664
          %3288 = vmatprep.subr.bf16.mxu0 %v2669
          %3289 = vmatpush1.bf16.msra.mxu0 %v2668
          %3290 = vmatprep.subr.bf16.mxu0 %v2673
          %3291 = vmatpush1.bf16.msra.mxu0 %v2672
          %3292 = vmatprep.subr.bf16.mxu0 %v2677
          %3293 = vmatpush1.bf16.msra.mxu0 %v2676
          %3294 = vmatprep.subr.bf16.mxu0 %v2681
          %3295 = vmatpush1.bf16.msra.mxu0 %v2680
          %3296 = vmatprep.subr.bf16.mxu0 %v2685
          %3297 = vmatpush1.bf16.msra.mxu0 %v2684
          %3298 = vmatprep.subr.bf16.mxu0 %v2689
          %3299 = vmatpush1.bf16.msra.mxu0 %v2688
          %3300 = vmatprep.subr.bf16.mxu0 %v2693
          %3301 = vmatpush1.bf16.msra.mxu0 %v2692
          %3302 = vmatprep.subr.bf16.mxu0 %v2697
          %3303 = vmatpush1.bf16.msra.mxu0 %v2696
          %3304 = vmatprep.subr.bf16.mxu0 %v2701
          %3305 = vmatpush1.bf16.msra.mxu0 %v2700
          %3306 = vmatprep.subr.bf16.mxu0 %v2705
          %3307 = vmatpush1.bf16.msra.mxu0 %v2704
          %3308 = vmatprep.subr.bf16.mxu0 %v2709
          %3309 = vmatpush1.bf16.msra.mxu0 %v2708
          %3310 = vmatprep.subr.bf16.mxu0 %v2713
          %3311 = vmatpush1.bf16.msra.mxu0 %v2712
          %3312 = vmatprep.subr.bf16.mxu0 %v2717
          %3313 = vmatpush1.bf16.msra.mxu0 %v2716
          %3314 = vmatprep.mubr.bf16.mxu0 %v1436
          %3315 = vmatmul.mubr.bf16.gmra.mrb[0].mxu0 %v1435
          %v3316 = vpop.f32.mrb[0].mxu0
          %v3317 = vadd.f32 %v3276, %v3316
          %v3318 = vpop.f32.mrb[0].mxu0
          %v3319 = vadd.f32 %v3278, %v3318
          %v3320 = vpop.f32.mrb[0].mxu0
          %v3321 = vpop.f32.mrb[0].mxu0
          %3322 = vdwg.mxu0
          %v3323 = vmax.f32 %v3153, 0.0
          %v3324 = vmax.f32 %v3155, 0.0
          %v3325 = vmax.f32 %v3317, 0.0
          %v3326 = vmax.f32 %v3319, 0.0
          %v3327 = vpack.c.bf16 %v3323, %v3323
          %v3328 = vpack.c.bf16 %v3324, %v3324
          %v3329 = vpack.c.bf16 %v3325, %v3325
          %v3330 = vpack.c.bf16 %v3326, %v3326
          %v3331 = vld [vmem:[#allocation8] sm:$0xff]
          %v3332 = vld [vmem:[#allocation8 + $0x8] sm:$0xff]
          %v3333 = vld [vmem:[#allocation8 + $0x10] sm:$0xff]
          %v3334 = vld [vmem:[#allocation8 + $0x18] sm:$0xff]
          %v3335 = vld [vmem:[#allocation8 + $0x20] sm:$0xff]
          %v3336 = vld [vmem:[#allocation8 + $0x28] sm:$0xff]
          %v3337 = vld [vmem:[#allocation8 + $0x30] sm:$0xff]
          %v3338 = vld [vmem:[#allocation8 + $0x38] sm:$0xff]
          %v3339 = vld [vmem:[#allocation8 + $0x40] sm:$0xff]
          %v3340 = vld [vmem:[#allocation8 + $0x48] sm:$0xff]
          %v3341 = vld [vmem:[#allocation8 + $0x50] sm:$0xff]
          %v3342 = vld [vmem:[#allocation8 + $0x58] sm:$0xff]
          %v3343 = vld [vmem:[#allocation8 + $0x60] sm:$0xff]
          %v3344 = vld [vmem:[#allocation8 + $0x68] sm:$0xff]
          %v3345 = vld [vmem:[#allocation8 + $0x70] sm:$0xff]
          %v3346 = vld [vmem:[#allocation8 + $0x78] sm:$0xff]
          %v3347 = vld [vmem:[#allocation8 + $0x80] sm:$0xff]
          %v3348 = vld [vmem:[#allocation8 + $0x88] sm:$0xff]
          %v3349 = vld [vmem:[#allocation8 + $0x90] sm:$0xff]
          %v3350 = vld [vmem:[#allocation8 + $0x98] sm:$0xff]
          %v3351 = vld [vmem:[#allocation8 + $0xa0] sm:$0xff]
          %v3352 = vld [vmem:[#allocation8 + $0xa8] sm:$0xff]
          %v3353 = vld [vmem:[#allocation8 + $0xb0] sm:$0xff]
          %v3354 = vld [vmem:[#allocation8 + $0xb8] sm:$0xff]
          %v3355 = vld [vmem:[#allocation8 + $0xc0] sm:$0xff]
          %v3356 = vld [vmem:[#allocation8 + $0xc8] sm:$0xff]
          %v3357 = vld [vmem:[#allocation8 + $0xd0] sm:$0xff]
          %v3358 = vld [vmem:[#allocation8 + $0xd8] sm:$0xff]
          %v3359 = vld [vmem:[#allocation8 + $0xe0] sm:$0xff]
          %v3360 = vld [vmem:[#allocation8 + $0xe8] sm:$0xff]
          %v3361 = vld [vmem:[#allocation8 + $0xf0] sm:$0xff]
          %v3362 = vld [vmem:[#allocation8 + $0xf8] sm:$0xff]
          %v3363 = vld [vmem:[#allocation8 + $0x100] sm:$0xff]
          %v3364 = vld [vmem:[#allocation8 + $0x108] sm:$0xff]
          %v3365 = vld [vmem:[#allocation8 + $0x110] sm:$0xff]
          %v3366 = vld [vmem:[#allocation8 + $0x118] sm:$0xff]
          %v3367 = vld [vmem:[#allocation8 + $0x120] sm:$0xff]
          %v3368 = vld [vmem:[#allocation8 + $0x128] sm:$0xff]
          %v3369 = vld [vmem:[#allocation8 + $0x130] sm:$0xff]
          %v3370 = vld [vmem:[#allocation8 + $0x138] sm:$0xff]
          %v3371 = vld [vmem:[#allocation8 + $0x140] sm:$0xff]
          %v3372 = vld [vmem:[#allocation8 + $0x148] sm:$0xff]
          %v3373 = vld [vmem:[#allocation8 + $0x150] sm:$0xff]
          %v3374 = vld [vmem:[#allocation8 + $0x158] sm:$0xff]
          %v3375 = vld [vmem:[#allocation8 + $0x160] sm:$0xff]
          %v3376 = vld [vmem:[#allocation8 + $0x168] sm:$0xff]
          %v3377 = vld [vmem:[#allocation8 + $0x170] sm:$0xff]
          %v3378 = vld [vmem:[#allocation8 + $0x178] sm:$0xff]
          %v3379 = vld [vmem:[#allocation8 + $0x180] sm:$0xff]
          %v3380 = vld [vmem:[#allocation8 + $0x188] sm:$0xff]
          %v3381 = vld [vmem:[#allocation8 + $0x190] sm:$0xff]
          %v3382 = vld [vmem:[#allocation8 + $0x198] sm:$0xff]
          %v3383 = vld [vmem:[#allocation8 + $0x1a0] sm:$0xff]
          %v3384 = vld [vmem:[#allocation8 + $0x1a8] sm:$0xff]
          %v3385 = vld [vmem:[#allocation8 + $0x1b0] sm:$0xff]
          %v3386 = vld [vmem:[#allocation8 + $0x1b8] sm:$0xff]
          %v3387 = vld [vmem:[#allocation8 + $0x1c0] sm:$0xff]
          %v3388 = vld [vmem:[#allocation8 + $0x1c8] sm:$0xff]
          %v3389 = vld [vmem:[#allocation8 + $0x1d0] sm:$0xff]
          %v3390 = vld [vmem:[#allocation8 + $0x1d8] sm:$0xff]
          %v3391 = vld [vmem:[#allocation8 + $0x1e0] sm:$0xff]
          %v3392 = vld [vmem:[#allocation8 + $0x1e8] sm:$0xff]
          %v3393 = vld [vmem:[#allocation8 + $0x1f0] sm:$0xff]
          %v3394 = vld [vmem:[#allocation8 + $0x1f8] sm:$0xff]
          %v3395 = vld [vmem:[%s10] sm:$0x3]
          %v3460 = vunpack.c.l.b16 %v3331
          %v3461 = vunpack.c.h.b16 %v3331
          %v3462 = vunpack.c.l.b16 %v3332
          %v3463 = vunpack.c.h.b16 %v3332
          %v3464 = vunpack.c.l.b16 %v3333
          %v3465 = vunpack.c.h.b16 %v3333
          %v3466 = vunpack.c.l.b16 %v3334
          %v3467 = vunpack.c.h.b16 %v3334
          %v3468 = vunpack.c.l.b16 %v3335
          %v3469 = vunpack.c.h.b16 %v3335
          %v3470 = vunpack.c.l.b16 %v3336
          %v3471 = vunpack.c.h.b16 %v3336
          %v3472 = vunpack.c.l.b16 %v3337
          %v3473 = vunpack.c.h.b16 %v3337
          %v3474 = vunpack.c.l.b16 %v3338
          %v3475 = vunpack.c.h.b16 %v3338
          %v3476 = vunpack.c.l.b16 %v3339
          %v3477 = vunpack.c.h.b16 %v3339
          %v3478 = vunpack.c.l.b16 %v3340
          %v3479 = vunpack.c.h.b16 %v3340
          %v3480 = vunpack.c.l.b16 %v3341
          %v3481 = vunpack.c.h.b16 %v3341
          %v3482 = vunpack.c.l.b16 %v3342
          %v3483 = vunpack.c.h.b16 %v3342
          %v3484 = vunpack.c.l.b16 %v3343
          %v3485 = vunpack.c.h.b16 %v3343
          %v3486 = vunpack.c.l.b16 %v3344
          %v3487 = vunpack.c.h.b16 %v3344
          %v3488 = vunpack.c.l.b16 %v3345
          %v3489 = vunpack.c.h.b16 %v3345
          %v3490 = vunpack.c.l.b16 %v3346
          %v3491 = vunpack.c.h.b16 %v3346
          %v3492 = vunpack.c.l.b16 %v3347
          %v3493 = vunpack.c.h.b16 %v3347
          %v3494 = vunpack.c.l.b16 %v3348
          %v3495 = vunpack.c.h.b16 %v3348
          %v3496 = vunpack.c.l.b16 %v3349
          %v3497 = vunpack.c.h.b16 %v3349
          %v3498 = vunpack.c.l.b16 %v3350
          %v3499 = vunpack.c.h.b16 %v3350
          %v3500 = vunpack.c.l.b16 %v3351
          %v3501 = vunpack.c.h.b16 %v3351
          %v3502 = vunpack.c.l.b16 %v3352
          %v3503 = vunpack.c.h.b16 %v3352
          %v3504 = vunpack.c.l.b16 %v3353
          %v3505 = vunpack.c.h.b16 %v3353
          %v3506 = vunpack.c.l.b16 %v3354
          %v3507 = vunpack.c.h.b16 %v3354
          %v3508 = vunpack.c.l.b16 %v3355
          %v3509 = vunpack.c.h.b16 %v3355
          %v3510 = vunpack.c.l.b16 %v3356
          %v3511 = vunpack.c.h.b16 %v3356
          %v3512 = vunpack.c.l.b16 %v3357
          %v3513 = vunpack.c.h.b16 %v3357
          %v3514 = vunpack.c.l.b16 %v3358
          %v3515 = vunpack.c.h.b16 %v3358
          %v3516 = vunpack.c.l.b16 %v3359
          %v3517 = vunpack.c.h.b16 %v3359
          %v3518 = vunpack.c.l.b16 %v3360
          %v3519 = vunpack.c.h.b16 %v3360
          %v3520 = vunpack.c.l.b16 %v3361
          %v3521 = vunpack.c.h.b16 %v3361
          %v3522 = vunpack.c.l.b16 %v3362
          %v3523 = vunpack.c.h.b16 %v3362
          %v3524 = vunpack.c.l.b16 %v3363
          %v3525 = vunpack.c.h.b16 %v3363
          %v3526 = vunpack.c.l.b16 %v3364
          %v3527 = vunpack.c.h.b16 %v3364
          %v3528 = vunpack.c.l.b16 %v3365
          %v3529 = vunpack.c.h.b16 %v3365
          %v3530 = vunpack.c.l.b16 %v3366
          %v3531 = vunpack.c.h.b16 %v3366
          %v3532 = vunpack.c.l.b16 %v3367
          %v3533 = vunpack.c.h.b16 %v3367
          %v3534 = vunpack.c.l.b16 %v3368
          %v3535 = vunpack.c.h.b16 %v3368
          %v3536 = vunpack.c.l.b16 %v3369
          %v3537 = vunpack.c.h.b16 %v3369
          %v3538 = vunpack.c.l.b16 %v3370
          %v3539 = vunpack.c.h.b16 %v3370
          %v3540 = vunpack.c.l.b16 %v3371
          %v3541 = vunpack.c.h.b16 %v3371
          %v3542 = vunpack.c.l.b16 %v3372
          %v3543 = vunpack.c.h.b16 %v3372
          %v3544 = vunpack.c.l.b16 %v3373
          %v3545 = vunpack.c.h.b16 %v3373
          %v3546 = vunpack.c.l.b16 %v3374
          %v3547 = vunpack.c.h.b16 %v3374
          %v3548 = vunpack.c.l.b16 %v3375
          %v3549 = vunpack.c.h.b16 %v3375
          %v3550 = vunpack.c.l.b16 %v3376
          %v3551 = vunpack.c.h.b16 %v3376
          %v3552 = vunpack.c.l.b16 %v3377
          %v3553 = vunpack.c.h.b16 %v3377
          %v3554 = vunpack.c.l.b16 %v3378
          %v3555 = vunpack.c.h.b16 %v3378
          %v3556 = vunpack.c.l.b16 %v3379
          %v3557 = vunpack.c.h.b16 %v3379
          %v3558 = vunpack.c.l.b16 %v3380
          %v3559 = vunpack.c.h.b16 %v3380
          %v3560 = vunpack.c.l.b16 %v3381
          %v3561 = vunpack.c.h.b16 %v3381
          %v3562 = vunpack.c.l.b16 %v3382
          %v3563 = vunpack.c.h.b16 %v3382
          %v3564 = vunpack.c.l.b16 %v3383
          %v3565 = vunpack.c.h.b16 %v3383
          %v3566 = vunpack.c.l.b16 %v3384
          %v3567 = vunpack.c.h.b16 %v3384
          %v3568 = vunpack.c.l.b16 %v3385
          %v3569 = vunpack.c.h.b16 %v3385
          %v3570 = vunpack.c.l.b16 %v3386
          %v3571 = vunpack.c.h.b16 %v3386
          %v3572 = vunpack.c.l.b16 %v3387
          %v3573 = vunpack.c.h.b16 %v3387
          %v3574 = vunpack.c.l.b16 %v3388
          %v3575 = vunpack.c.h.b16 %v3388
          %v3576 = vunpack.c.l.b16 %v3389
          %v3577 = vunpack.c.h.b16 %v3389
          %v3578 = vunpack.c.l.b16 %v3390
          %v3579 = vunpack.c.h.b16 %v3390
          %v3580 = vunpack.c.l.b16 %v3391
          %v3581 = vunpack.c.h.b16 %v3391
          %v3582 = vunpack.c.l.b16 %v3392
          %v3583 = vunpack.c.h.b16 %v3392
          %v3584 = vunpack.c.l.b16 %v3393
          %v3585 = vunpack.c.h.b16 %v3393
          %v3586 = vunpack.c.l.b16 %v3394
          %v3587 = vunpack.c.h.b16 %v3394
          %v3588 = vpack.c.b16 %v3462, %v3460
          %v3589 = vpack.c.b16 %v3463, %v3461
          %v3590 = vpack.c.b16 %v3466, %v3464
          %v3591 = vpack.c.b16 %v3467, %v3465
          %v3592 = vpack.c.b16 %v3470, %v3468
          %v3593 = vpack.c.b16 %v3471, %v3469
          %v3594 = vpack.c.b16 %v3474, %v3472
          %v3595 = vpack.c.b16 %v3475, %v3473
          %v3596 = vpack.c.b16 %v3478, %v3476
          %v3597 = vpack.c.b16 %v3479, %v3477
          %v3598 = vpack.c.b16 %v3482, %v3480
          %v3599 = vpack.c.b16 %v3483, %v3481
          %v3600 = vpack.c.b16 %v3486, %v3484
          %v3601 = vpack.c.b16 %v3487, %v3485
          %v3602 = vpack.c.b16 %v3490, %v3488
          %v3603 = vpack.c.b16 %v3491, %v3489
          %v3604 = vpack.c.b16 %v3494, %v3492
          %v3605 = vpack.c.b16 %v3495, %v3493
          %v3606 = vpack.c.b16 %v3498, %v3496
          %v3607 = vpack.c.b16 %v3499, %v3497
          %v3608 = vpack.c.b16 %v3502, %v3500
          %v3609 = vpack.c.b16 %v3503, %v3501
          %v3610 = vpack.c.b16 %v3506, %v3504
          %v3611 = vpack.c.b16 %v3507, %v3505
          %v3612 = vpack.c.b16 %v3510, %v3508
          %v3613 = vpack.c.b16 %v3511, %v3509
          %v3614 = vpack.c.b16 %v3514, %v3512
          %v3615 = vpack.c.b16 %v3515, %v3513
          %v3616 = vpack.c.b16 %v3518, %v3516
          %v3617 = vpack.c.b16 %v3519, %v3517
          %v3618 = vpack.c.b16 %v3522, %v3520
          %v3619 = vpack.c.b16 %v3523, %v3521
          %v3620 = vpack.c.b16 %v3526, %v3524
          %v3621 = vpack.c.b16 %v3527, %v3525
          %v3622 = vpack.c.b16 %v3530, %v3528
          %v3623 = vpack.c.b16 %v3531, %v3529
          %v3624 = vpack.c.b16 %v3534, %v3532
          %v3625 = vpack.c.b16 %v3535, %v3533
          %v3626 = vpack.c.b16 %v3538, %v3536
          %v3627 = vpack.c.b16 %v3539, %v3537
          %v3628 = vpack.c.b16 %v3542, %v3540
          %v3629 = vpack.c.b16 %v3543, %v3541
          %v3630 = vpack.c.b16 %v3546, %v3544
          %v3631 = vpack.c.b16 %v3547, %v3545
          %v3632 = vpack.c.b16 %v3550, %v3548
          %v3633 = vpack.c.b16 %v3551, %v3549
          %v3634 = vpack.c.b16 %v3554, %v3552
          %v3635 = vpack.c.b16 %v3555, %v3553
          %v3636 = vpack.c.b16 %v3558, %v3556
          %v3637 = vpack.c.b16 %v3559, %v3557
          %v3638 = vpack.c.b16 %v3562, %v3560
          %v3639 = vpack.c.b16 %v3563, %v3561
          %v3640 = vpack.c.b16 %v3566, %v3564
          %v3641 = vpack.c.b16 %v3567, %v3565
          %v3642 = vpack.c.b16 %v3570, %v3568
          %v3643 = vpack.c.b16 %v3571, %v3569
          %v3644 = vpack.c.b16 %v3574, %v3572
          %v3645 = vpack.c.b16 %v3575, %v3573
          %v3646 = vpack.c.b16 %v3578, %v3576
          %v3647 = vpack.c.b16 %v3579, %v3577
          %v3648 = vpack.c.b16 %v3582, %v3580
          %v3649 = vpack.c.b16 %v3583, %v3581
          %v3650 = vpack.c.b16 %v3586, %v3584
          %v3651 = vpack.c.b16 %v3587, %v3585
          %v3717 = vlaneseq
          %v3718 = vshrl.u32 %v3717, 7
          %v3719 = vsub.s32 0, %v3718
          %v3720 = vrot.slane %v3395, %v3719
          %v3721 = vlaneseq
          %v3722 = vshrl.u32 %v3721, 7
          %v3723 = vsub.s32 1, %v3722
          %v3724 = vrot.slane %v3395, %v3723
          %3727 = vmatprep.subr.bf16.mxu0 %v3589
          %3728 = vmatpush1.bf16.msra.mxu0 %v3588
          %3729 = vmatprep.subr.bf16.mxu0 %v3591
          %3730 = vmatpush1.bf16.msra.mxu0 %v3590
          %3731 = vmatprep.subr.bf16.mxu0 %v3593
          %3732 = vmatpush1.bf16.msra.mxu0 %v3592
          %3733 = vmatprep.subr.bf16.mxu0 %v3595
          %3734 = vmatpush1.bf16.msra.mxu0 %v3594
          %3735 = vmatprep.subr.bf16.mxu0 %v3597
          %3736 = vmatpush1.bf16.msra.mxu0 %v3596
          %3737 = vmatprep.subr.bf16.mxu0 %v3599
          %3738 = vmatpush1.bf16.msra.mxu0 %v3598
          %3739 = vmatprep.subr.bf16.mxu0 %v3601
          %3740 = vmatpush1.bf16.msra.mxu0 %v3600
          %3741 = vmatprep.subr.bf16.mxu0 %v3603
          %3742 = vmatpush1.bf16.msra.mxu0 %v3602
          %3743 = vmatprep.subr.bf16.mxu0 %v3605
          %3744 = vmatpush1.bf16.msra.mxu0 %v3604
          %3745 = vmatprep.subr.bf16.mxu0 %v3607
          %3746 = vmatpush1.bf16.msra.mxu0 %v3606
          %3747 = vmatprep.subr.bf16.mxu0 %v3609
          %3748 = vmatpush1.bf16.msra.mxu0 %v3608
          %3749 = vmatprep.subr.bf16.mxu0 %v3611
          %3750 = vmatpush1.bf16.msra.mxu0 %v3610
          %3751 = vmatprep.subr.bf16.mxu0 %v3613
          %3752 = vmatpush1.bf16.msra.mxu0 %v3612
          %3753 = vmatprep.subr.bf16.mxu0 %v3615
          %3754 = vmatpush1.bf16.msra.mxu0 %v3614
          %3755 = vmatprep.subr.bf16.mxu0 %v3617
          %3756 = vmatpush1.bf16.msra.mxu0 %v3616
          %3757 = vmatprep.subr.bf16.mxu0 %v3619
          %3758 = vmatpush1.bf16.msra.mxu0 %v3618
          %3759 = vmatprep.mubr.bf16.mxu0 %v3328
          %3760 = vmatmul.mubr.bf16.gmra.mrb[0].mxu0 %v3327
          %v3761 = vpop.f32.mrb[0].mxu0
          %v3762 = vadd.f32 %v3720, %v3761
          %v3763 = vpop.f32.mrb[0].mxu0
          %v3764 = vadd.f32 %v3724, %v3763
          %v3765 = vpop.f32.mrb[0].mxu0
          %v3766 = vpop.f32.mrb[0].mxu0
          %3767 = vdwg.mxu0
          %3768 = vmatprep.subr.bf16.mxu0 %v3621
          %3769 = vmatpush1.bf16.msra.mxu0 %v3620
          %3770 = vmatprep.subr.bf16.mxu0 %v3623
          %3771 = vmatpush1.bf16.msra.mxu0 %v3622
          %3772 = vmatprep.subr.bf16.mxu0 %v3625
          %3773 = vmatpush1.bf16.msra.mxu0 %v3624
          %3774 = vmatprep.subr.bf16.mxu0 %v3627
          %3775 = vmatpush1.bf16.msra.mxu0 %v3626
          %3776 = vmatprep.subr.bf16.mxu0 %v3629
          %3777 = vmatpush1.bf16.msra.mxu0 %v3628
          %3778 = vmatprep.subr.bf16.mxu0 %v3631
          %3779 = vmatpush1.bf16.msra.mxu0 %v3630
          %3780 = vmatprep.subr.bf16.mxu0 %v3633
          %3781 = vmatpush1.bf16.msra.mxu0 %v3632
          %3782 = vmatprep.subr.bf16.mxu0 %v3635
          %3783 = vmatpush1.bf16.msra.mxu0 %v3634
          %3784 = vmatprep.subr.bf16.mxu0 %v3637
          %3785 = vmatpush1.bf16.msra.mxu0 %v3636
          %3786 = vmatprep.subr.bf16.mxu0 %v3639
          %3787 = vmatpush1.bf16.msra.mxu0 %v3638
          %3788 = vmatprep.subr.bf16.mxu0 %v3641
          %3789 = vmatpush1.bf16.msra.mxu0 %v3640
          %3790 = vmatprep.subr.bf16.mxu0 %v3643
          %3791 = vmatpush1.bf16.msra.mxu0 %v3642
          %3792 = vmatprep.subr.bf16.mxu0 %v3645
          %3793 = vmatpush1.bf16.msra.mxu0 %v3644
          %3794 = vmatprep.subr.bf16.mxu0 %v3647
          %3795 = vmatpush1.bf16.msra.mxu0 %v3646
          %3796 = vmatprep.subr.bf16.mxu0 %v3649
          %3797 = vmatpush1.bf16.msra.mxu0 %v3648
          %3798 = vmatprep.subr.bf16.mxu0 %v3651
          %3799 = vmatpush1.bf16.msra.mxu0 %v3650
          %3800 = vmatprep.mubr.bf16.mxu0 %v3330
          %3801 = vmatmul.mubr.bf16.gmra.mrb[0].mxu0 %v3329
          %v3802 = vpop.f32.mrb[0].mxu0
          %v3803 = vadd.f32 %v3762, %v3802
          %v3804 = vpop.f32.mrb[0].mxu0
          %v3805 = vadd.f32 %v3764, %v3804
          %v3806 = vpop.f32.mrb[0].mxu0
          %v3807 = vpop.f32.mrb[0].mxu0
          %3808 = vdwg.mxu0
          %v3809 = vmax.f32 %v3803, 0.0
          %v3810 = vmax.f32 %v3805, 0.0
          %v3811 = vpack.c.bf16 %v3809, %v3809
          %v3812 = vpack.c.bf16 %v3810, %v3810
          %v3813 = vld [vmem:[#allocation9] sm:$0xf]
          %v3814 = vld [vmem:[#allocation9 + $0x4] sm:$0xf]
          %v3815 = vld [vmem:[#allocation9 + $0x8] sm:$0xf]
          %v3816 = vld [vmem:[#allocation9 + $0xc] sm:$0xf]
          %v3817 = vld [vmem:[#allocation9 + $0x10] sm:$0xf]
          %v3818 = vld [vmem:[#allocation9 + $0x14] sm:$0xf]
          %v3819 = vld [vmem:[#allocation9 + $0x18] sm:$0xf]
          %v3820 = vld [vmem:[#allocation9 + $0x1c] sm:$0xf]
          %v3821 = vld [vmem:[#allocation9 + $0x20] sm:$0xf]
          %v3822 = vld [vmem:[#allocation9 + $0x24] sm:$0xf]
          %v3823 = vld [vmem:[#allocation9 + $0x28] sm:$0xf]
          %v3824 = vld [vmem:[#allocation9 + $0x2c] sm:$0xf]
          %v3825 = vld [vmem:[#allocation9 + $0x30] sm:$0xf]
          %v3826 = vld [vmem:[#allocation9 + $0x34] sm:$0xf]
          %v3827 = vld [vmem:[#allocation9 + $0x38] sm:$0xf]
          %v3828 = vld [vmem:[#allocation9 + $0x3c] sm:$0xf]
          %v3829 = vld [vmem:[#allocation9 + $0x40] sm:$0xf]
          %v3830 = vld [vmem:[#allocation9 + $0x44] sm:$0xf]
          %v3831 = vld [vmem:[#allocation9 + $0x48] sm:$0xf]
          %v3832 = vld [vmem:[#allocation9 + $0x4c] sm:$0xf]
          %v3833 = vld [vmem:[#allocation9 + $0x50] sm:$0xf]
          %v3834 = vld [vmem:[#allocation9 + $0x54] sm:$0xf]
          %v3835 = vld [vmem:[#allocation9 + $0x58] sm:$0xf]
          %v3836 = vld [vmem:[#allocation9 + $0x5c] sm:$0xf]
          %v3837 = vld [vmem:[#allocation9 + $0x60] sm:$0xf]
          %v3838 = vld [vmem:[#allocation9 + $0x64] sm:$0xf]
          %v3839 = vld [vmem:[#allocation9 + $0x68] sm:$0xf]
          %v3840 = vld [vmem:[#allocation9 + $0x6c] sm:$0xf]
          %v3841 = vld [vmem:[#allocation9 + $0x70] sm:$0xf]
          %v3842 = vld [vmem:[#allocation9 + $0x74] sm:$0xf]
          %v3843 = vld [vmem:[#allocation9 + $0x78] sm:$0xf]
          %v3844 = vld [vmem:[#allocation9 + $0x7c] sm:$0xf]
          %v3845 = vld [vmem:[%s12] sm:$0x1]
          %v3878 = vunpack.c.l.b16 %v3813
          %v3879 = vunpack.c.l.b16 %v3814
          %v3880 = vunpack.c.l.b16 %v3815
          %v3881 = vunpack.c.l.b16 %v3816
          %v3882 = vunpack.c.l.b16 %v3817
          %v3883 = vunpack.c.l.b16 %v3818
          %v3884 = vunpack.c.l.b16 %v3819
          %v3885 = vunpack.c.l.b16 %v3820
          %v3886 = vunpack.c.l.b16 %v3821
          %v3887 = vunpack.c.l.b16 %v3822
          %v3888 = vunpack.c.l.b16 %v3823
          %v3889 = vunpack.c.l.b16 %v3824
          %v3890 = vunpack.c.l.b16 %v3825
          %v3891 = vunpack.c.l.b16 %v3826
          %v3892 = vunpack.c.l.b16 %v3827
          %v3893 = vunpack.c.l.b16 %v3828
          %v3894 = vunpack.c.l.b16 %v3829
          %v3895 = vunpack.c.l.b16 %v3830
          %v3896 = vunpack.c.l.b16 %v3831
          %v3897 = vunpack.c.l.b16 %v3832
          %v3898 = vunpack.c.l.b16 %v3833
          %v3899 = vunpack.c.l.b16 %v3834
          %v3900 = vunpack.c.l.b16 %v3835
          %v3901 = vunpack.c.l.b16 %v3836
          %v3902 = vunpack.c.l.b16 %v3837
          %v3903 = vunpack.c.l.b16 %v3838
          %v3904 = vunpack.c.l.b16 %v3839
          %v3905 = vunpack.c.l.b16 %v3840
          %v3906 = vunpack.c.l.b16 %v3841
          %v3907 = vunpack.c.l.b16 %v3842
          %v3908 = vunpack.c.l.b16 %v3843
          %v3909 = vunpack.c.l.b16 %v3844
          %v3910 = vpack.c.b16 %v3879, %v3878
          %v3911 = vpack.c.b16 %v3881, %v3880
          %v3912 = vpack.c.b16 %v3883, %v3882
          %v3913 = vpack.c.b16 %v3885, %v3884
          %v3914 = vpack.c.b16 %v3887, %v3886
          %v3915 = vpack.c.b16 %v3889, %v3888
          %v3916 = vpack.c.b16 %v3891, %v3890
          %v3917 = vpack.c.b16 %v3893, %v3892
          %v3918 = vpack.c.b16 %v3895, %v3894
          %v3919 = vpack.c.b16 %v3897, %v3896
          %v3920 = vpack.c.b16 %v3899, %v3898
          %v3921 = vpack.c.b16 %v3901, %v3900
          %v3922 = vpack.c.b16 %v3903, %v3902
          %v3923 = vpack.c.b16 %v3905, %v3904
          %v3924 = vpack.c.b16 %v3907, %v3906
          %v3925 = vpack.c.b16 %v3909, %v3908
          %3942 = vmatprep.subr.bf16.mxu0 0
          %3943 = vmatpush1.bf16.msra.mxu0 %v3910
          %3944 = vmatprep.subr.bf16.mxu0 0
          %3945 = vmatpush1.bf16.msra.mxu0 %v3911
          %3946 = vmatprep.subr.bf16.mxu0 0
          %3947 = vmatpush1.bf16.msra.mxu0 %v3912
          %3948 = vmatprep.subr.bf16.mxu0 0
          %3949 = vmatpush1.bf16.msra.mxu0 %v3913
          %3950 = vmatprep.subr.bf16.mxu0 0
          %3951 = vmatpush1.bf16.msra.mxu0 %v3914
          %3952 = vmatprep.subr.bf16.mxu0 0
          %3953 = vmatpush1.bf16.msra.mxu0 %v3915
          %3954 = vmatprep.subr.bf16.mxu0 0
          %3955 = vmatpush1.bf16.msra.mxu0 %v3916
          %3956 = vmatprep.subr.bf16.mxu0 0
          %3957 = vmatpush1.bf16.msra.mxu0 %v3917
          %3958 = vmatprep.subr.bf16.mxu0 0
          %3959 = vmatpush1.bf16.msra.mxu0 %v3918
          %3960 = vmatprep.subr.bf16.mxu0 0
          %3961 = vmatpush1.bf16.msra.mxu0 %v3919
          %3962 = vmatprep.subr.bf16.mxu0 0
          %3963 = vmatpush1.bf16.msra.mxu0 %v3920
          %3964 = vmatprep.subr.bf16.mxu0 0
          %3965 = vmatpush1.bf16.msra.mxu0 %v3921
          %3966 = vmatprep.subr.bf16.mxu0 0
          %3967 = vmatpush1.bf16.msra.mxu0 %v3922
          %3968 = vmatprep.subr.bf16.mxu0 0
          %3969 = vmatpush1.bf16.msra.mxu0 %v3923
          %3970 = vmatprep.subr.bf16.mxu0 0
          %3971 = vmatpush1.bf16.msra.mxu0 %v3924
          %3972 = vmatprep.subr.bf16.mxu0 0
          %3973 = vmatpush1.bf16.msra.mxu0 %v3925
          %3974 = vmatprep.mubr.bf16.mxu0 %v3812
          %3975 = vmatmul.mubr.bf16.gmra.mrb[0].mxu0 %v3811
          %v3976 = vpop.f32.mrb[0].mxu0
          %v3977 = vadd.f32 %v3845, %v3976
          %v3978 = vpop.f32.mrb[0].mxu0
          %v3979 = vpop.f32.mrb[0].mxu0
          %v3980 = vpop.f32.mrb[0].mxu0
          %3981 = vdwg.mxu0
          %3982 = vst [vmem:[%s514] sm:$0x1] %v3977
        $region96: #{tpu_custom_call.1} parent=71 // pred_fallthru
          _
        %s3983 = sand.u32 %s330, 1
        %s3984 = scalar_lea.sflag [#allocation5], %s3983
        %s3985 = sand.u32 %s330, 1
        %s3986 = scalar_lea.vmem [#allocation11], %s3985
        // Predicated region
        $region97: #{tpu_custom_call.1} parent=71 // pred_check
          %p3987 = pneg %p340
        $region98: #{tpu_custom_call.1} parent=71 // pred_check_branch
          %3989 = sbr.rel (%p3987) target = $region100
        $region99: #{tpu_custom_call.1} parent=71 // pred_region
          %s3991 = ssub.s32 16, 16
          %3992 = vsyncadd %s3984, %s3991
          %s3993 = smul.addr %s34, 16
          %s3994 = scalar_lea.hbm %s13, %s3993
          %s3996 = sshll.u32 %s3986, 4
          %s3997 = int_to_ptr.vmem [resolvable:$true] %s3996
          %3999 = dma.vmem_to_hbm [thread:$0]  %s3997, 16, %s3994, %s3984
        $region100: #{tpu_custom_call.1} parent=71 // pred_fallthru
          _
      $region72: #{tpu_custom_call.1} parent=5 // pred_fallthru
        _
      %p4000 = scmp.le.s32.totalorder 2, %s25
      // Predicated region
      $region101: #{tpu_custom_call.1} parent=5 // pred_check
        %p4001 = pneg %p4000
      $region102: #{tpu_custom_call.1} parent=5 // pred_check_branch
        %4003 = sbr.rel (%p4001) target = $region104
      $region103: #{tpu_custom_call.1} parent=5 // pred_region
        %s4004 = ssub.s32 %s25, 2
        // Predicated region
        $region105: #{tpu_custom_call.1} parent=103 // pred_check
          %p4005 = pneg %p346
        $region106: #{tpu_custom_call.1} parent=103 // pred_check_branch
          %4007 = sbr.rel (%p4005) target = $region108
        $region107: #{tpu_custom_call.1} parent=103 // pred_region
          %s4008 = sand.u32 %s331, 1
          %s4009 = scalar_lea.sflag [#allocation5], %s4008
          %s4010 = sand.u32 %s331, 1
          %s4011 = scalar_lea.vmem [#allocation11], %s4010
          %4012 = dma.done %s4009, 16
        $region108: #{tpu_custom_call.1} parent=103 // pred_fallthru
          _
      $region104: #{tpu_custom_call.1} parent=5 // pred_fallthru
        _
    $region6: #{tpu_custom_call.1} parent=1 // loop_footer
      %s29 = sadd.s32 1, %s25
    $region7: #{tpu_custom_call.1} parent=1 // loop_footer_branch
      %24 = sbr.rel target = $region3
    $region8: #{tpu_custom_call.1} parent=1 // loop_exit
      _
    %4013 = vsyncpa [#allocation4], 1
    %s4014 = scalar_lea.sflag [#allocation4], 1
    %4015 = vsyncpa %s4014, 1
    %4016 = vsyncpa [#allocation7], 1
    %4017 = vsyncpa [#allocation10], 1
    %4018 = vsyncpa [#allocation5], 1
    %s4019 = scalar_lea.sflag [#allocation5], 1
    %4020 = vsyncpa %s4019, 1

</llo_original>
